<compile_context>
chip_gen: v7x
topology: tpu7x:2x2x1
jax: 0.10.0
libtpu: 0.0.40
codegen_flags: <defaults>
</compile_context>

<pallas_src>
import jax
import jax.numpy as jnp
from jax import lax
from jax.experimental import pallas as pl
from jax.experimental.pallas import tpu as pltpu


# ----------------------------- Pallas kernel --------------------------------
def make_entnet_kernel(*, bb, R, L3, num_qa, Lq, V, E, nb, offs):
    (o_emb, o_sm, o_qm, o_keys, o_bias, o_pw, o_u, o_v, o_w, o_h) = offs
    f32 = jnp.float32

    def kernel(hist_ids_ref, q_ids_ref, c_ref, rt_ref, out_ref):
        # ---- resident parameters (one packed VMEM block, constant index map) ----
        emb = c_ref[o_emb:o_emb + V, :]                 # (V, E) embedding table
        smask = c_ref[o_sm:o_sm + L3, :]                # (L3, E) story positional mask
        qmask = c_ref[o_qm:o_qm + Lq, :]                # (Lq, E) query positional mask
        keys_rep = c_ref[o_keys:o_keys + bb * nb, :]    # (bb*nb, E) tiled memory keys
        bias = c_ref[o_bias:o_bias + 1, :]              # (1, E)
        pw = c_ref[o_pw:o_pw + 1, :]                    # (1, E) PReLU per-channel weight
        Ut = c_ref[o_u:o_u + E, :]                      # (E, E) pre-transposed
        Vt = c_ref[o_v:o_v + E, :]
        Wt = c_ref[o_w:o_w + E, :]
        Ht = c_ref[o_h:o_h + E, :]
        rt = rt_ref[...]                                # (E, ro_pad) lane-dense readout

        def prelu(x):
            return jnp.where(x > 0, x, pw * x)

        def mm(a, b):
            return jnp.dot(a, b, preferred_element_type=f32)

        # ---- InputEncoder with in-kernel embedding gather (one-hot on the MXU) --
        # enc[row, e] = sum_l mask[l, e] * emb[ids[row, l], e]
        def encode(ids, mask, P):
            rows = ids.shape[0]
            acc = jnp.zeros((rows, E), f32)
            for l in range(P):                                        # static unroll
                col = ids[:, l:l + 1]                                 # (rows, 1)
                oh = (col == lax.broadcasted_iota(jnp.int32, (rows, V), 1)
                      ).astype(f32)                                   # (rows, V)
                acc = acc + mm(oh, emb * mask[l:l + 1, :])            # MXU gather+mask
            return acc

        hids = hist_ids_ref[0]                    # (bb*R, L3)   rows ordered (b, r)
        qids = q_ids_ref[0]                       # (bb*num_qa, Lq) rows ordered (b, q)
        hist_enc = encode(hids, smask, L3)        # (bb*R, E)
        q_enc = encode(qids, qmask, Lq)           # (bb*num_qa, E)

        # hoisted per-round constants (single batched MXU matmuls)
        hist_encW = mm(hist_enc, Wt)              # (bb*R, E)
        bkv = bias + mm(keys_rep, Vt)             # (bb*nb, E)

        # division-free replication selector: rep_x[i, b] = 1  iff  i // nb == b
        srows = bb * nb
        ri = lax.broadcasted_iota(jnp.int32, (srows, bb), 0)
        ci = lax.broadcasted_iota(jnp.int32, (srows, bb), 1)
        rep_x = jnp.logical_and(ri >= ci * nb, ri < ci * nb + nb).astype(f32)

        # per-round row selector over hist_enc rows: sel_r[b, c] = 1 iff c == b*R + r
        bi = lax.broadcasted_iota(jnp.int32, (bb, bb * R), 0)
        hc = lax.broadcasted_iota(jnp.int32, (bb, bb * R), 1)

        # ---- MemCell recurrence (shared by every question of a batch element) ---
        state = keys_rep                          # (bb*nb, E) initial state = keys
        for r in range(R):                        # R is small -> static unroll
            sel_r = (hc == bi * R + r).astype(f32)                    # (bb, bb*R)
            x_rep = mm(rep_x, mm(sel_r, hist_enc))                    # (bb*nb, E)
            xw_rep = mm(rep_x, mm(sel_r, hist_encW))                  # (bb*nb, E)
            # gate_j = sigmoid(<x, s_j> + <x, k_j>) = sigmoid(<x, s_j + k_j>)
            gate = jax.nn.sigmoid(
                jnp.sum(x_rep * (state + keys_rep), axis=-1, keepdims=True))
            cand = prelu(mm(state, Ut) + bkv + xw_rep)
            s_next = state + gate * cand
            nrm = jnp.sqrt(jnp.sum(s_next * s_next, axis=-1, keepdims=True)) + 1e-8
            # thres(0.0, 1.0): x if x > 0 else 1.0, then divide by the L2 norm
            state = (jnp.where(s_next > 0.0, s_next, 1.0)
                     * pl.reciprocal(nrm, approx=True))

        # ---- OutputModule: block-diagonal attention over memory slots ----------
        qrows = bb * num_qa
        qi = lax.broadcasted_iota(jnp.int32, (qrows, bb), 0)
        qc = lax.broadcasted_iota(jnp.int32, (qrows, bb), 1)
        rep_q = jnp.logical_and(qi >= qc * num_qa,
                                qi < qc * num_qa + num_qa).astype(f32)   # (qrows, bb)
        si = lax.broadcasted_iota(jnp.int32, (bb, srows), 1)
        sc = lax.broadcasted_iota(jnp.int32, (bb, srows), 0)
        rep_st = jnp.logical_and(si >= sc * nb, si < sc * nb + nb).astype(f32)
        same_b = mm(rep_q, rep_st)                 # 1 where query & slot share batch

        att = lax.dot_general(q_enc, state, (((1,), (1,)), ((), ())),
                              preferred_element_type=f32)   # q . s^T  (qrows, srows)
        att = jnp.where(same_b > 0.5, att, -1e30)
        att = jax.nn.softmax(att, axis=-1)
        u = mm(att, state)                                   # (bb*num_qa, E)
        hidden = prelu(q_enc + mm(u, Ht))
        out_ref[0] = mm(hidden, rt)                          # lane-dense (128) store

    return kernel


# ------------------------------ glue wrapper ---------------------------------
def entnet_forward(batch, params, num_blocks, bb=2):
    query = batch['qa_ques'].astype(jnp.int32)      # (B, num_qa, Lq)
    ctx_hist = batch['full_rnd'].astype(jnp.int32)  # (B, R, L3)
    B, num_qa, Lq = query.shape
    R, L3 = ctx_hist.shape[1], ctx_hist.shape[2]
    emb = params['embed'].astype(jnp.float32)
    V, E = emb.shape
    nb = num_blocks
    readout = params['Rw'].shape[0]
    ro_pad = pl.cdiv(readout, 128) * 128            # lane-dense output width

    # ---- batch blocking: bb batch elements per grid step ----
    bb = max(1, min(bb, B))
    G = pl.cdiv(B, bb)
    B_pad = G * bb
    if B_pad != B:
        query = jnp.concatenate(
            [query, jnp.zeros((B_pad - B, num_qa, Lq), jnp.int32)], axis=0)
        ctx_hist = jnp.concatenate(
            [ctx_hist, jnp.zeros((B_pad - B, R, L3), jnp.int32)], axis=0)
    hist_ids = ctx_hist.reshape(G, bb * R, L3)      # only int32 ids stream from HBM
    q_ids = query.reshape(G, bb * num_qa, Lq)

    # ---- pack every E-wide parameter into ONE resident VMEM block ----
    keys = emb[-nb:]
    keys_rep = jnp.tile(keys, (bb, 1))
    pieces = [emb,                          # V rows
              params['story_mask'],         # L3
              params['query_mask'],         # Lq
              keys_rep,                     # bb*nb
              params['bias'][None, :],      # 1
              params['prelu'][None, :],     # 1
              params['U'].T, params['V'].T, params['W'].T, params['H'].T]  # 4*E
    consts = jnp.concatenate([p.astype(jnp.float32) for p in pieces], axis=0)
    sizes = [V, L3, Lq, bb * nb, 1, 1, E, E, E, E]
    offs, cur = [], 0
    for s in sizes:
        offs.append(cur)
        cur += s

    rt_pad = jnp.zeros((E, ro_pad), jnp.float32).at[:, :readout].set(
        params['Rw'].T.astype(jnp.float32))

    kernel = make_entnet_kernel(bb=bb, R=R, L3=L3, num_qa=num_qa, Lq=Lq,
                                V=V, E=E, nb=nb, offs=tuple(offs))

    out = pl.pallas_call(
        kernel,
        out_shape=jax.ShapeDtypeStruct((G, bb * num_qa, ro_pad), jnp.float32),
        grid_spec=pltpu.PrefetchScalarGridSpec(
            num_scalar_prefetch=0,
            grid=(G,),
            in_specs=[
                pl.BlockSpec((1, bb * R, L3), lambda g: (g, 0, 0)),        # hist ids
                pl.BlockSpec((1, bb * num_qa, Lq), lambda g: (g, 0, 0)),   # query ids
                pl.BlockSpec(consts.shape, lambda g: (0, 0)),              # packed params
                pl.BlockSpec((E, ro_pad), lambda g: (0, 0)),               # readout^T
            ],
            out_specs=pl.BlockSpec((1, bb * num_qa, ro_pad), lambda g: (g, 0, 0)),
        ),
        compiler_params=pltpu.CompilerParams(
            dimension_semantics=("parallel",)),
    )(hist_ids, q_ids, consts, rt_pad)

    out = out.reshape(B_pad, num_qa, ro_pad)
    return out[:B, :, :readout]


# -------------------------- pure-JAX reference -------------------------------
def reference_forward(batch, params, num_blocks):
    query = batch['qa_ques']
    ctx_hist = batch['full_rnd']
    B, num_qa, Lq = query.shape
    R, L3 = ctx_hist.shape[1], ctx_hist.shape[2]
    N = B * num_qa
    emb = params['embed']
    E = emb.shape[1]

    def prelu(x):
        return jnp.where(x > 0, x, params['prelu'][None, :] * x)

    q_emb = emb[query.reshape(N, Lq)]
    h_emb = emb[ctx_hist.reshape(B * R, L3)].reshape(B, R, L3, E)
    hist_enc = jnp.sum(h_emb * params['story_mask'], axis=2)           # (B,R,E)
    hist_enc = jnp.broadcast_to(hist_enc[:, None], (B, num_qa, R, E)
                                ).reshape(N, R, E)
    q = jnp.sum(q_emb * params['query_mask'], axis=1)                  # (N, E)

    keys = emb[-num_blocks:]
    dot = lambda a, b: jnp.dot(a, b, precision='highest')
    state = [jnp.broadcast_to(keys[j], (N, E)) for j in range(num_blocks)]
    for i in range(R):
        x = hist_enc[:, i, :]
        new_state = []
        for j in range(num_blocks):
            s_j, k_j = state[j], keys[j:j + 1]
            gate = jax.nn.sigmoid(jnp.sum(x * s_j, 1, keepdims=True)
                                  + jnp.sum(x * k_j, 1, keepdims=True))
            cand = prelu(dot(s_j, params['U'].T) + params['bias']
                         + dot(x, params['W'].T) + dot(k_j, params['V'].T))
            s_next = s_j + gate * cand
            nrm = jnp.abs(jnp.sqrt(jnp.sum(s_next ** 2, -1, keepdims=True))) + 1e-8
            new_state.append(jnp.where(s_next > 0.0, s_next, 1.0) / nrm)
        state = new_state
    st = jnp.stack(state, axis=1)                                      # (N,nb,E)
    att = jnp.sum(st * q[:, None, :], axis=2)
    att = att - jnp.max(att, axis=-1, keepdims=True)
    att = jax.nn.softmax(att, axis=1)[:, :, None]
    u = jnp.sum(st * att, axis=1)
    y = dot(prelu(q + dot(u, params['H'].T)), params['Rw'].T)
    return y.reshape(B, num_qa, -1)


# ---------------------------------- main --------------------------------------
if __name__ == "__main__":
    # small, forward-consistent config
    vocab_len = 24          # len(vocabulary)
    num_blocks = 4
    vocab_size = vocab_len + num_blocks
    E = 32                  # word_embedding_size
    max_seq_len = 8
    L3 = max_seq_len * 3
    B, num_qa, R = 4, 2, 3
    readout = vocab_size - num_blocks

    key = jax.random.PRNGKey(0)
    ks = jax.random.split(key, 10)
    params = {
        'embed': 0.1 * jax.random.normal(ks[0], (vocab_size, E), jnp.float32),
        'story_mask': jnp.ones((L3, E), jnp.float32),
        'query_mask': jnp.ones((max_seq_len, E), jnp.float32),
        'U': 0.1 * jax.random.normal(ks[1], (E, E), jnp.float32),
        'V': 0.1 * jax.random.normal(ks[2], (E, E), jnp.float32),
        'W': 0.1 * jax.random.normal(ks[3], (E, E), jnp.float32),
        'bias': 0.1 * jax.random.normal(ks[4], (E,), jnp.float32),
        'prelu': jnp.full((E,), 0.25, jnp.float32),   # exercise the PReLU branch
        'H': 0.1 * jax.random.normal(ks[5], (E, E), jnp.float32),
        'Rw': 0.1 * jax.random.normal(ks[6], (readout, E), jnp.float32),
    }
    batch = {
        'qa_ques': jax.random.randint(ks[7], (B, num_qa, max_seq_len),
                                      0, vocab_len, jnp.int32),
        'full_rnd': jax.random.randint(ks[8], (B, R, L3),
                                       0, vocab_len, jnp.int32),
    }

    out = entnet_forward(batch, params, num_blocks, bb=2)   # grid of 2 steps
    out = jax.block_until_ready(out)
    assert out.shape == (B, num_qa, readout)

    ref = jax.block_until_ready(reference_forward(batch, params, num_blocks))
    assert jnp.all(jnp.isfinite(out))
    assert jnp.allclose(out, ref, atol=1e-2, rtol=1e-2)

    print("KERNEL_OK")
</pallas_src>

<mosaic_0001>
module attributes {stable_mosaic.version = 11 : i64} {
  func.func @kernel(%arg0: i32, %arg1: memref<1x6x24xi32, #tpu.memory_space<vmem>>, %arg2: memref<1x4x8xi32, #tpu.memory_space<vmem>>, %arg3: memref<198x32xf32, #tpu.memory_space<vmem>>, %arg4: memref<32x128xf32, #tpu.memory_space<vmem>>, %arg5: memref<1x4x128xf32, #tpu.memory_space<vmem>>) attributes {dimension_semantics = [#tpu.dimension_semantics<parallel>], iteration_bounds = array<i64: 2>, scalar_prefetch = 0 : i64, scratch_operands = 0 : i64, tpu.core_type = #tpu.core_type<tc>, window_params = [{transform_indices = @transform_0, window_bounds = array<i64: 1, 6, 24>}, {transform_indices = @transform_1, window_bounds = array<i64: 1, 4, 8>}, {pipeline_mode = #tpu.pipeline_mode<synchronous>, transform_indices = @transform_2, window_bounds = array<i64: 198, 32>}, {pipeline_mode = #tpu.pipeline_mode<synchronous>, transform_indices = @transform_3, window_bounds = array<i64: 32, 128>}, {transform_indices = @transform_4, window_bounds = array<i64: 1, 4, 128>}]} {
    %c0 = arith.constant 0 : index
    %c0_0 = arith.constant 0 : index
    %0 = vector.load %arg3[%c0, %c0_0] : memref<198x32xf32, #tpu.memory_space<vmem>>, vector<28x32xf32>
    %c28 = arith.constant 28 : index
    %c0_1 = arith.constant 0 : index
    %1 = vector.load %arg3[%c28, %c0_1] : memref<198x32xf32, #tpu.memory_space<vmem>>, vector<24x32xf32>
    %c52 = arith.constant 52 : index
    %c0_2 = arith.constant 0 : index
    %2 = vector.load %arg3[%c52, %c0_2] : memref<198x32xf32, #tpu.memory_space<vmem>>, vector<8x32xf32>
    %c60 = arith.constant 60 : index
    %c0_3 = arith.constant 0 : index
    %3 = vector.load %arg3[%c60, %c0_3] : memref<198x32xf32, #tpu.memory_space<vmem>>, vector<8x32xf32>
    %c68 = arith.constant 68 : index
    %c0_4 = arith.constant 0 : index
    %4 = vector.load %arg3[%c68, %c0_4] : memref<198x32xf32, #tpu.memory_space<vmem>>, vector<1x32xf32>
    %c69 = arith.constant 69 : index
    %c0_5 = arith.constant 0 : index
    %5 = vector.load %arg3[%c69, %c0_5] : memref<198x32xf32, #tpu.memory_space<vmem>>, vector<1x32xf32>
    %c70 = arith.constant 70 : index
    %c0_6 = arith.constant 0 : index
    %6 = vector.load %arg3[%c70, %c0_6] : memref<198x32xf32, #tpu.memory_space<vmem>>, vector<32x32xf32>
    %c102 = arith.constant 102 : index
    %c0_7 = arith.constant 0 : index
    %7 = vector.load %arg3[%c102, %c0_7] : memref<198x32xf32, #tpu.memory_space<vmem>>, vector<32x32xf32>
    %c134 = arith.constant 134 : index
    %c0_8 = arith.constant 0 : index
    %8 = vector.load %arg3[%c134, %c0_8] : memref<198x32xf32, #tpu.memory_space<vmem>>, vector<32x32xf32>
    %c166 = arith.constant 166 : index
    %c0_9 = arith.constant 0 : index
    %9 = vector.load %arg3[%c166, %c0_9] : memref<198x32xf32, #tpu.memory_space<vmem>>, vector<32x32xf32>
    %c0_10 = arith.constant 0 : index
    %c0_11 = arith.constant 0 : index
    %10 = vector.load %arg4[%c0_10, %c0_11] : memref<32x128xf32, #tpu.memory_space<vmem>>, vector<32x128xf32>
    %c0_12 = arith.constant 0 : index
    %c0_13 = arith.constant 0 : index
    %c0_14 = arith.constant 0 : index
    %11 = vector.load %arg1[%c0_12, %c0_13, %c0_14] : memref<1x6x24xi32, #tpu.memory_space<vmem>>, vector<1x6x24xi32>
    %12 = vector.shape_cast %11 : vector<1x6x24xi32> to vector<6x24xi32>
    %c0_15 = arith.constant 0 : index
    %c0_16 = arith.constant 0 : index
    %c0_17 = arith.constant 0 : index
    %13 = vector.load %arg2[%c0_15, %c0_16, %c0_17] : memref<1x4x8xi32, #tpu.memory_space<vmem>>, vector<1x4x8xi32>
    %14 = vector.shape_cast %13 : vector<1x4x8xi32> to vector<4x8xi32>
    %cst = arith.constant 0.000000e+00 : f32
    %15 = vector.broadcast %cst : f32 to vector<6x32xf32>
    %16 = vector.extract_strided_slice %12 {offsets = [0, 0], sizes = [6, 1], strides = [1, 1]} : vector<6x24xi32> to vector<6x1xi32>
    %17 = tpu.iota {dimensions = array<i32: 1>} : vector<6x28xi32>
    %18 = vector.broadcast %16 : vector<6x1xi32> to vector<6x28xi32>
    %19 = arith.cmpi eq, %18, %17 : vector<6x28xi32>
    %20 = arith.extui %19 : vector<6x28xi1> to vector<6x28xi32>
    %21 = arith.sitofp %20 : vector<6x28xi32> to vector<6x28xf32>
    %22 = vector.extract_strided_slice %1 {offsets = [0, 0], sizes = [1, 32], strides = [1, 1]} : vector<24x32xf32> to vector<1x32xf32>
    %23 = vector.broadcast %22 : vector<1x32xf32> to vector<28x32xf32>
    %24 = arith.mulf %0, %23 : vector<28x32xf32>
    %cst_18 = arith.constant dense<0.000000e+00> : vector<6x32xf32>
    %25 = tpu.matmul %21, %24, %cst_18 {dimension_numbers = #tpu.dot_dimension_numbers<[1], [0], [0], [1], [0, 0, 1, 1], [], []>} : vector<6x28xf32>, vector<28x32xf32>, vector<6x32xf32> -> vector<6x32xf32>
    %26 = arith.addf %15, %25 : vector<6x32xf32>
    %27 = vector.extract_strided_slice %12 {offsets = [0, 1], sizes = [6, 1], strides = [1, 1]} : vector<6x24xi32> to vector<6x1xi32>
    %28 = tpu.iota {dimensions = array<i32: 1>} : vector<6x28xi32>
    %29 = vector.broadcast %27 : vector<6x1xi32> to vector<6x28xi32>
    %30 = arith.cmpi eq, %29, %28 : vector<6x28xi32>
    %31 = arith.extui %30 : vector<6x28xi1> to vector<6x28xi32>
    %32 = arith.sitofp %31 : vector<6x28xi32> to vector<6x28xf32>
    %33 = vector.extract_strided_slice %1 {offsets = [1, 0], sizes = [1, 32], strides = [1, 1]} : vector<24x32xf32> to vector<1x32xf32>
    %34 = vector.broadcast %33 : vector<1x32xf32> to vector<28x32xf32>
    %35 = arith.mulf %0, %34 : vector<28x32xf32>
    %cst_19 = arith.constant dense<0.000000e+00> : vector<6x32xf32>
    %36 = tpu.matmul %32, %35, %cst_19 {dimension_numbers = #tpu.dot_dimension_numbers<[1], [0], [0], [1], [0, 0, 1, 1], [], []>} : vector<6x28xf32>, vector<28x32xf32>, vector<6x32xf32> -> vector<6x32xf32>
    %37 = arith.addf %26, %36 : vector<6x32xf32>
    %38 = vector.extract_strided_slice %12 {offsets = [0, 2], sizes = [6, 1], strides = [1, 1]} : vector<6x24xi32> to vector<6x1xi32>
    %39 = tpu.iota {dimensions = array<i32: 1>} : vector<6x28xi32>
    %40 = vector.broadcast %38 : vector<6x1xi32> to vector<6x28xi32>
    %41 = arith.cmpi eq, %40, %39 : vector<6x28xi32>
    %42 = arith.extui %41 : vector<6x28xi1> to vector<6x28xi32>
    %43 = arith.sitofp %42 : vector<6x28xi32> to vector<6x28xf32>
    %44 = vector.extract_strided_slice %1 {offsets = [2, 0], sizes = [1, 32], strides = [1, 1]} : vector<24x32xf32> to vector<1x32xf32>
    %45 = vector.broadcast %44 : vector<1x32xf32> to vector<28x32xf32>
    %46 = arith.mulf %0, %45 : vector<28x32xf32>
    %cst_20 = arith.constant dense<0.000000e+00> : vector<6x32xf32>
    %47 = tpu.matmul %43, %46, %cst_20 {dimension_numbers = #tpu.dot_dimension_numbers<[1], [0], [0], [1], [0, 0, 1, 1], [], []>} : vector<6x28xf32>, vector<28x32xf32>, vector<6x32xf32> -> vector<6x32xf32>
    %48 = arith.addf %37, %47 : vector<6x32xf32>
    %49 = vector.extract_strided_slice %12 {offsets = [0, 3], sizes = [6, 1], strides = [1, 1]} : vector<6x24xi32> to vector<6x1xi32>
    %50 = tpu.iota {dimensions = array<i32: 1>} : vector<6x28xi32>
    %51 = vector.broadcast %49 : vector<6x1xi32> to vector<6x28xi32>
    %52 = arith.cmpi eq, %51, %50 : vector<6x28xi32>
    %53 = arith.extui %52 : vector<6x28xi1> to vector<6x28xi32>
    %54 = arith.sitofp %53 : vector<6x28xi32> to vector<6x28xf32>
    %55 = vector.extract_strided_slice %1 {offsets = [3, 0], sizes = [1, 32], strides = [1, 1]} : vector<24x32xf32> to vector<1x32xf32>
    %56 = vector.broadcast %55 : vector<1x32xf32> to vector<28x32xf32>
    %57 = arith.mulf %0, %56 : vector<28x32xf32>
    %cst_21 = arith.constant dense<0.000000e+00> : vector<6x32xf32>
    %58 = tpu.matmul %54, %57, %cst_21 {dimension_numbers = #tpu.dot_dimension_numbers<[1], [0], [0], [1], [0, 0, 1, 1], [], []>} : vector<6x28xf32>, vector<28x32xf32>, vector<6x32xf32> -> vector<6x32xf32>
    %59 = arith.addf %48, %58 : vector<6x32xf32>
    %60 = vector.extract_strided_slice %12 {offsets = [0, 4], sizes = [6, 1], strides = [1, 1]} : vector<6x24xi32> to vector<6x1xi32>
    %61 = tpu.iota {dimensions = array<i32: 1>} : vector<6x28xi32>
    %62 = vector.broadcast %60 : vector<6x1xi32> to vector<6x28xi32>
    %63 = arith.cmpi eq, %62, %61 : vector<6x28xi32>
    %64 = arith.extui %63 : vector<6x28xi1> to vector<6x28xi32>
    %65 = arith.sitofp %64 : vector<6x28xi32> to vector<6x28xf32>
    %66 = vector.extract_strided_slice %1 {offsets = [4, 0], sizes = [1, 32], strides = [1, 1]} : vector<24x32xf32> to vector<1x32xf32>
    %67 = vector.broadcast %66 : vector<1x32xf32> to vector<28x32xf32>
    %68 = arith.mulf %0, %67 : vector<28x32xf32>
    %cst_22 = arith.constant dense<0.000000e+00> : vector<6x32xf32>
    %69 = tpu.matmul %65, %68, %cst_22 {dimension_numbers = #tpu.dot_dimension_numbers<[1], [0], [0], [1], [0, 0, 1, 1], [], []>} : vector<6x28xf32>, vector<28x32xf32>, vector<6x32xf32> -> vector<6x32xf32>
    %70 = arith.addf %59, %69 : vector<6x32xf32>
    %71 = vector.extract_strided_slice %12 {offsets = [0, 5], sizes = [6, 1], strides = [1, 1]} : vector<6x24xi32> to vector<6x1xi32>
    %72 = tpu.iota {dimensions = array<i32: 1>} : vector<6x28xi32>
    %73 = vector.broadcast %71 : vector<6x1xi32> to vector<6x28xi32>
    %74 = arith.cmpi eq, %73, %72 : vector<6x28xi32>
    %75 = arith.extui %74 : vector<6x28xi1> to vector<6x28xi32>
    %76 = arith.sitofp %75 : vector<6x28xi32> to vector<6x28xf32>
    %77 = vector.extract_strided_slice %1 {offsets = [5, 0], sizes = [1, 32], strides = [1, 1]} : vector<24x32xf32> to vector<1x32xf32>
    %78 = vector.broadcast %77 : vector<1x32xf32> to vector<28x32xf32>
    %79 = arith.mulf %0, %78 : vector<28x32xf32>
    %cst_23 = arith.constant dense<0.000000e+00> : vector<6x32xf32>
    %80 = tpu.matmul %76, %79, %cst_23 {dimension_numbers = #tpu.dot_dimension_numbers<[1], [0], [0], [1], [0, 0, 1, 1], [], []>} : vector<6x28xf32>, vector<28x32xf32>, vector<6x32xf32> -> vector<6x32xf32>
    %81 = arith.addf %70, %80 : vector<6x32xf32>
    %82 = vector.extract_strided_slice %12 {offsets = [0, 6], sizes = [6, 1], strides = [1, 1]} : vector<6x24xi32> to vector<6x1xi32>
    %83 = tpu.iota {dimensions = array<i32: 1>} : vector<6x28xi32>
    %84 = vector.broadcast %82 : vector<6x1xi32> to vector<6x28xi32>
    %85 = arith.cmpi eq, %84, %83 : vector<6x28xi32>
    %86 = arith.extui %85 : vector<6x28xi1> to vector<6x28xi32>
    %87 = arith.sitofp %86 : vector<6x28xi32> to vector<6x28xf32>
    %88 = vector.extract_strided_slice %1 {offsets = [6, 0], sizes = [1, 32], strides = [1, 1]} : vector<24x32xf32> to vector<1x32xf32>
    %89 = vector.broadcast %88 : vector<1x32xf32> to vector<28x32xf32>
    %90 = arith.mulf %0, %89 : vector<28x32xf32>
    %cst_24 = arith.constant dense<0.000000e+00> : vector<6x32xf32>
    %91 = tpu.matmul %87, %90, %cst_24 {dimension_numbers = #tpu.dot_dimension_numbers<[1], [0], [0], [1], [0, 0, 1, 1], [], []>} : vector<6x28xf32>, vector<28x32xf32>, vector<6x32xf32> -> vector<6x32xf32>
    %92 = arith.addf %81, %91 : vector<6x32xf32>
    %93 = vector.extract_strided_slice %12 {offsets = [0, 7], sizes = [6, 1], strides = [1, 1]} : vector<6x24xi32> to vector<6x1xi32>
    %94 = tpu.iota {dimensions = array<i32: 1>} : vector<6x28xi32>
    %95 = vector.broadcast %93 : vector<6x1xi32> to vector<6x28xi32>
    %96 = arith.cmpi eq, %95, %94 : vector<6x28xi32>
    %97 = arith.extui %96 : vector<6x28xi1> to vector<6x28xi32>
    %98 = arith.sitofp %97 : vector<6x28xi32> to vector<6x28xf32>
    %99 = vector.extract_strided_slice %1 {offsets = [7, 0], sizes = [1, 32], strides = [1, 1]} : vector<24x32xf32> to vector<1x32xf32>
    %100 = vector.broadcast %99 : vector<1x32xf32> to vector<28x32xf32>
    %101 = arith.mulf %0, %100 : vector<28x32xf32>
    %cst_25 = arith.constant dense<0.000000e+00> : vector<6x32xf32>
    %102 = tpu.matmul %98, %101, %cst_25 {dimension_numbers = #tpu.dot_dimension_numbers<[1], [0], [0], [1], [0, 0, 1, 1], [], []>} : vector<6x28xf32>, vector<28x32xf32>, vector<6x32xf32> -> vector<6x32xf32>
    %103 = arith.addf %92, %102 : vector<6x32xf32>
    %104 = vector.extract_strided_slice %12 {offsets = [0, 8], sizes = [6, 1], strides = [1, 1]} : vector<6x24xi32> to vector<6x1xi32>
    %105 = tpu.iota {dimensions = array<i32: 1>} : vector<6x28xi32>
    %106 = vector.broadcast %104 : vector<6x1xi32> to vector<6x28xi32>
    %107 = arith.cmpi eq, %106, %105 : vector<6x28xi32>
    %108 = arith.extui %107 : vector<6x28xi1> to vector<6x28xi32>
    %109 = arith.sitofp %108 : vector<6x28xi32> to vector<6x28xf32>
    %110 = vector.extract_strided_slice %1 {offsets = [8, 0], sizes = [1, 32], strides = [1, 1]} : vector<24x32xf32> to vector<1x32xf32>
    %111 = vector.broadcast %110 : vector<1x32xf32> to vector<28x32xf32>
    %112 = arith.mulf %0, %111 : vector<28x32xf32>
    %cst_26 = arith.constant dense<0.000000e+00> : vector<6x32xf32>
    %113 = tpu.matmul %109, %112, %cst_26 {dimension_numbers = #tpu.dot_dimension_numbers<[1], [0], [0], [1], [0, 0, 1, 1], [], []>} : vector<6x28xf32>, vector<28x32xf32>, vector<6x32xf32> -> vector<6x32xf32>
    %114 = arith.addf %103, %113 : vector<6x32xf32>
    %115 = vector.extract_strided_slice %12 {offsets = [0, 9], sizes = [6, 1], strides = [1, 1]} : vector<6x24xi32> to vector<6x1xi32>
    %116 = tpu.iota {dimensions = array<i32: 1>} : vector<6x28xi32>
    %117 = vector.broadcast %115 : vector<6x1xi32> to vector<6x28xi32>
    %118 = arith.cmpi eq, %117, %116 : vector<6x28xi32>
    %119 = arith.extui %118 : vector<6x28xi1> to vector<6x28xi32>
    %120 = arith.sitofp %119 : vector<6x28xi32> to vector<6x28xf32>
    %121 = vector.extract_strided_slice %1 {offsets = [9, 0], sizes = [1, 32], strides = [1, 1]} : vector<24x32xf32> to vector<1x32xf32>
    %122 = vector.broadcast %121 : vector<1x32xf32> to vector<28x32xf32>
    %123 = arith.mulf %0, %122 : vector<28x32xf32>
    %cst_27 = arith.constant dense<0.000000e+00> : vector<6x32xf32>
    %124 = tpu.matmul %120, %123, %cst_27 {dimension_numbers = #tpu.dot_dimension_numbers<[1], [0], [0], [1], [0, 0, 1, 1], [], []>} : vector<6x28xf32>, vector<28x32xf32>, vector<6x32xf32> -> vector<6x32xf32>
    %125 = arith.addf %114, %124 : vector<6x32xf32>
    %126 = vector.extract_strided_slice %12 {offsets = [0, 10], sizes = [6, 1], strides = [1, 1]} : vector<6x24xi32> to vector<6x1xi32>
    %127 = tpu.iota {dimensions = array<i32: 1>} : vector<6x28xi32>
    %128 = vector.broadcast %126 : vector<6x1xi32> to vector<6x28xi32>
    %129 = arith.cmpi eq, %128, %127 : vector<6x28xi32>
    %130 = arith.extui %129 : vector<6x28xi1> to vector<6x28xi32>
    %131 = arith.sitofp %130 : vector<6x28xi32> to vector<6x28xf32>
    %132 = vector.extract_strided_slice %1 {offsets = [10, 0], sizes = [1, 32], strides = [1, 1]} : vector<24x32xf32> to vector<1x32xf32>
    %133 = vector.broadcast %132 : vector<1x32xf32> to vector<28x32xf32>
    %134 = arith.mulf %0, %133 : vector<28x32xf32>
    %cst_28 = arith.constant dense<0.000000e+00> : vector<6x32xf32>
    %135 = tpu.matmul %131, %134, %cst_28 {dimension_numbers = #tpu.dot_dimension_numbers<[1], [0], [0], [1], [0, 0, 1, 1], [], []>} : vector<6x28xf32>, vector<28x32xf32>, vector<6x32xf32> -> vector<6x32xf32>
    %136 = arith.addf %125, %135 : vector<6x32xf32>
    %137 = vector.extract_strided_slice %12 {offsets = [0, 11], sizes = [6, 1], strides = [1, 1]} : vector<6x24xi32> to vector<6x1xi32>
    %138 = tpu.iota {dimensions = array<i32: 1>} : vector<6x28xi32>
    %139 = vector.broadcast %137 : vector<6x1xi32> to vector<6x28xi32>
    %140 = arith.cmpi eq, %139, %138 : vector<6x28xi32>
    %141 = arith.extui %140 : vector<6x28xi1> to vector<6x28xi32>
    %142 = arith.sitofp %141 : vector<6x28xi32> to vector<6x28xf32>
    %143 = vector.extract_strided_slice %1 {offsets = [11, 0], sizes = [1, 32], strides = [1, 1]} : vector<24x32xf32> to vector<1x32xf32>
    %144 = vector.broadcast %143 : vector<1x32xf32> to vector<28x32xf32>
    %145 = arith.mulf %0, %144 : vector<28x32xf32>
    %cst_29 = arith.constant dense<0.000000e+00> : vector<6x32xf32>
    %146 = tpu.matmul %142, %145, %cst_29 {dimension_numbers = #tpu.dot_dimension_numbers<[1], [0], [0], [1], [0, 0, 1, 1], [], []>} : vector<6x28xf32>, vector<28x32xf32>, vector<6x32xf32> -> vector<6x32xf32>
    %147 = arith.addf %136, %146 : vector<6x32xf32>
    %148 = vector.extract_strided_slice %12 {offsets = [0, 12], sizes = [6, 1], strides = [1, 1]} : vector<6x24xi32> to vector<6x1xi32>
    %149 = tpu.iota {dimensions = array<i32: 1>} : vector<6x28xi32>
    %150 = vector.broadcast %148 : vector<6x1xi32> to vector<6x28xi32>
    %151 = arith.cmpi eq, %150, %149 : vector<6x28xi32>
    %152 = arith.extui %151 : vector<6x28xi1> to vector<6x28xi32>
    %153 = arith.sitofp %152 : vector<6x28xi32> to vector<6x28xf32>
    %154 = vector.extract_strided_slice %1 {offsets = [12, 0], sizes = [1, 32], strides = [1, 1]} : vector<24x32xf32> to vector<1x32xf32>
    %155 = vector.broadcast %154 : vector<1x32xf32> to vector<28x32xf32>
    %156 = arith.mulf %0, %155 : vector<28x32xf32>
    %cst_30 = arith.constant dense<0.000000e+00> : vector<6x32xf32>
    %157 = tpu.matmul %153, %156, %cst_30 {dimension_numbers = #tpu.dot_dimension_numbers<[1], [0], [0], [1], [0, 0, 1, 1], [], []>} : vector<6x28xf32>, vector<28x32xf32>, vector<6x32xf32> -> vector<6x32xf32>
    %158 = arith.addf %147, %157 : vector<6x32xf32>
    %159 = vector.extract_strided_slice %12 {offsets = [0, 13], sizes = [6, 1], strides = [1, 1]} : vector<6x24xi32> to vector<6x1xi32>
    %160 = tpu.iota {dimensions = array<i32: 1>} : vector<6x28xi32>
    %161 = vector.broadcast %159 : vector<6x1xi32> to vector<6x28xi32>
    %162 = arith.cmpi eq, %161, %160 : vector<6x28xi32>
    %163 = arith.extui %162 : vector<6x28xi1> to vector<6x28xi32>
    %164 = arith.sitofp %163 : vector<6x28xi32> to vector<6x28xf32>
    %165 = vector.extract_strided_slice %1 {offsets = [13, 0], sizes = [1, 32], strides = [1, 1]} : vector<24x32xf32> to vector<1x32xf32>
    %166 = vector.broadcast %165 : vector<1x32xf32> to vector<28x32xf32>
    %167 = arith.mulf %0, %166 : vector<28x32xf32>
    %cst_31 = arith.constant dense<0.000000e+00> : vector<6x32xf32>
    %168 = tpu.matmul %164, %167, %cst_31 {dimension_numbers = #tpu.dot_dimension_numbers<[1], [0], [0], [1], [0, 0, 1, 1], [], []>} : vector<6x28xf32>, vector<28x32xf32>, vector<6x32xf32> -> vector<6x32xf32>
    %169 = arith.addf %158, %168 : vector<6x32xf32>
    %170 = vector.extract_strided_slice %12 {offsets = [0, 14], sizes = [6, 1], strides = [1, 1]} : vector<6x24xi32> to vector<6x1xi32>
    %171 = tpu.iota {dimensions = array<i32: 1>} : vector<6x28xi32>
    %172 = vector.broadcast %170 : vector<6x1xi32> to vector<6x28xi32>
    %173 = arith.cmpi eq, %172, %171 : vector<6x28xi32>
    %174 = arith.extui %173 : vector<6x28xi1> to vector<6x28xi32>
    %175 = arith.sitofp %174 : vector<6x28xi32> to vector<6x28xf32>
    %176 = vector.extract_strided_slice %1 {offsets = [14, 0], sizes = [1, 32], strides = [1, 1]} : vector<24x32xf32> to vector<1x32xf32>
    %177 = vector.broadcast %176 : vector<1x32xf32> to vector<28x32xf32>
    %178 = arith.mulf %0, %177 : vector<28x32xf32>
    %cst_32 = arith.constant dense<0.000000e+00> : vector<6x32xf32>
    %179 = tpu.matmul %175, %178, %cst_32 {dimension_numbers = #tpu.dot_dimension_numbers<[1], [0], [0], [1], [0, 0, 1, 1], [], []>} : vector<6x28xf32>, vector<28x32xf32>, vector<6x32xf32> -> vector<6x32xf32>
    %180 = arith.addf %169, %179 : vector<6x32xf32>
    %181 = vector.extract_strided_slice %12 {offsets = [0, 15], sizes = [6, 1], strides = [1, 1]} : vector<6x24xi32> to vector<6x1xi32>
    %182 = tpu.iota {dimensions = array<i32: 1>} : vector<6x28xi32>
    %183 = vector.broadcast %181 : vector<6x1xi32> to vector<6x28xi32>
    %184 = arith.cmpi eq, %183, %182 : vector<6x28xi32>
    %185 = arith.extui %184 : vector<6x28xi1> to vector<6x28xi32>
    %186 = arith.sitofp %185 : vector<6x28xi32> to vector<6x28xf32>
    %187 = vector.extract_strided_slice %1 {offsets = [15, 0], sizes = [1, 32], strides = [1, 1]} : vector<24x32xf32> to vector<1x32xf32>
    %188 = vector.broadcast %187 : vector<1x32xf32> to vector<28x32xf32>
    %189 = arith.mulf %0, %188 : vector<28x32xf32>
    %cst_33 = arith.constant dense<0.000000e+00> : vector<6x32xf32>
    %190 = tpu.matmul %186, %189, %cst_33 {dimension_numbers = #tpu.dot_dimension_numbers<[1], [0], [0], [1], [0, 0, 1, 1], [], []>} : vector<6x28xf32>, vector<28x32xf32>, vector<6x32xf32> -> vector<6x32xf32>
    %191 = arith.addf %180, %190 : vector<6x32xf32>
    %192 = vector.extract_strided_slice %12 {offsets = [0, 16], sizes = [6, 1], strides = [1, 1]} : vector<6x24xi32> to vector<6x1xi32>
    %193 = tpu.iota {dimensions = array<i32: 1>} : vector<6x28xi32>
    %194 = vector.broadcast %192 : vector<6x1xi32> to vector<6x28xi32>
    %195 = arith.cmpi eq, %194, %193 : vector<6x28xi32>
    %196 = arith.extui %195 : vector<6x28xi1> to vector<6x28xi32>
    %197 = arith.sitofp %196 : vector<6x28xi32> to vector<6x28xf32>
    %198 = vector.extract_strided_slice %1 {offsets = [16, 0], sizes = [1, 32], strides = [1, 1]} : vector<24x32xf32> to vector<1x32xf32>
    %199 = vector.broadcast %198 : vector<1x32xf32> to vector<28x32xf32>
    %200 = arith.mulf %0, %199 : vector<28x32xf32>
    %cst_34 = arith.constant dense<0.000000e+00> : vector<6x32xf32>
    %201 = tpu.matmul %197, %200, %cst_34 {dimension_numbers = #tpu.dot_dimension_numbers<[1], [0], [0], [1], [0, 0, 1, 1], [], []>} : vector<6x28xf32>, vector<28x32xf32>, vector<6x32xf32> -> vector<6x32xf32>
    %202 = arith.addf %191, %201 : vector<6x32xf32>
    %203 = vector.extract_strided_slice %12 {offsets = [0, 17], sizes = [6, 1], strides = [1, 1]} : vector<6x24xi32> to vector<6x1xi32>
    %204 = tpu.iota {dimensions = array<i32: 1>} : vector<6x28xi32>
    %205 = vector.broadcast %203 : vector<6x1xi32> to vector<6x28xi32>
    %206 = arith.cmpi eq, %205, %204 : vector<6x28xi32>
    %207 = arith.extui %206 : vector<6x28xi1> to vector<6x28xi32>
    %208 = arith.sitofp %207 : vector<6x28xi32> to vector<6x28xf32>
    %209 = vector.extract_strided_slice %1 {offsets = [17, 0], sizes = [1, 32], strides = [1, 1]} : vector<24x32xf32> to vector<1x32xf32>
    %210 = vector.broadcast %209 : vector<1x32xf32> to vector<28x32xf32>
    %211 = arith.mulf %0, %210 : vector<28x32xf32>
    %cst_35 = arith.constant dense<0.000000e+00> : vector<6x32xf32>
    %212 = tpu.matmul %208, %211, %cst_35 {dimension_numbers = #tpu.dot_dimension_numbers<[1], [0], [0], [1], [0, 0, 1, 1], [], []>} : vector<6x28xf32>, vector<28x32xf32>, vector<6x32xf32> -> vector<6x32xf32>
    %213 = arith.addf %202, %212 : vector<6x32xf32>
    %214 = vector.extract_strided_slice %12 {offsets = [0, 18], sizes = [6, 1], strides = [1, 1]} : vector<6x24xi32> to vector<6x1xi32>
    %215 = tpu.iota {dimensions = array<i32: 1>} : vector<6x28xi32>
    %216 = vector.broadcast %214 : vector<6x1xi32> to vector<6x28xi32>
    %217 = arith.cmpi eq, %216, %215 : vector<6x28xi32>
    %218 = arith.extui %217 : vector<6x28xi1> to vector<6x28xi32>
    %219 = arith.sitofp %218 : vector<6x28xi32> to vector<6x28xf32>
    %220 = vector.extract_strided_slice %1 {offsets = [18, 0], sizes = [1, 32], strides = [1, 1]} : vector<24x32xf32> to vector<1x32xf32>
    %221 = vector.broadcast %220 : vector<1x32xf32> to vector<28x32xf32>
    %222 = arith.mulf %0, %221 : vector<28x32xf32>
    %cst_36 = arith.constant dense<0.000000e+00> : vector<6x32xf32>
    %223 = tpu.matmul %219, %222, %cst_36 {dimension_numbers = #tpu.dot_dimension_numbers<[1], [0], [0], [1], [0, 0, 1, 1], [], []>} : vector<6x28xf32>, vector<28x32xf32>, vector<6x32xf32> -> vector<6x32xf32>
    %224 = arith.addf %213, %223 : vector<6x32xf32>
    %225 = vector.extract_strided_slice %12 {offsets = [0, 19], sizes = [6, 1], strides = [1, 1]} : vector<6x24xi32> to vector<6x1xi32>
    %226 = tpu.iota {dimensions = array<i32: 1>} : vector<6x28xi32>
    %227 = vector.broadcast %225 : vector<6x1xi32> to vector<6x28xi32>
    %228 = arith.cmpi eq, %227, %226 : vector<6x28xi32>
    %229 = arith.extui %228 : vector<6x28xi1> to vector<6x28xi32>
    %230 = arith.sitofp %229 : vector<6x28xi32> to vector<6x28xf32>
    %231 = vector.extract_strided_slice %1 {offsets = [19, 0], sizes = [1, 32], strides = [1, 1]} : vector<24x32xf32> to vector<1x32xf32>
    %232 = vector.broadcast %231 : vector<1x32xf32> to vector<28x32xf32>
    %233 = arith.mulf %0, %232 : vector<28x32xf32>
    %cst_37 = arith.constant dense<0.000000e+00> : vector<6x32xf32>
    %234 = tpu.matmul %230, %233, %cst_37 {dimension_numbers = #tpu.dot_dimension_numbers<[1], [0], [0], [1], [0, 0, 1, 1], [], []>} : vector<6x28xf32>, vector<28x32xf32>, vector<6x32xf32> -> vector<6x32xf32>
    %235 = arith.addf %224, %234 : vector<6x32xf32>
    %236 = vector.extract_strided_slice %12 {offsets = [0, 20], sizes = [6, 1], strides = [1, 1]} : vector<6x24xi32> to vector<6x1xi32>
    %237 = tpu.iota {dimensions = array<i32: 1>} : vector<6x28xi32>
    %238 = vector.broadcast %236 : vector<6x1xi32> to vector<6x28xi32>
    %239 = arith.cmpi eq, %238, %237 : vector<6x28xi32>
    %240 = arith.extui %239 : vector<6x28xi1> to vector<6x28xi32>
    %241 = arith.sitofp %240 : vector<6x28xi32> to vector<6x28xf32>
    %242 = vector.extract_strided_slice %1 {offsets = [20, 0], sizes = [1, 32], strides = [1, 1]} : vector<24x32xf32> to vector<1x32xf32>
    %243 = vector.broadcast %242 : vector<1x32xf32> to vector<28x32xf32>
    %244 = arith.mulf %0, %243 : vector<28x32xf32>
    %cst_38 = arith.constant dense<0.000000e+00> : vector<6x32xf32>
    %245 = tpu.matmul %241, %244, %cst_38 {dimension_numbers = #tpu.dot_dimension_numbers<[1], [0], [0], [1], [0, 0, 1, 1], [], []>} : vector<6x28xf32>, vector<28x32xf32>, vector<6x32xf32> -> vector<6x32xf32>
    %246 = arith.addf %235, %245 : vector<6x32xf32>
    %247 = vector.extract_strided_slice %12 {offsets = [0, 21], sizes = [6, 1], strides = [1, 1]} : vector<6x24xi32> to vector<6x1xi32>
    %248 = tpu.iota {dimensions = array<i32: 1>} : vector<6x28xi32>
    %249 = vector.broadcast %247 : vector<6x1xi32> to vector<6x28xi32>
    %250 = arith.cmpi eq, %249, %248 : vector<6x28xi32>
    %251 = arith.extui %250 : vector<6x28xi1> to vector<6x28xi32>
    %252 = arith.sitofp %251 : vector<6x28xi32> to vector<6x28xf32>
    %253 = vector.extract_strided_slice %1 {offsets = [21, 0], sizes = [1, 32], strides = [1, 1]} : vector<24x32xf32> to vector<1x32xf32>
    %254 = vector.broadcast %253 : vector<1x32xf32> to vector<28x32xf32>
    %255 = arith.mulf %0, %254 : vector<28x32xf32>
    %cst_39 = arith.constant dense<0.000000e+00> : vector<6x32xf32>
    %256 = tpu.matmul %252, %255, %cst_39 {dimension_numbers = #tpu.dot_dimension_numbers<[1], [0], [0], [1], [0, 0, 1, 1], [], []>} : vector<6x28xf32>, vector<28x32xf32>, vector<6x32xf32> -> vector<6x32xf32>
    %257 = arith.addf %246, %256 : vector<6x32xf32>
    %258 = vector.extract_strided_slice %12 {offsets = [0, 22], sizes = [6, 1], strides = [1, 1]} : vector<6x24xi32> to vector<6x1xi32>
    %259 = tpu.iota {dimensions = array<i32: 1>} : vector<6x28xi32>
    %260 = vector.broadcast %258 : vector<6x1xi32> to vector<6x28xi32>
    %261 = arith.cmpi eq, %260, %259 : vector<6x28xi32>
    %262 = arith.extui %261 : vector<6x28xi1> to vector<6x28xi32>
    %263 = arith.sitofp %262 : vector<6x28xi32> to vector<6x28xf32>
    %264 = vector.extract_strided_slice %1 {offsets = [22, 0], sizes = [1, 32], strides = [1, 1]} : vector<24x32xf32> to vector<1x32xf32>
    %265 = vector.broadcast %264 : vector<1x32xf32> to vector<28x32xf32>
    %266 = arith.mulf %0, %265 : vector<28x32xf32>
    %cst_40 = arith.constant dense<0.000000e+00> : vector<6x32xf32>
    %267 = tpu.matmul %263, %266, %cst_40 {dimension_numbers = #tpu.dot_dimension_numbers<[1], [0], [0], [1], [0, 0, 1, 1], [], []>} : vector<6x28xf32>, vector<28x32xf32>, vector<6x32xf32> -> vector<6x32xf32>
    %268 = arith.addf %257, %267 : vector<6x32xf32>
    %269 = vector.extract_strided_slice %12 {offsets = [0, 23], sizes = [6, 1], strides = [1, 1]} : vector<6x24xi32> to vector<6x1xi32>
    %270 = tpu.iota {dimensions = array<i32: 1>} : vector<6x28xi32>
    %271 = vector.broadcast %269 : vector<6x1xi32> to vector<6x28xi32>
    %272 = arith.cmpi eq, %271, %270 : vector<6x28xi32>
    %273 = arith.extui %272 : vector<6x28xi1> to vector<6x28xi32>
    %274 = arith.sitofp %273 : vector<6x28xi32> to vector<6x28xf32>
    %275 = vector.extract_strided_slice %1 {offsets = [23, 0], sizes = [1, 32], strides = [1, 1]} : vector<24x32xf32> to vector<1x32xf32>
    %276 = vector.broadcast %275 : vector<1x32xf32> to vector<28x32xf32>
    %277 = arith.mulf %0, %276 : vector<28x32xf32>
    %cst_41 = arith.constant dense<0.000000e+00> : vector<6x32xf32>
    %278 = tpu.matmul %274, %277, %cst_41 {dimension_numbers = #tpu.dot_dimension_numbers<[1], [0], [0], [1], [0, 0, 1, 1], [], []>} : vector<6x28xf32>, vector<28x32xf32>, vector<6x32xf32> -> vector<6x32xf32>
    %279 = arith.addf %268, %278 : vector<6x32xf32>
    %cst_42 = arith.constant 0.000000e+00 : f32
    %280 = vector.broadcast %cst_42 : f32 to vector<4x32xf32>
    %281 = vector.extract_strided_slice %14 {offsets = [0, 0], sizes = [4, 1], strides = [1, 1]} : vector<4x8xi32> to vector<4x1xi32>
    %282 = tpu.iota {dimensions = array<i32: 1>} : vector<4x28xi32>
    %283 = vector.broadcast %281 : vector<4x1xi32> to vector<4x28xi32>
    %284 = arith.cmpi eq, %283, %282 : vector<4x28xi32>
    %285 = arith.extui %284 : vector<4x28xi1> to vector<4x28xi32>
    %286 = arith.sitofp %285 : vector<4x28xi32> to vector<4x28xf32>
    %287 = vector.extract_strided_slice %2 {offsets = [0, 0], sizes = [1, 32], strides = [1, 1]} : vector<8x32xf32> to vector<1x32xf32>
    %288 = vector.broadcast %287 : vector<1x32xf32> to vector<28x32xf32>
    %289 = arith.mulf %0, %288 : vector<28x32xf32>
    %cst_43 = arith.constant dense<0.000000e+00> : vector<4x32xf32>
    %290 = tpu.matmul %286, %289, %cst_43 {dimension_numbers = #tpu.dot_dimension_numbers<[1], [0], [0], [1], [0, 0, 1, 1], [], []>} : vector<4x28xf32>, vector<28x32xf32>, vector<4x32xf32> -> vector<4x32xf32>
    %291 = arith.addf %280, %290 : vector<4x32xf32>
    %292 = vector.extract_strided_slice %14 {offsets = [0, 1], sizes = [4, 1], strides = [1, 1]} : vector<4x8xi32> to vector<4x1xi32>
    %293 = tpu.iota {dimensions = array<i32: 1>} : vector<4x28xi32>
    %294 = vector.broadcast %292 : vector<4x1xi32> to vector<4x28xi32>
    %295 = arith.cmpi eq, %294, %293 : vector<4x28xi32>
    %296 = arith.extui %295 : vector<4x28xi1> to vector<4x28xi32>
    %297 = arith.sitofp %296 : vector<4x28xi32> to vector<4x28xf32>
    %298 = vector.extract_strided_slice %2 {offsets = [1, 0], sizes = [1, 32], strides = [1, 1]} : vector<8x32xf32> to vector<1x32xf32>
    %299 = vector.broadcast %298 : vector<1x32xf32> to vector<28x32xf32>
    %300 = arith.mulf %0, %299 : vector<28x32xf32>
    %cst_44 = arith.constant dense<0.000000e+00> : vector<4x32xf32>
    %301 = tpu.matmul %297, %300, %cst_44 {dimension_numbers = #tpu.dot_dimension_numbers<[1], [0], [0], [1], [0, 0, 1, 1], [], []>} : vector<4x28xf32>, vector<28x32xf32>, vector<4x32xf32> -> vector<4x32xf32>
    %302 = arith.addf %291, %301 : vector<4x32xf32>
    %303 = vector.extract_strided_slice %14 {offsets = [0, 2], sizes = [4, 1], strides = [1, 1]} : vector<4x8xi32> to vector<4x1xi32>
    %304 = tpu.iota {dimensions = array<i32: 1>} : vector<4x28xi32>
    %305 = vector.broadcast %303 : vector<4x1xi32> to vector<4x28xi32>
    %306 = arith.cmpi eq, %305, %304 : vector<4x28xi32>
    %307 = arith.extui %306 : vector<4x28xi1> to vector<4x28xi32>
    %308 = arith.sitofp %307 : vector<4x28xi32> to vector<4x28xf32>
    %309 = vector.extract_strided_slice %2 {offsets = [2, 0], sizes = [1, 32], strides = [1, 1]} : vector<8x32xf32> to vector<1x32xf32>
    %310 = vector.broadcast %309 : vector<1x32xf32> to vector<28x32xf32>
    %311 = arith.mulf %0, %310 : vector<28x32xf32>
    %cst_45 = arith.constant dense<0.000000e+00> : vector<4x32xf32>
    %312 = tpu.matmul %308, %311, %cst_45 {dimension_numbers = #tpu.dot_dimension_numbers<[1], [0], [0], [1], [0, 0, 1, 1], [], []>} : vector<4x28xf32>, vector<28x32xf32>, vector<4x32xf32> -> vector<4x32xf32>
    %313 = arith.addf %302, %312 : vector<4x32xf32>
    %314 = vector.extract_strided_slice %14 {offsets = [0, 3], sizes = [4, 1], strides = [1, 1]} : vector<4x8xi32> to vector<4x1xi32>
    %315 = tpu.iota {dimensions = array<i32: 1>} : vector<4x28xi32>
    %316 = vector.broadcast %314 : vector<4x1xi32> to vector<4x28xi32>
    %317 = arith.cmpi eq, %316, %315 : vector<4x28xi32>
    %318 = arith.extui %317 : vector<4x28xi1> to vector<4x28xi32>
    %319 = arith.sitofp %318 : vector<4x28xi32> to vector<4x28xf32>
    %320 = vector.extract_strided_slice %2 {offsets = [3, 0], sizes = [1, 32], strides = [1, 1]} : vector<8x32xf32> to vector<1x32xf32>
    %321 = vector.broadcast %320 : vector<1x32xf32> to vector<28x32xf32>
    %322 = arith.mulf %0, %321 : vector<28x32xf32>
    %cst_46 = arith.constant dense<0.000000e+00> : vector<4x32xf32>
    %323 = tpu.matmul %319, %322, %cst_46 {dimension_numbers = #tpu.dot_dimension_numbers<[1], [0], [0], [1], [0, 0, 1, 1], [], []>} : vector<4x28xf32>, vector<28x32xf32>, vector<4x32xf32> -> vector<4x32xf32>
    %324 = arith.addf %313, %323 : vector<4x32xf32>
    %325 = vector.extract_strided_slice %14 {offsets = [0, 4], sizes = [4, 1], strides = [1, 1]} : vector<4x8xi32> to vector<4x1xi32>
    %326 = tpu.iota {dimensions = array<i32: 1>} : vector<4x28xi32>
    %327 = vector.broadcast %325 : vector<4x1xi32> to vector<4x28xi32>
    %328 = arith.cmpi eq, %327, %326 : vector<4x28xi32>
    %329 = arith.extui %328 : vector<4x28xi1> to vector<4x28xi32>
    %330 = arith.sitofp %329 : vector<4x28xi32> to vector<4x28xf32>
    %331 = vector.extract_strided_slice %2 {offsets = [4, 0], sizes = [1, 32], strides = [1, 1]} : vector<8x32xf32> to vector<1x32xf32>
    %332 = vector.broadcast %331 : vector<1x32xf32> to vector<28x32xf32>
    %333 = arith.mulf %0, %332 : vector<28x32xf32>
    %cst_47 = arith.constant dense<0.000000e+00> : vector<4x32xf32>
    %334 = tpu.matmul %330, %333, %cst_47 {dimension_numbers = #tpu.dot_dimension_numbers<[1], [0], [0], [1], [0, 0, 1, 1], [], []>} : vector<4x28xf32>, vector<28x32xf32>, vector<4x32xf32> -> vector<4x32xf32>
    %335 = arith.addf %324, %334 : vector<4x32xf32>
    %336 = vector.extract_strided_slice %14 {offsets = [0, 5], sizes = [4, 1], strides = [1, 1]} : vector<4x8xi32> to vector<4x1xi32>
    %337 = tpu.iota {dimensions = array<i32: 1>} : vector<4x28xi32>
    %338 = vector.broadcast %336 : vector<4x1xi32> to vector<4x28xi32>
    %339 = arith.cmpi eq, %338, %337 : vector<4x28xi32>
    %340 = arith.extui %339 : vector<4x28xi1> to vector<4x28xi32>
    %341 = arith.sitofp %340 : vector<4x28xi32> to vector<4x28xf32>
    %342 = vector.extract_strided_slice %2 {offsets = [5, 0], sizes = [1, 32], strides = [1, 1]} : vector<8x32xf32> to vector<1x32xf32>
    %343 = vector.broadcast %342 : vector<1x32xf32> to vector<28x32xf32>
    %344 = arith.mulf %0, %343 : vector<28x32xf32>
    %cst_48 = arith.constant dense<0.000000e+00> : vector<4x32xf32>
    %345 = tpu.matmul %341, %344, %cst_48 {dimension_numbers = #tpu.dot_dimension_numbers<[1], [0], [0], [1], [0, 0, 1, 1], [], []>} : vector<4x28xf32>, vector<28x32xf32>, vector<4x32xf32> -> vector<4x32xf32>
    %346 = arith.addf %335, %345 : vector<4x32xf32>
    %347 = vector.extract_strided_slice %14 {offsets = [0, 6], sizes = [4, 1], strides = [1, 1]} : vector<4x8xi32> to vector<4x1xi32>
    %348 = tpu.iota {dimensions = array<i32: 1>} : vector<4x28xi32>
    %349 = vector.broadcast %347 : vector<4x1xi32> to vector<4x28xi32>
    %350 = arith.cmpi eq, %349, %348 : vector<4x28xi32>
    %351 = arith.extui %350 : vector<4x28xi1> to vector<4x28xi32>
    %352 = arith.sitofp %351 : vector<4x28xi32> to vector<4x28xf32>
    %353 = vector.extract_strided_slice %2 {offsets = [6, 0], sizes = [1, 32], strides = [1, 1]} : vector<8x32xf32> to vector<1x32xf32>
    %354 = vector.broadcast %353 : vector<1x32xf32> to vector<28x32xf32>
    %355 = arith.mulf %0, %354 : vector<28x32xf32>
    %cst_49 = arith.constant dense<0.000000e+00> : vector<4x32xf32>
    %356 = tpu.matmul %352, %355, %cst_49 {dimension_numbers = #tpu.dot_dimension_numbers<[1], [0], [0], [1], [0, 0, 1, 1], [], []>} : vector<4x28xf32>, vector<28x32xf32>, vector<4x32xf32> -> vector<4x32xf32>
    %357 = arith.addf %346, %356 : vector<4x32xf32>
    %358 = vector.extract_strided_slice %14 {offsets = [0, 7], sizes = [4, 1], strides = [1, 1]} : vector<4x8xi32> to vector<4x1xi32>
    %359 = tpu.iota {dimensions = array<i32: 1>} : vector<4x28xi32>
    %360 = vector.broadcast %358 : vector<4x1xi32> to vector<4x28xi32>
    %361 = arith.cmpi eq, %360, %359 : vector<4x28xi32>
    %362 = arith.extui %361 : vector<4x28xi1> to vector<4x28xi32>
    %363 = arith.sitofp %362 : vector<4x28xi32> to vector<4x28xf32>
    %364 = vector.extract_strided_slice %2 {offsets = [7, 0], sizes = [1, 32], strides = [1, 1]} : vector<8x32xf32> to vector<1x32xf32>
    %365 = vector.broadcast %364 : vector<1x32xf32> to vector<28x32xf32>
    %366 = arith.mulf %0, %365 : vector<28x32xf32>
    %cst_50 = arith.constant dense<0.000000e+00> : vector<4x32xf32>
    %367 = tpu.matmul %363, %366, %cst_50 {dimension_numbers = #tpu.dot_dimension_numbers<[1], [0], [0], [1], [0, 0, 1, 1], [], []>} : vector<4x28xf32>, vector<28x32xf32>, vector<4x32xf32> -> vector<4x32xf32>
    %368 = arith.addf %357, %367 : vector<4x32xf32>
    %cst_51 = arith.constant dense<0.000000e+00> : vector<6x32xf32>
    %369 = tpu.matmul %279, %8, %cst_51 {dimension_numbers = #tpu.dot_dimension_numbers<[1], [0], [0], [1], [0, 0, 1, 1], [], []>} : vector<6x32xf32>, vector<32x32xf32>, vector<6x32xf32> -> vector<6x32xf32>
    %cst_52 = arith.constant dense<0.000000e+00> : vector<8x32xf32>
    %370 = tpu.matmul %3, %7, %cst_52 {dimension_numbers = #tpu.dot_dimension_numbers<[1], [0], [0], [1], [0, 0, 1, 1], [], []>} : vector<8x32xf32>, vector<32x32xf32>, vector<8x32xf32> -> vector<8x32xf32>
    %371 = vector.broadcast %4 : vector<1x32xf32> to vector<8x32xf32>
    %372 = arith.addf %371, %370 : vector<8x32xf32>
    %373 = tpu.iota {dimensions = array<i32: 0>} : vector<8x2xi32>
    %374 = tpu.iota {dimensions = array<i32: 1>} : vector<8x2xi32>
    %c4_i32 = arith.constant 4 : i32
    %375 = vector.broadcast %c4_i32 : i32 to vector<8x2xi32>
    %376 = arith.muli %374, %375 : vector<8x2xi32>
    %377 = arith.cmpi sge, %373, %376 : vector<8x2xi32>
    %c4_i32_53 = arith.constant 4 : i32
    %378 = vector.broadcast %c4_i32_53 : i32 to vector<8x2xi32>
    %379 = arith.muli %374, %378 : vector<8x2xi32>
    %c4_i32_54 = arith.constant 4 : i32
    %380 = vector.broadcast %c4_i32_54 : i32 to vector<8x2xi32>
    %381 = arith.addi %379, %380 : vector<8x2xi32>
    %382 = arith.cmpi slt, %373, %381 : vector<8x2xi32>
    %383 = arith.andi %377, %382 : vector<8x2xi1>
    %384 = arith.extui %383 : vector<8x2xi1> to vector<8x2xi32>
    %385 = arith.sitofp %384 : vector<8x2xi32> to vector<8x2xf32>
    %386 = tpu.iota {dimensions = array<i32: 0>} : vector<2x6xi32>
    %387 = tpu.iota {dimensions = array<i32: 1>} : vector<2x6xi32>
    %c3_i32 = arith.constant 3 : i32
    %388 = vector.broadcast %c3_i32 : i32 to vector<2x6xi32>
    %389 = arith.muli %386, %388 : vector<2x6xi32>
    %c0_i32 = arith.constant 0 : i32
    %390 = vector.broadcast %c0_i32 : i32 to vector<2x6xi32>
    %391 = arith.addi %389, %390 : vector<2x6xi32>
    %392 = arith.cmpi eq, %387, %391 : vector<2x6xi32>
    %393 = arith.extui %392 : vector<2x6xi1> to vector<2x6xi32>
    %394 = arith.sitofp %393 : vector<2x6xi32> to vector<2x6xf32>
    %cst_55 = arith.constant dense<0.000000e+00> : vector<2x32xf32>
    %395 = tpu.matmul %394, %279, %cst_55 {dimension_numbers = #tpu.dot_dimension_numbers<[1], [0], [0], [1], [0, 0, 1, 1], [], []>} : vector<2x6xf32>, vector<6x32xf32>, vector<2x32xf32> -> vector<2x32xf32>
    %cst_56 = arith.constant dense<0.000000e+00> : vector<8x32xf32>
    %396 = tpu.matmul %385, %395, %cst_56 {dimension_numbers = #tpu.dot_dimension_numbers<[1], [0], [0], [1], [0, 0, 1, 1], [], []>} : vector<8x2xf32>, vector<2x32xf32>, vector<8x32xf32> -> vector<8x32xf32>
    %cst_57 = arith.constant dense<0.000000e+00> : vector<2x32xf32>
    %397 = tpu.matmul %394, %369, %cst_57 {dimension_numbers = #tpu.dot_dimension_numbers<[1], [0], [0], [1], [0, 0, 1, 1], [], []>} : vector<2x6xf32>, vector<6x32xf32>, vector<2x32xf32> -> vector<2x32xf32>
    %cst_58 = arith.constant dense<0.000000e+00> : vector<8x32xf32>
    %398 = tpu.matmul %385, %397, %cst_58 {dimension_numbers = #tpu.dot_dimension_numbers<[1], [0], [0], [1], [0, 0, 1, 1], [], []>} : vector<8x2xf32>, vector<2x32xf32>, vector<8x32xf32> -> vector<8x32xf32>
    %399 = arith.addf %3, %3 : vector<8x32xf32>
    %400 = arith.mulf %396, %399 : vector<8x32xf32>
    %cst_59 = arith.constant dense<0.000000e+00> : vector<8xf32>
    %401 = vector.multi_reduction <add>, %400, %cst_59 [1] : vector<8x32xf32> to vector<8xf32>
    %402 = vector.shape_cast %401 : vector<8xf32> to vector<8x1xf32>
    %403 = arith.negf %402 : vector<8x1xf32>
    %404 = math.exp %403 : vector<8x1xf32>
    %cst_60 = arith.constant 1.000000e+00 : f32
    %405 = vector.broadcast %cst_60 : f32 to vector<8x1xf32>
    %406 = arith.addf %405, %404 : vector<8x1xf32>
    %407 = arith.divf %405, %406 : vector<8x1xf32>
    %cst_61 = arith.constant dense<0.000000e+00> : vector<8x32xf32>
    %408 = tpu.matmul %3, %6, %cst_61 {dimension_numbers = #tpu.dot_dimension_numbers<[1], [0], [0], [1], [0, 0, 1, 1], [], []>} : vector<8x32xf32>, vector<32x32xf32>, vector<8x32xf32> -> vector<8x32xf32>
    %409 = arith.addf %408, %372 : vector<8x32xf32>
    %410 = arith.addf %409, %398 : vector<8x32xf32>
    %cst_62 = arith.constant 0.000000e+00 : f32
    %411 = vector.broadcast %cst_62 : f32 to vector<8x32xf32>
    %412 = arith.cmpf ogt, %410, %411 : vector<8x32xf32>
    %413 = vector.broadcast %5 : vector<1x32xf32> to vector<8x32xf32>
    %414 = arith.mulf %413, %410 : vector<8x32xf32>
    %415 = arith.select %412, %410, %414 : vector<8x32xi1>, vector<8x32xf32>
    %416 = vector.broadcast %407 : vector<8x1xf32> to vector<8x32xf32>
    %417 = arith.mulf %416, %415 : vector<8x32xf32>
    %418 = arith.addf %3, %417 : vector<8x32xf32>
    %419 = arith.mulf %418, %418 : vector<8x32xf32>
    %cst_63 = arith.constant dense<0.000000e+00> : vector<8xf32>
    %420 = vector.multi_reduction <add>, %419, %cst_63 [1] : vector<8x32xf32> to vector<8xf32>
    %421 = vector.shape_cast %420 : vector<8xf32> to vector<8x1xf32>
    %422 = math.sqrt %421 : vector<8x1xf32>
    %cst_64 = arith.constant 9.99999993E-9 : f32
    %423 = vector.broadcast %cst_64 : f32 to vector<8x1xf32>
    %424 = arith.addf %422, %423 : vector<8x1xf32>
    %cst_65 = arith.constant 0.000000e+00 : f32
    %425 = vector.broadcast %cst_65 : f32 to vector<8x32xf32>
    %426 = arith.cmpf ogt, %418, %425 : vector<8x32xf32>
    %cst_66 = arith.constant 1.000000e+00 : f32
    %427 = vector.broadcast %cst_66 : f32 to vector<8x32xf32>
    %428 = arith.select %426, %418, %427 : vector<8x32xi1>, vector<8x32xf32>
    %429 = tpu.reciprocal %424 {approx = true} : vector<8x1xf32> -> vector<8x1xf32>
    %430 = vector.broadcast %429 : vector<8x1xf32> to vector<8x32xf32>
    %431 = arith.mulf %428, %430 : vector<8x32xf32>
    %c3_i32_67 = arith.constant 3 : i32
    %432 = vector.broadcast %c3_i32_67 : i32 to vector<2x6xi32>
    %433 = arith.muli %386, %432 : vector<2x6xi32>
    %c1_i32 = arith.constant 1 : i32
    %434 = vector.broadcast %c1_i32 : i32 to vector<2x6xi32>
    %435 = arith.addi %433, %434 : vector<2x6xi32>
    %436 = arith.cmpi eq, %387, %435 : vector<2x6xi32>
    %437 = arith.extui %436 : vector<2x6xi1> to vector<2x6xi32>
    %438 = arith.sitofp %437 : vector<2x6xi32> to vector<2x6xf32>
    %cst_68 = arith.constant dense<0.000000e+00> : vector<2x32xf32>
    %439 = tpu.matmul %438, %279, %cst_68 {dimension_numbers = #tpu.dot_dimension_numbers<[1], [0], [0], [1], [0, 0, 1, 1], [], []>} : vector<2x6xf32>, vector<6x32xf32>, vector<2x32xf32> -> vector<2x32xf32>
    %cst_69 = arith.constant dense<0.000000e+00> : vector<8x32xf32>
    %440 = tpu.matmul %385, %439, %cst_69 {dimension_numbers = #tpu.dot_dimension_numbers<[1], [0], [0], [1], [0, 0, 1, 1], [], []>} : vector<8x2xf32>, vector<2x32xf32>, vector<8x32xf32> -> vector<8x32xf32>
    %cst_70 = arith.constant dense<0.000000e+00> : vector<2x32xf32>
    %441 = tpu.matmul %438, %369, %cst_70 {dimension_numbers = #tpu.dot_dimension_numbers<[1], [0], [0], [1], [0, 0, 1, 1], [], []>} : vector<2x6xf32>, vector<6x32xf32>, vector<2x32xf32> -> vector<2x32xf32>
    %cst_71 = arith.constant dense<0.000000e+00> : vector<8x32xf32>
    %442 = tpu.matmul %385, %441, %cst_71 {dimension_numbers = #tpu.dot_dimension_numbers<[1], [0], [0], [1], [0, 0, 1, 1], [], []>} : vector<8x2xf32>, vector<2x32xf32>, vector<8x32xf32> -> vector<8x32xf32>
    %443 = arith.addf %431, %3 : vector<8x32xf32>
    %444 = arith.mulf %440, %443 : vector<8x32xf32>
    %cst_72 = arith.constant dense<0.000000e+00> : vector<8xf32>
    %445 = vector.multi_reduction <add>, %444, %cst_72 [1] : vector<8x32xf32> to vector<8xf32>
    %446 = vector.shape_cast %445 : vector<8xf32> to vector<8x1xf32>
    %447 = arith.negf %446 : vector<8x1xf32>
    %448 = math.exp %447 : vector<8x1xf32>
    %cst_73 = arith.constant 1.000000e+00 : f32
    %449 = vector.broadcast %cst_73 : f32 to vector<8x1xf32>
    %450 = arith.addf %449, %448 : vector<8x1xf32>
    %451 = arith.divf %449, %450 : vector<8x1xf32>
    %cst_74 = arith.constant dense<0.000000e+00> : vector<8x32xf32>
    %452 = tpu.matmul %431, %6, %cst_74 {dimension_numbers = #tpu.dot_dimension_numbers<[1], [0], [0], [1], [0, 0, 1, 1], [], []>} : vector<8x32xf32>, vector<32x32xf32>, vector<8x32xf32> -> vector<8x32xf32>
    %453 = arith.addf %452, %372 : vector<8x32xf32>
    %454 = arith.addf %453, %442 : vector<8x32xf32>
    %cst_75 = arith.constant 0.000000e+00 : f32
    %455 = vector.broadcast %cst_75 : f32 to vector<8x32xf32>
    %456 = arith.cmpf ogt, %454, %455 : vector<8x32xf32>
    %457 = vector.broadcast %5 : vector<1x32xf32> to vector<8x32xf32>
    %458 = arith.mulf %457, %454 : vector<8x32xf32>
    %459 = arith.select %456, %454, %458 : vector<8x32xi1>, vector<8x32xf32>
    %460 = vector.broadcast %451 : vector<8x1xf32> to vector<8x32xf32>
    %461 = arith.mulf %460, %459 : vector<8x32xf32>
    %462 = arith.addf %431, %461 : vector<8x32xf32>
    %463 = arith.mulf %462, %462 : vector<8x32xf32>
    %cst_76 = arith.constant dense<0.000000e+00> : vector<8xf32>
    %464 = vector.multi_reduction <add>, %463, %cst_76 [1] : vector<8x32xf32> to vector<8xf32>
    %465 = vector.shape_cast %464 : vector<8xf32> to vector<8x1xf32>
    %466 = math.sqrt %465 : vector<8x1xf32>
    %cst_77 = arith.constant 9.99999993E-9 : f32
    %467 = vector.broadcast %cst_77 : f32 to vector<8x1xf32>
    %468 = arith.addf %466, %467 : vector<8x1xf32>
    %cst_78 = arith.constant 0.000000e+00 : f32
    %469 = vector.broadcast %cst_78 : f32 to vector<8x32xf32>
    %470 = arith.cmpf ogt, %462, %469 : vector<8x32xf32>
    %cst_79 = arith.constant 1.000000e+00 : f32
    %471 = vector.broadcast %cst_79 : f32 to vector<8x32xf32>
    %472 = arith.select %470, %462, %471 : vector<8x32xi1>, vector<8x32xf32>
    %473 = tpu.reciprocal %468 {approx = true} : vector<8x1xf32> -> vector<8x1xf32>
    %474 = vector.broadcast %473 : vector<8x1xf32> to vector<8x32xf32>
    %475 = arith.mulf %472, %474 : vector<8x32xf32>
    %c3_i32_80 = arith.constant 3 : i32
    %476 = vector.broadcast %c3_i32_80 : i32 to vector<2x6xi32>
    %477 = arith.muli %386, %476 : vector<2x6xi32>
    %c2_i32 = arith.constant 2 : i32
    %478 = vector.broadcast %c2_i32 : i32 to vector<2x6xi32>
    %479 = arith.addi %477, %478 : vector<2x6xi32>
    %480 = arith.cmpi eq, %387, %479 : vector<2x6xi32>
    %481 = arith.extui %480 : vector<2x6xi1> to vector<2x6xi32>
    %482 = arith.sitofp %481 : vector<2x6xi32> to vector<2x6xf32>
    %cst_81 = arith.constant dense<0.000000e+00> : vector<2x32xf32>
    %483 = tpu.matmul %482, %279, %cst_81 {dimension_numbers = #tpu.dot_dimension_numbers<[1], [0], [0], [1], [0, 0, 1, 1], [], []>} : vector<2x6xf32>, vector<6x32xf32>, vector<2x32xf32> -> vector<2x32xf32>
    %cst_82 = arith.constant dense<0.000000e+00> : vector<8x32xf32>
    %484 = tpu.matmul %385, %483, %cst_82 {dimension_numbers = #tpu.dot_dimension_numbers<[1], [0], [0], [1], [0, 0, 1, 1], [], []>} : vector<8x2xf32>, vector<2x32xf32>, vector<8x32xf32> -> vector<8x32xf32>
    %cst_83 = arith.constant dense<0.000000e+00> : vector<2x32xf32>
    %485 = tpu.matmul %482, %369, %cst_83 {dimension_numbers = #tpu.dot_dimension_numbers<[1], [0], [0], [1], [0, 0, 1, 1], [], []>} : vector<2x6xf32>, vector<6x32xf32>, vector<2x32xf32> -> vector<2x32xf32>
    %cst_84 = arith.constant dense<0.000000e+00> : vector<8x32xf32>
    %486 = tpu.matmul %385, %485, %cst_84 {dimension_numbers = #tpu.dot_dimension_numbers<[1], [0], [0], [1], [0, 0, 1, 1], [], []>} : vector<8x2xf32>, vector<2x32xf32>, vector<8x32xf32> -> vector<8x32xf32>
    %487 = arith.addf %475, %3 : vector<8x32xf32>
    %488 = arith.mulf %484, %487 : vector<8x32xf32>
    %cst_85 = arith.constant dense<0.000000e+00> : vector<8xf32>
    %489 = vector.multi_reduction <add>, %488, %cst_85 [1] : vector<8x32xf32> to vector<8xf32>
    %490 = vector.shape_cast %489 : vector<8xf32> to vector<8x1xf32>
    %491 = arith.negf %490 : vector<8x1xf32>
    %492 = math.exp %491 : vector<8x1xf32>
    %cst_86 = arith.constant 1.000000e+00 : f32
    %493 = vector.broadcast %cst_86 : f32 to vector<8x1xf32>
    %494 = arith.addf %493, %492 : vector<8x1xf32>
    %495 = arith.divf %493, %494 : vector<8x1xf32>
    %cst_87 = arith.constant dense<0.000000e+00> : vector<8x32xf32>
    %496 = tpu.matmul %475, %6, %cst_87 {dimension_numbers = #tpu.dot_dimension_numbers<[1], [0], [0], [1], [0, 0, 1, 1], [], []>} : vector<8x32xf32>, vector<32x32xf32>, vector<8x32xf32> -> vector<8x32xf32>
    %497 = arith.addf %496, %372 : vector<8x32xf32>
    %498 = arith.addf %497, %486 : vector<8x32xf32>
    %cst_88 = arith.constant 0.000000e+00 : f32
    %499 = vector.broadcast %cst_88 : f32 to vector<8x32xf32>
    %500 = arith.cmpf ogt, %498, %499 : vector<8x32xf32>
    %501 = vector.broadcast %5 : vector<1x32xf32> to vector<8x32xf32>
    %502 = arith.mulf %501, %498 : vector<8x32xf32>
    %503 = arith.select %500, %498, %502 : vector<8x32xi1>, vector<8x32xf32>
    %504 = vector.broadcast %495 : vector<8x1xf32> to vector<8x32xf32>
    %505 = arith.mulf %504, %503 : vector<8x32xf32>
    %506 = arith.addf %475, %505 : vector<8x32xf32>
    %507 = arith.mulf %506, %506 : vector<8x32xf32>
    %cst_89 = arith.constant dense<0.000000e+00> : vector<8xf32>
    %508 = vector.multi_reduction <add>, %507, %cst_89 [1] : vector<8x32xf32> to vector<8xf32>
    %509 = vector.shape_cast %508 : vector<8xf32> to vector<8x1xf32>
    %510 = math.sqrt %509 : vector<8x1xf32>
    %cst_90 = arith.constant 9.99999993E-9 : f32
    %511 = vector.broadcast %cst_90 : f32 to vector<8x1xf32>
    %512 = arith.addf %510, %511 : vector<8x1xf32>
    %cst_91 = arith.constant 0.000000e+00 : f32
    %513 = vector.broadcast %cst_91 : f32 to vector<8x32xf32>
    %514 = arith.cmpf ogt, %506, %513 : vector<8x32xf32>
    %cst_92 = arith.constant 1.000000e+00 : f32
    %515 = vector.broadcast %cst_92 : f32 to vector<8x32xf32>
    %516 = arith.select %514, %506, %515 : vector<8x32xi1>, vector<8x32xf32>
    %517 = tpu.reciprocal %512 {approx = true} : vector<8x1xf32> -> vector<8x1xf32>
    %518 = vector.broadcast %517 : vector<8x1xf32> to vector<8x32xf32>
    %519 = arith.mulf %516, %518 : vector<8x32xf32>
    %520 = tpu.iota {dimensions = array<i32: 0>} : vector<4x2xi32>
    %521 = tpu.iota {dimensions = array<i32: 1>} : vector<4x2xi32>
    %c2_i32_93 = arith.constant 2 : i32
    %522 = vector.broadcast %c2_i32_93 : i32 to vector<4x2xi32>
    %523 = arith.muli %521, %522 : vector<4x2xi32>
    %524 = arith.cmpi sge, %520, %523 : vector<4x2xi32>
    %c2_i32_94 = arith.constant 2 : i32
    %525 = vector.broadcast %c2_i32_94 : i32 to vector<4x2xi32>
    %526 = arith.muli %521, %525 : vector<4x2xi32>
    %c2_i32_95 = arith.constant 2 : i32
    %527 = vector.broadcast %c2_i32_95 : i32 to vector<4x2xi32>
    %528 = arith.addi %526, %527 : vector<4x2xi32>
    %529 = arith.cmpi slt, %520, %528 : vector<4x2xi32>
    %530 = arith.andi %524, %529 : vector<4x2xi1>
    %531 = arith.extui %530 : vector<4x2xi1> to vector<4x2xi32>
    %532 = arith.sitofp %531 : vector<4x2xi32> to vector<4x2xf32>
    %533 = tpu.iota {dimensions = array<i32: 1>} : vector<2x8xi32>
    %534 = tpu.iota {dimensions = array<i32: 0>} : vector<2x8xi32>
    %c4_i32_96 = arith.constant 4 : i32
    %535 = vector.broadcast %c4_i32_96 : i32 to vector<2x8xi32>
    %536 = arith.muli %534, %535 : vector<2x8xi32>
    %537 = arith.cmpi sge, %533, %536 : vector<2x8xi32>
    %c4_i32_97 = arith.constant 4 : i32
    %538 = vector.broadcast %c4_i32_97 : i32 to vector<2x8xi32>
    %539 = arith.muli %534, %538 : vector<2x8xi32>
    %c4_i32_98 = arith.constant 4 : i32
    %540 = vector.broadcast %c4_i32_98 : i32 to vector<2x8xi32>
    %541 = arith.addi %539, %540 : vector<2x8xi32>
    %542 = arith.cmpi slt, %533, %541 : vector<2x8xi32>
    %543 = arith.andi %537, %542 : vector<2x8xi1>
    %544 = arith.extui %543 : vector<2x8xi1> to vector<2x8xi32>
    %545 = arith.sitofp %544 : vector<2x8xi32> to vector<2x8xf32>
    %cst_99 = arith.constant dense<0.000000e+00> : vector<4x8xf32>
    %546 = tpu.matmul %532, %545, %cst_99 {dimension_numbers = #tpu.dot_dimension_numbers<[1], [0], [0], [1], [0, 0, 1, 1], [], []>} : vector<4x2xf32>, vector<2x8xf32>, vector<4x8xf32> -> vector<4x8xf32>
    %cst_100 = arith.constant dense<0.000000e+00> : vector<4x8xf32>
    %547 = tpu.matmul %368, %519, %cst_100 {dimension_numbers = #tpu.dot_dimension_numbers<[1], [1], [0], [0], [0, 0, 1, 0], [], []>} : vector<4x32xf32>, vector<8x32xf32>, vector<4x8xf32> -> vector<4x8xf32>
    %cst_101 = arith.constant 5.000000e-01 : f32
    %548 = vector.broadcast %cst_101 : f32 to vector<4x8xf32>
    %549 = arith.cmpf ogt, %546, %548 : vector<4x8xf32>
    %cst_102 = arith.constant -1.000000e+30 : f32
    %550 = vector.broadcast %cst_102 : f32 to vector<4x8xf32>
    %551 = arith.select %549, %547, %550 : vector<4x8xi1>, vector<4x8xf32>
    %cst_103 = arith.constant dense<0xFF800000> : vector<4xf32>
    %552 = vector.multi_reduction <maximumf>, %551, %cst_103 [1] : vector<4x8xf32> to vector<4xf32>
    %cst_104 = arith.constant 0xFF800000 : f32
    %553 = vector.broadcast %cst_104 : f32 to vector<4xf32>
    %554 = arith.maximumf %553, %552 : vector<4xf32>
    %555 = vector.shape_cast %554 : vector<4xf32> to vector<4x1xf32>
    %556 = vector.broadcast %555 : vector<4x1xf32> to vector<4x8xf32>
    %557 = arith.subf %551, %556 : vector<4x8xf32>
    %558 = math.exp %557 : vector<4x8xf32>
    %cst_105 = arith.constant dense<0.000000e+00> : vector<4xf32>
    %559 = vector.multi_reduction <add>, %558, %cst_105 [1] : vector<4x8xf32> to vector<4xf32>
    %560 = vector.shape_cast %559 : vector<4xf32> to vector<4x1xf32>
    %561 = vector.broadcast %560 : vector<4x1xf32> to vector<4x8xf32>
    %562 = arith.divf %558, %561 : vector<4x8xf32>
    %cst_106 = arith.constant dense<0.000000e+00> : vector<4x32xf32>
    %563 = tpu.matmul %562, %519, %cst_106 {dimension_numbers = #tpu.dot_dimension_numbers<[1], [0], [0], [1], [0, 0, 1, 1], [], []>} : vector<4x8xf32>, vector<8x32xf32>, vector<4x32xf32> -> vector<4x32xf32>
    %cst_107 = arith.constant dense<0.000000e+00> : vector<4x32xf32>
    %564 = tpu.matmul %563, %9, %cst_107 {dimension_numbers = #tpu.dot_dimension_numbers<[1], [0], [0], [1], [0, 0, 1, 1], [], []>} : vector<4x32xf32>, vector<32x32xf32>, vector<4x32xf32> -> vector<4x32xf32>
    %565 = arith.addf %368, %564 : vector<4x32xf32>
    %cst_108 = arith.constant 0.000000e+00 : f32
    %566 = vector.broadcast %cst_108 : f32 to vector<4x32xf32>
    %567 = arith.cmpf ogt, %565, %566 : vector<4x32xf32>
    %568 = vector.broadcast %5 : vector<1x32xf32> to vector<4x32xf32>
    %569 = arith.mulf %568, %565 : vector<4x32xf32>
    %570 = arith.select %567, %565, %569 : vector<4x32xi1>, vector<4x32xf32>
    %cst_109 = arith.constant dense<0.000000e+00> : vector<4x128xf32>
    %571 = tpu.matmul %570, %10, %cst_109 {dimension_numbers = #tpu.dot_dimension_numbers<[1], [0], [0], [1], [0, 0, 1, 1], [], []>} : vector<4x32xf32>, vector<32x128xf32>, vector<4x128xf32> -> vector<4x128xf32>
    %c0_110 = arith.constant 0 : index
    %c0_111 = arith.constant 0 : index
    %c0_112 = arith.constant 0 : index
    %572 = vector.load %arg5[%c0_110, %c0_111, %c0_112] : memref<1x4x128xf32, #tpu.memory_space<vmem>>, vector<1x4x128xf32>
    %573 = vector.shape_cast %572 : vector<1x4x128xf32> to vector<4x128xf32>
    %574 = vector.shape_cast %571 : vector<4x128xf32> to vector<1x4x128xf32>
    tpu.vector_store %arg5[%c0_110, %c0_111, %c0_112], %574 {strides = array<i32>} : memref<1x4x128xf32, #tpu.memory_space<vmem>>, vector<1x4x128xf32>,
    return
  }
  func.func @transform_0(%arg0: i32) -> (i32, i32, i32) {
    %c0_i32 = arith.constant 0 : i32
    %c0_i32_0 = arith.constant 0 : i32
    %c0_i32_1 = arith.constant 0 : i32
    return %arg0, %c0_i32, %c0_i32_0 : i32, i32, i32
  }
  func.func @transform_1(%arg0: i32) -> (i32, i32, i32) {
    %c0_i32 = arith.constant 0 : i32
    %c0_i32_0 = arith.constant 0 : i32
    %c0_i32_1 = arith.constant 0 : i32
    return %arg0, %c0_i32, %c0_i32_0 : i32, i32, i32
  }
  func.func @transform_2(%arg0: i32) -> (i32, i32) {
    %c0_i32 = arith.constant 0 : i32
    %c0_i32_0 = arith.constant 0 : i32
    %c0_i32_1 = arith.constant 0 : i32
    return %c0_i32, %c0_i32_0 : i32, i32
  }
  func.func @transform_3(%arg0: i32) -> (i32, i32) {
    %c0_i32 = arith.constant 0 : i32
    %c0_i32_0 = arith.constant 0 : i32
    %c0_i32_1 = arith.constant 0 : i32
    return %c0_i32, %c0_i32_0 : i32, i32
  }
  func.func @transform_4(%arg0: i32) -> (i32, i32, i32) {
    %c0_i32 = arith.constant 0 : i32
    %c0_i32_0 = arith.constant 0 : i32
    %c0_i32_1 = arith.constant 0 : i32
    return %arg0, %c0_i32, %c0_i32_0 : i32, i32, i32
  }
}

</mosaic_0001>

<llo_original>
// kernel: tpu_custom_call.1
$region0: #{tpu_custom_call.1}
  #allocation0 [shape = 'u32[]', space=smem, size = 0x4, offset = 0x4, fixed_abs, tag = 'smem constant byte address 0x4 - core index']
  #allocation1 [shape = 'u32[144,128]{1,0:T(1,128)}', space=vmem, size = 0x12000, scoped, tag = 'internal scratch']
  %s0 = inlined_call_operand.vmem [shape: s32[2,6,24], index: 0, kind: input, shape index: {}]
  %s1 = inlined_call_operand.vmem [shape: s32[2,4,8], index: 1, kind: input, shape index: {}]
  %s2 = inlined_call_operand.vmem [shape: f32[198,32], index: 2, kind: input, shape index: {}]
  %s3 = inlined_call_operand.vmem [shape: f32[32,128], index: 3, kind: input, shape index: {}]
  %s4 = inlined_call_operand.hbm [shape: f32[2,4,128], index: 4, kind: output, shape index: {}]
  %s5 = sld [smem:[#allocation0]]
  $region49: #{tpu_custom_call.1} parent=0
    _
  %s7 = ssub.s32 1, %s5
  %s8 = scalar_select 0, %s7, %s5
  $region1: #{tpu_custom_call.1} parent=0
    #allocation2 [shape = 'u8[4096]{0}', space=vmem, size = 0x1000, scoped, tag = 'output window, operand 0']
    #allocation3 [shape = 's32[2]{0}', space=sflag, size = 0x8, scoped, tag = 'scoped memory for tpu_custom_call.1']
    %9 = vsyncpa [#allocation3], 0
    %s10 = scalar_lea.sflag [#allocation3], 1
    %11 = vsyncpa %s10, 0
    loop: start=0, step=1, limit=4
    $region2: #{tpu_custom_call.1} parent=1 // loop_pre_header
      _
    $region3: #{tpu_custom_call.1} parent=1 // loop_header
      %s13 = sphi 0, %s17
      %p14 = scmp.ge.s32.totalorder %s13, 4
      %s23 = sphi 0, %s25
      %s26 = sphi 0, %s23
      %s27 = sphi 0, %s26
      %s43 = sphi 0, %s27
      %s49 = sphi 0, %s51
      %s52 = sphi 0, %s49
      %s53 = sphi 0, %s52
      %s69 = sphi 0, %s53
      %s73 = sphi 0, %s73
      %s75 = sphi 0, %s73
      %s76 = sphi 0, %s75
      %s90 = sphi 0, %s76
      %s94 = sphi 0, %s94
      %s96 = sphi 0, %s94
      %s97 = sphi 0, %s96
      %s111 = sphi 0, %s97
      %s117 = sphi 0, %s119
      %s120 = sphi 0, %s117
      %s121 = sphi 0, %s120
      %s137 = sphi 0, %s121
    $region4: #{tpu_custom_call.1} parent=1 // loop_header_branch
      %16 = sbr.rel (%p14) target = $region8
    $region5: #{tpu_custom_call.1} parent=1 // loop_body
      %s18 = ssub.s32 %s13, 1
      %s19 = ssub.s32 %s13, 2
      %s20 = sadd.s32 %s13, 1
      %s21 = ssub.s32 %s13, %s20
      %p22 = scmp.eq.s32.totalorder %s21, 0
      %s24 = sadd.s32 %s23, 1
      %s25 = scalar_select %p22, %s23, %s24
      %p28 = pneg %p22
      %p29 = scmp.eq.s32.totalorder %s13, 1
      %p30 = por %p28, %p29
      %p31 = scmp.ne.s32.totalorder %s23, %s26
      %p32 = scmp.eq.s32.totalorder %s13, 0
      %p33 = por %p31, %p32
      %p34 = scmp.ne.s32.totalorder %s23, %s26
      %p35 = scmp.eq.s32.totalorder %s18, 1
      %p36 = por %p34, %p35
      %p37 = scmp.ne.s32.totalorder %s26, %s27
      %p38 = scmp.eq.s32.totalorder %s18, 0
      %p39 = por %p37, %p38
      %p40 = scmp.ne.s32.totalorder %s26, %s27
      %p41 = scmp.eq.s32.totalorder %s19, 1
      %p42 = por %p40, %p41
      %p44 = scmp.ne.s32.totalorder %s27, %s43
      %p45 = scmp.eq.s32.totalorder %s19, 0
      %p46 = por %p44, %p45
      %s47 = ssub.s32 %s13, %s20
      %p48 = scmp.eq.s32.totalorder %s47, 0
      %s50 = sadd.s32 %s49, 1
      %s51 = scalar_select %p48, %s49, %s50
      %p54 = pneg %p48
      %p55 = scmp.eq.s32.totalorder %s13, 1
      %p56 = por %p54, %p55
      %p57 = scmp.ne.s32.totalorder %s49, %s52
      %p58 = scmp.eq.s32.totalorder %s13, 0
      %p59 = por %p57, %p58
      %p60 = scmp.ne.s32.totalorder %s49, %s52
      %p61 = scmp.eq.s32.totalorder %s18, 1
      %p62 = por %p60, %p61
      %p63 = scmp.ne.s32.totalorder %s52, %s53
      %p64 = scmp.eq.s32.totalorder %s18, 0
      %p65 = por %p63, %p64
      %p66 = scmp.ne.s32.totalorder %s52, %s53
      %p67 = scmp.eq.s32.totalorder %s19, 1
      %p68 = por %p66, %p67
      %p70 = scmp.ne.s32.totalorder %s53, %s69
      %p71 = scmp.eq.s32.totalorder %s19, 0
      %p72 = por %p70, %p71
      %s74 = sadd.s32 %s73, 1
      %p77 = scmp.eq.s32.totalorder %s13, 1
      %p78 = scmp.ne.s32.totalorder %s73, %s75
      %p79 = scmp.eq.s32.totalorder %s13, 0
      %p80 = por %p78, %p79
      %p81 = scmp.ne.s32.totalorder %s73, %s75
      %p82 = scmp.eq.s32.totalorder %s18, 1
      %p83 = por %p81, %p82
      %p84 = scmp.ne.s32.totalorder %s75, %s76
      %p85 = scmp.eq.s32.totalorder %s18, 0
      %p86 = por %p84, %p85
      %p87 = scmp.ne.s32.totalorder %s75, %s76
      %p88 = scmp.eq.s32.totalorder %s19, 1
      %p89 = por %p87, %p88
      %p91 = scmp.ne.s32.totalorder %s76, %s90
      %p92 = scmp.eq.s32.totalorder %s19, 0
      %p93 = por %p91, %p92
      %s95 = sadd.s32 %s94, 1
      %p98 = scmp.eq.s32.totalorder %s13, 1
      %p99 = scmp.ne.s32.totalorder %s94, %s96
      %p100 = scmp.eq.s32.totalorder %s13, 0
      %p101 = por %p99, %p100
      %p102 = scmp.ne.s32.totalorder %s94, %s96
      %p103 = scmp.eq.s32.totalorder %s18, 1
      %p104 = por %p102, %p103
      %p105 = scmp.ne.s32.totalorder %s96, %s97
      %p106 = scmp.eq.s32.totalorder %s18, 0
      %p107 = por %p105, %p106
      %p108 = scmp.ne.s32.totalorder %s96, %s97
      %p109 = scmp.eq.s32.totalorder %s19, 1
      %p110 = por %p108, %p109
      %p112 = scmp.ne.s32.totalorder %s97, %s111
      %p113 = scmp.eq.s32.totalorder %s19, 0
      %p114 = por %p112, %p113
      %s115 = ssub.s32 %s13, %s20
      %p116 = scmp.eq.s32.totalorder %s115, 0
      %s118 = sadd.s32 %s117, 1
      %s119 = scalar_select %p116, %s117, %s118
      %p122 = pneg %p116
      %p123 = scmp.eq.s32.totalorder %s13, 1
      %p124 = por %p122, %p123
      %p125 = scmp.ne.s32.totalorder %s117, %s120
      %p126 = scmp.eq.s32.totalorder %s13, 0
      %p127 = por %p125, %p126
      %p128 = scmp.ne.s32.totalorder %s117, %s120
      %p129 = scmp.eq.s32.totalorder %s18, 1
      %p130 = por %p128, %p129
      %p131 = scmp.ne.s32.totalorder %s120, %s121
      %p132 = scmp.eq.s32.totalorder %s18, 0
      %p133 = por %p131, %p132
      %p134 = scmp.ne.s32.totalorder %s120, %s121
      %p135 = scmp.eq.s32.totalorder %s19, 1
      %p136 = por %p134, %p135
      %p138 = scmp.ne.s32.totalorder %s121, %s137
      %p139 = scmp.eq.s32.totalorder %s19, 0
      %p140 = por %p138, %p139
      %p141 = scmp.le.s32.totalorder 1, %s13
      %p142 = scmp.lt.s32.totalorder %s13, 3
      %p143 = pnand %p141, %p142
      %p144 = pneg %p143
      // Predicated region
      $region9: #{tpu_custom_call.1} parent=5 // pred_check
        _
      $region10: #{tpu_custom_call.1} parent=5 // pred_check_branch
        %146 = sbr.rel (%p143) target = $region12
      $region11: #{tpu_custom_call.1} parent=5 // pred_region
        %s147 = ssub.s32 %s13, 1
        // Predicated region
        $region13: #{tpu_custom_call.1} parent=11 // pred_check
          %p148 = pneg %p86
        $region14: #{tpu_custom_call.1} parent=11 // pred_check_branch
          %150 = sbr.rel (%p148) target = $region16
        $region15: #{tpu_custom_call.1} parent=11 // pred_region
          _
        $region16: #{tpu_custom_call.1} parent=11 // pred_fallthru
          _
        // Predicated region
        $region17: #{tpu_custom_call.1} parent=11 // pred_check
          %p151 = pneg %p107
        $region18: #{tpu_custom_call.1} parent=11 // pred_check_branch
          %153 = sbr.rel (%p151) target = $region20
        $region19: #{tpu_custom_call.1} parent=11 // pred_region
          _
        $region20: #{tpu_custom_call.1} parent=11 // pred_fallthru
          _
      $region12: #{tpu_custom_call.1} parent=5 // pred_fallthru
        _
      %p154 = scmp.lt.s32.totalorder %s13, 2
      // Predicated region
      $region21: #{tpu_custom_call.1} parent=5 // pred_check
        %p155 = pneg %p154
      $region22: #{tpu_custom_call.1} parent=5 // pred_check_branch
        %157 = sbr.rel (%p155) target = $region24
      $region23: #{tpu_custom_call.1} parent=5 // pred_region
        // Predicated region
        $region25: #{tpu_custom_call.1} parent=23 // pred_check
          %p158 = pneg %p33
        $region26: #{tpu_custom_call.1} parent=23 // pred_check_branch
          %160 = sbr.rel (%p158) target = $region28
        $region27: #{tpu_custom_call.1} parent=23 // pred_region
          %p161 = scmp.lt.s32.totalorder %s13, 1
          %s162 = scalar_select %p161, %s13, 1
          %s163 = smul.addr %s162, 8
          %s164 = scalar_lea.vmem %s0, %s163
        $region28: #{tpu_custom_call.1} parent=23 // pred_fallthru
          _
        // Predicated region
        $region29: #{tpu_custom_call.1} parent=23 // pred_check
          %p165 = pneg %p59
        $region30: #{tpu_custom_call.1} parent=23 // pred_check_branch
          %167 = sbr.rel (%p165) target = $region32
        $region31: #{tpu_custom_call.1} parent=23 // pred_region
          %p168 = scmp.lt.s32.totalorder %s13, 1
          %s169 = scalar_select %p168, %s13, 1
          %s170 = smul.addr %s169, 4
          %s171 = scalar_lea.vmem %s1, %s170
        $region32: #{tpu_custom_call.1} parent=23 // pred_fallthru
          _
      $region24: #{tpu_custom_call.1} parent=5 // pred_fallthru
        _
      %p172 = scmp.le.s32.totalorder 1, %s13
      %p173 = scmp.lt.s32.totalorder %s13, 3
      %p174 = pnand %p172, %p173
      %p175 = pneg %p174
      // Predicated region
      $region33: #{tpu_custom_call.1} parent=5 // pred_check
        _
      $region34: #{tpu_custom_call.1} parent=5 // pred_check_branch
        %177 = sbr.rel (%p174) target = $region36
      $region35: #{tpu_custom_call.1} parent=5 // pred_region
        %s178 = ssub.s32 %s13, 1
        %p179 = scmp.lt.s32.totalorder %s18, 1
        %s180 = scalar_select %p179, %s18, 1
        %s181 = smul.addr %s180, 8
        %s182 = scalar_lea.vmem %s0, %s181
        %p183 = pneg %p39
        %p184 = pneg %p36
        %p185 = scmp.lt.s32.totalorder %s18, 1
        %s186 = scalar_select %p185, %s18, 1
        %s187 = smul.addr %s186, 4
        %s188 = scalar_lea.vmem %s1, %s187
        %p189 = pneg %p65
        %p190 = pneg %p62
        %p191 = pneg %p86
        %p192 = pneg %p83
        %p193 = pneg %p107
        %p194 = pneg %p104
        %p195 = pneg %p133
        %p196 = pneg %p130
        %s197 = sand.u32 %s120, 1
        %s198 = scalar_lea.sflag [#allocation3], %s197
        %s199 = sand.u32 %s120, 1
        %s200 = smul.addr %s199, 4
        %s201 = scalar_lea.vmem [#allocation2], %s200
        %p202 = scmp.lt.s32.totalorder %s18, 1
        %s203 = scalar_select %p202, %s18, 1
        %s204 = smul.addr %s203, 8
        %s205 = scalar_lea.vmem %s0, %s204
        %p206 = scmp.lt.s32.totalorder %s18, 1
        %s207 = scalar_select %p206, %s18, 1
        %s208 = smul.addr %s207, 4
        %s209 = scalar_lea.vmem %s1, %s208
        %v210 = vld [vmem:[%s2] sm:$0xff]
        %v211 = vld [vmem:[%s2 + $0x8] sm:$0xff]
        %v212 = vld [vmem:[%s2 + $0x10] sm:$0xff]
        %v213 = vld [vmem:[%s2 + $0x18] sm:$0xf]
        %v214 = vld [vmem:[%s2 + $0x1c] sm:$0xff]
        %v215 = vld [vmem:[%s2 + $0x24] sm:$0xff]
        %v216 = vld [vmem:[%s2 + $0x2c] sm:$0xff]
        %v217 = vld [vmem:[%s2 + $0x34] sm:$0xff]
        %v218 = vld [vmem:[%s2 + $0x3c] sm:$0xff]
        %v219 = vld [vmem:[%s2 + $0x44] sm:$0x1]
        %v220 = vld [vmem:[%s2 + $0x45] sm:$0x1]
        %v221 = vld [vmem:[%s2 + $0x46] sm:$0xff]
        %v222 = vld [vmem:[%s2 + $0x4e] sm:$0xff]
        %v223 = vld [vmem:[%s2 + $0x56] sm:$0xff]
        %v224 = vld [vmem:[%s2 + $0x5e] sm:$0xff]
        %v225 = vld [vmem:[%s2 + $0x66] sm:$0xff]
        %v226 = vld [vmem:[%s2 + $0x6e] sm:$0xff]
        %v227 = vld [vmem:[%s2 + $0x76] sm:$0xff]
        %v228 = vld [vmem:[%s2 + $0x7e] sm:$0xff]
        %v229 = vld [vmem:[%s2 + $0x86] sm:$0xff]
        %v230 = vld [vmem:[%s2 + $0x8e] sm:$0xff]
        %v231 = vld [vmem:[%s2 + $0x96] sm:$0xff]
        %v232 = vld [vmem:[%s2 + $0x9e] sm:$0xff]
        %v233 = vld [vmem:[%s2 + $0xa6] sm:$0xff]
        %v234 = vld [vmem:[%s2 + $0xae] sm:$0xff]
        %v235 = vld [vmem:[%s2 + $0xb6] sm:$0xff]
        %v236 = vld [vmem:[%s2 + $0xbe] sm:$0xff]
        %v237 = vld [vmem:[%s3] sm:$0xff]
        %v238 = vld [vmem:[%s3 + $0x8] sm:$0xff]
        %v239 = vld [vmem:[%s3 + $0x10] sm:$0xff]
        %v240 = vld [vmem:[%s3 + $0x18] sm:$0xff]
        %v241 = vld [vmem:[%s205] sm:$0x3f]
        %v242 = vld [vmem:[%s209] sm:$0xf]
        %v243 = vlaneseq
        %v244 = vand.u32 %v243, 127
        %245 = vset.pattern.permute.xlu0 0
        %246 = vperm.xlu0 %245, %v241
        %v247 = vpop.permute.xlu0 %246
        %vm248 = vcmp.eq.s32.totalorder %v247, %v244
        %v249 = vsel %vm248, 1, 0
        %v250 = vcvt.s32.f32 %v249
        %v251 = vlaneseq
        %v252 = vshrl.u32 %v251, 7
        %v253 = vsub.s32 0, %v252
        %v254 = vrot.slane %v214, %v253
        %v255 = vmul.f32 %v210, %v254
        %v256 = vmul.f32 %v211, %v254
        %v257 = vmul.f32 %v212, %v254
        %v258 = vmul.f32 %v213, %v254
        %259 = vset.pattern.permute.xlu0 1
        %260 = vperm.xlu0 %259, %v241
        %v261 = vpop.permute.xlu0 %260
        %vm262 = vcmp.eq.s32.totalorder %v261, %v244
        %v263 = vsel %vm262, 1, 0
        %v264 = vcvt.s32.f32 %v263
        %v265 = vlaneseq
        %v266 = vshrl.u32 %v265, 7
        %v267 = vsub.s32 1, %v266
        %v268 = vrot.slane %v214, %v267
        %v269 = vmul.f32 %v210, %v268
        %v270 = vmul.f32 %v211, %v268
        %v271 = vmul.f32 %v212, %v268
        %v272 = vmul.f32 %v213, %v268
        %vm273 = vcmask 228352
        %v275 = vsel %vm273, %v264, 0
        %vm277 = vcmask 1043456
        %v279 = vsel %vm277, %v272, 0
        %281 = vmatprep.subr.mxu0 0.0
        %282 = vmatpush1.msra.mxu0 %v269
        %283 = vmatprep.subr.mxu0 0.0
        %284 = vmatpush1.msra.mxu0 %v270
        %285 = vmatprep.subr.mxu0 0.0
        %286 = vmatpush1.msra.mxu0 %v271
        %287 = vmatprep.subr.mxu0 0.0
        %288 = vmatpush1.msra.mxu0 %v279
        %289 = vmatprep.subr.mxu0 0.0
        %290 = vmatpush1.msra.mxu0 0.0
        %291 = vmatprep.subr.mxu0 0.0
        %292 = vmatpush1.msra.mxu0 0.0
        %293 = vmatprep.subr.mxu0 0.0
        %294 = vmatpush1.msra.mxu0 0.0
        %295 = vmatprep.subr.mxu0 0.0
        %296 = vmatpush1.msra.mxu0 0.0
        %297 = vmatprep.subr.mxu0 0.0
        %298 = vmatpush1.msra.mxu0 0.0
        %299 = vmatprep.subr.mxu0 0.0
        %300 = vmatpush1.msra.mxu0 0.0
        %301 = vmatprep.subr.mxu0 0.0
        %302 = vmatpush1.msra.mxu0 0.0
        %303 = vmatprep.subr.mxu0 0.0
        %304 = vmatpush1.msra.mxu0 0.0
        %305 = vmatprep.subr.mxu0 0.0
        %306 = vmatpush1.msra.mxu0 0.0
        %307 = vmatprep.subr.mxu0 0.0
        %308 = vmatpush1.msra.mxu0 0.0
        %309 = vmatprep.subr.mxu0 0.0
        %310 = vmatpush1.msra.mxu0 0.0
        %311 = vmatprep.subr.mxu0 0.0
        %312 = vmatpush1.msra.mxu0 0.0
        %313 = vmatprep.subr.mxu0 0.0
        %314 = vmatpush1.msra.mxu0 0.0
        %315 = vmatprep.subr.mxu0 0.0
        %316 = vmatpush1.msra.mxu0 0.0
        %317 = vmatprep.subr.mxu0 0.0
        %318 = vmatpush1.msra.mxu0 0.0
        %319 = vmatprep.subr.mxu0 0.0
        %320 = vmatpush1.msra.mxu0 0.0
        %321 = vmatprep.subr.mxu0 0.0
        %322 = vmatpush1.msra.mxu0 0.0
        %323 = vmatprep.subr.mxu0 0.0
        %324 = vmatpush1.msra.mxu0 0.0
        %325 = vmatprep.subr.mxu0 0.0
        %326 = vmatpush1.msra.mxu0 0.0
        %327 = vmatprep.subr.mxu0 0.0
        %328 = vmatpush1.msra.mxu0 0.0
        %329 = vmatprep.subr.mxu0 0.0
        %330 = vmatpush1.msra.mxu0 0.0
        %331 = vmatprep.subr.mxu0 0.0
        %332 = vmatpush1.msra.mxu0 0.0
        %333 = vmatprep.subr.mxu0 0.0
        %334 = vmatpush1.msra.mxu0 0.0
        %335 = vmatprep.subr.mxu0 0.0
        %336 = vmatpush1.msra.mxu0 0.0
        %337 = vmatprep.subr.mxu0 0.0
        %338 = vmatpush1.msra.mxu0 0.0
        %339 = vmatprep.subr.mxu0 0.0
        %340 = vmatpush1.msra.mxu0 0.0
        %341 = vmatprep.subr.mxu0 0.0
        %342 = vmatpush1.msra.mxu0 0.0
        %343 = vmatprep.subr.mxu0 0.0
        %344 = vmatpush1.msra.mxu0 0.0
        %345 = vmatprep.mubr.f32.mxu0 0.0
        %346 = vmatmul.mubr.f32.gmra.mrb[0].mxu0 %v275
        %v347 = vpop.f32.mrb[0].mxu0
        %v348 = vadd.f32 0.0, %v347
        %v349 = vpop.f32.mrb[0].mxu0
        %350 = vdwg.mxu0
        %v352 = vsel %vm273, %v250, 0
        %v355 = vsel %vm277, %v258, 0
        %357 = vmatprep.subr.mxu0 0.0
        %358 = vmatpush1.msra.mxu0 %v255
        %359 = vmatprep.subr.mxu0 0.0
        %360 = vmatpush1.msra.mxu0 %v256
        %361 = vmatprep.subr.mxu0 0.0
        %362 = vmatpush1.msra.mxu0 %v257
        %363 = vmatprep.subr.mxu0 0.0
        %364 = vmatpush1.msra.mxu0 %v355
        %365 = vmatprep.subr.mxu0 0.0
        %366 = vmatpush1.msra.mxu0 0.0
        %367 = vmatprep.subr.mxu0 0.0
        %368 = vmatpush1.msra.mxu0 0.0
        %369 = vmatprep.subr.mxu0 0.0
        %370 = vmatpush1.msra.mxu0 0.0
        %371 = vmatprep.subr.mxu0 0.0
        %372 = vmatpush1.msra.mxu0 0.0
        %373 = vmatprep.subr.mxu0 0.0
        %374 = vmatpush1.msra.mxu0 0.0
        %375 = vmatprep.subr.mxu0 0.0
        %376 = vmatpush1.msra.mxu0 0.0
        %377 = vmatprep.subr.mxu0 0.0
        %378 = vmatpush1.msra.mxu0 0.0
        %379 = vmatprep.subr.mxu0 0.0
        %380 = vmatpush1.msra.mxu0 0.0
        %381 = vmatprep.subr.mxu0 0.0
        %382 = vmatpush1.msra.mxu0 0.0
        %383 = vmatprep.subr.mxu0 0.0
        %384 = vmatpush1.msra.mxu0 0.0
        %385 = vmatprep.subr.mxu0 0.0
        %386 = vmatpush1.msra.mxu0 0.0
        %387 = vmatprep.subr.mxu0 0.0
        %388 = vmatpush1.msra.mxu0 0.0
        %389 = vmatprep.subr.mxu0 0.0
        %390 = vmatpush1.msra.mxu0 0.0
        %391 = vmatprep.subr.mxu0 0.0
        %392 = vmatpush1.msra.mxu0 0.0
        %393 = vmatprep.subr.mxu0 0.0
        %394 = vmatpush1.msra.mxu0 0.0
        %395 = vmatprep.subr.mxu0 0.0
        %396 = vmatpush1.msra.mxu0 0.0
        %397 = vmatprep.subr.mxu0 0.0
        %398 = vmatpush1.msra.mxu0 0.0
        %399 = vmatprep.subr.mxu0 0.0
        %400 = vmatpush1.msra.mxu0 0.0
        %401 = vmatprep.subr.mxu0 0.0
        %402 = vmatpush1.msra.mxu0 0.0
        %403 = vmatprep.subr.mxu0 0.0
        %404 = vmatpush1.msra.mxu0 0.0
        %405 = vmatprep.subr.mxu0 0.0
        %406 = vmatpush1.msra.mxu0 0.0
        %407 = vmatprep.subr.mxu0 0.0
        %408 = vmatpush1.msra.mxu0 0.0
        %409 = vmatprep.subr.mxu0 0.0
        %410 = vmatpush1.msra.mxu0 0.0
        %411 = vmatprep.subr.mxu0 0.0
        %412 = vmatpush1.msra.mxu0 0.0
        %413 = vmatprep.subr.mxu0 0.0
        %414 = vmatpush1.msra.mxu0 0.0
        %415 = vmatprep.subr.mxu0 0.0
        %416 = vmatpush1.msra.mxu0 0.0
        %417 = vmatprep.subr.mxu0 0.0
        %418 = vmatpush1.msra.mxu0 0.0
        %419 = vmatprep.subr.mxu0 0.0
        %420 = vmatpush1.msra.mxu0 0.0
        %421 = vmatprep.mubr.f32.mxu0 0.0
        %422 = vmatmul.mubr.f32.gmra.mrb[0].mxu0 %v352
        %v423 = vpop.f32.mrb[0].mxu0
        %v424 = vadd.f32 %v348, %v423
        %v425 = vpop.f32.mrb[0].mxu0
        %426 = vdwg.mxu0
        %427 = vset.pattern.permute.xlu0 2
        %428 = vperm.xlu0 %427, %v241
        %v429 = vpop.permute.xlu0 %428
        %vm430 = vcmp.eq.s32.totalorder %v429, %v244
        %v431 = vsel %vm430, 1, 0
        %v432 = vcvt.s32.f32 %v431
        %v433 = vlaneseq
        %v434 = vshrl.u32 %v433, 7
        %v435 = vsub.s32 2, %v434
        %v436 = vrot.slane %v214, %v435
        %v437 = vmul.f32 %v210, %v436
        %v438 = vmul.f32 %v211, %v436
        %v439 = vmul.f32 %v212, %v436
        %v440 = vmul.f32 %v213, %v436
        %v442 = vsel %vm273, %v432, 0
        %v445 = vsel %vm277, %v440, 0
        %447 = vmatprep.subr.mxu0 0.0
        %448 = vmatpush1.msra.mxu0 %v437
        %449 = vmatprep.subr.mxu0 0.0
        %450 = vmatpush1.msra.mxu0 %v438
        %451 = vmatprep.subr.mxu0 0.0
        %452 = vmatpush1.msra.mxu0 %v439
        %453 = vmatprep.subr.mxu0 0.0
        %454 = vmatpush1.msra.mxu0 %v445
        %455 = vmatprep.subr.mxu0 0.0
        %456 = vmatpush1.msra.mxu0 0.0
        %457 = vmatprep.subr.mxu0 0.0
        %458 = vmatpush1.msra.mxu0 0.0
        %459 = vmatprep.subr.mxu0 0.0
        %460 = vmatpush1.msra.mxu0 0.0
        %461 = vmatprep.subr.mxu0 0.0
        %462 = vmatpush1.msra.mxu0 0.0
        %463 = vmatprep.subr.mxu0 0.0
        %464 = vmatpush1.msra.mxu0 0.0
        %465 = vmatprep.subr.mxu0 0.0
        %466 = vmatpush1.msra.mxu0 0.0
        %467 = vmatprep.subr.mxu0 0.0
        %468 = vmatpush1.msra.mxu0 0.0
        %469 = vmatprep.subr.mxu0 0.0
        %470 = vmatpush1.msra.mxu0 0.0
        %471 = vmatprep.subr.mxu0 0.0
        %472 = vmatpush1.msra.mxu0 0.0
        %473 = vmatprep.subr.mxu0 0.0
        %474 = vmatpush1.msra.mxu0 0.0
        %475 = vmatprep.subr.mxu0 0.0
        %476 = vmatpush1.msra.mxu0 0.0
        %477 = vmatprep.subr.mxu0 0.0
        %478 = vmatpush1.msra.mxu0 0.0
        %479 = vmatprep.subr.mxu0 0.0
        %480 = vmatpush1.msra.mxu0 0.0
        %481 = vmatprep.subr.mxu0 0.0
        %482 = vmatpush1.msra.mxu0 0.0
        %483 = vmatprep.subr.mxu0 0.0
        %484 = vmatpush1.msra.mxu0 0.0
        %485 = vmatprep.subr.mxu0 0.0
        %486 = vmatpush1.msra.mxu0 0.0
        %487 = vmatprep.subr.mxu0 0.0
        %488 = vmatpush1.msra.mxu0 0.0
        %489 = vmatprep.subr.mxu0 0.0
        %490 = vmatpush1.msra.mxu0 0.0
        %491 = vmatprep.subr.mxu0 0.0
        %492 = vmatpush1.msra.mxu0 0.0
        %493 = vmatprep.subr.mxu0 0.0
        %494 = vmatpush1.msra.mxu0 0.0
        %495 = vmatprep.subr.mxu0 0.0
        %496 = vmatpush1.msra.mxu0 0.0
        %497 = vmatprep.subr.mxu0 0.0
        %498 = vmatpush1.msra.mxu0 0.0
        %499 = vmatprep.subr.mxu0 0.0
        %500 = vmatpush1.msra.mxu0 0.0
        %501 = vmatprep.subr.mxu0 0.0
        %502 = vmatpush1.msra.mxu0 0.0
        %503 = vmatprep.subr.mxu0 0.0
        %504 = vmatpush1.msra.mxu0 0.0
        %505 = vmatprep.subr.mxu0 0.0
        %506 = vmatpush1.msra.mxu0 0.0
        %507 = vmatprep.subr.mxu0 0.0
        %508 = vmatpush1.msra.mxu0 0.0
        %509 = vmatprep.subr.mxu0 0.0
        %510 = vmatpush1.msra.mxu0 0.0
        %511 = vmatprep.mubr.f32.mxu0 0.0
        %512 = vmatmul.mubr.f32.gmra.mrb[0].mxu0 %v442
        %v513 = vpop.f32.mrb[0].mxu0
        %v514 = vadd.f32 0.0, %v513
        %v515 = vpop.f32.mrb[0].mxu0
        %516 = vdwg.mxu0
        %v517 = vadd.f32 %v424, %v514
        %518 = vset.pattern.permute.xlu0 3
        %519 = vperm.xlu0 %518, %v241
        %v520 = vpop.permute.xlu0 %519
        %vm521 = vcmp.eq.s32.totalorder %v520, %v244
        %v522 = vsel %vm521, 1, 0
        %v523 = vcvt.s32.f32 %v522
        %v524 = vlaneseq
        %v525 = vshrl.u32 %v524, 7
        %v526 = vsub.s32 3, %v525
        %v527 = vrot.slane %v214, %v526
        %v528 = vmul.f32 %v210, %v527
        %v529 = vmul.f32 %v211, %v527
        %v530 = vmul.f32 %v212, %v527
        %v531 = vmul.f32 %v213, %v527
        %v533 = vsel %vm273, %v523, 0
        %v536 = vsel %vm277, %v531, 0
        %538 = vmatprep.subr.mxu0 0.0
        %539 = vmatpush1.msra.mxu0 %v528
        %540 = vmatprep.subr.mxu0 0.0
        %541 = vmatpush1.msra.mxu0 %v529
        %542 = vmatprep.subr.mxu0 0.0
        %543 = vmatpush1.msra.mxu0 %v530
        %544 = vmatprep.subr.mxu0 0.0
        %545 = vmatpush1.msra.mxu0 %v536
        %546 = vmatprep.subr.mxu0 0.0
        %547 = vmatpush1.msra.mxu0 0.0
        %548 = vmatprep.subr.mxu0 0.0
        %549 = vmatpush1.msra.mxu0 0.0
        %550 = vmatprep.subr.mxu0 0.0
        %551 = vmatpush1.msra.mxu0 0.0
        %552 = vmatprep.subr.mxu0 0.0
        %553 = vmatpush1.msra.mxu0 0.0
        %554 = vmatprep.subr.mxu0 0.0
        %555 = vmatpush1.msra.mxu0 0.0
        %556 = vmatprep.subr.mxu0 0.0
        %557 = vmatpush1.msra.mxu0 0.0
        %558 = vmatprep.subr.mxu0 0.0
        %559 = vmatpush1.msra.mxu0 0.0
        %560 = vmatprep.subr.mxu0 0.0
        %561 = vmatpush1.msra.mxu0 0.0
        %562 = vmatprep.subr.mxu0 0.0
        %563 = vmatpush1.msra.mxu0 0.0
        %564 = vmatprep.subr.mxu0 0.0
        %565 = vmatpush1.msra.mxu0 0.0
        %566 = vmatprep.subr.mxu0 0.0
        %567 = vmatpush1.msra.mxu0 0.0
        %568 = vmatprep.subr.mxu0 0.0
        %569 = vmatpush1.msra.mxu0 0.0
        %570 = vmatprep.subr.mxu0 0.0
        %571 = vmatpush1.msra.mxu0 0.0
        %572 = vmatprep.subr.mxu0 0.0
        %573 = vmatpush1.msra.mxu0 0.0
        %574 = vmatprep.subr.mxu0 0.0
        %575 = vmatpush1.msra.mxu0 0.0
        %576 = vmatprep.subr.mxu0 0.0
        %577 = vmatpush1.msra.mxu0 0.0
        %578 = vmatprep.subr.mxu0 0.0
        %579 = vmatpush1.msra.mxu0 0.0
        %580 = vmatprep.subr.mxu0 0.0
        %581 = vmatpush1.msra.mxu0 0.0
        %582 = vmatprep.subr.mxu0 0.0
        %583 = vmatpush1.msra.mxu0 0.0
        %584 = vmatprep.subr.mxu0 0.0
        %585 = vmatpush1.msra.mxu0 0.0
        %586 = vmatprep.subr.mxu0 0.0
        %587 = vmatpush1.msra.mxu0 0.0
        %588 = vmatprep.subr.mxu0 0.0
        %589 = vmatpush1.msra.mxu0 0.0
        %590 = vmatprep.subr.mxu0 0.0
        %591 = vmatpush1.msra.mxu0 0.0
        %592 = vmatprep.subr.mxu0 0.0
        %593 = vmatpush1.msra.mxu0 0.0
        %594 = vmatprep.subr.mxu0 0.0
        %595 = vmatpush1.msra.mxu0 0.0
        %596 = vmatprep.subr.mxu0 0.0
        %597 = vmatpush1.msra.mxu0 0.0
        %598 = vmatprep.subr.mxu0 0.0
        %599 = vmatpush1.msra.mxu0 0.0
        %600 = vmatprep.subr.mxu0 0.0
        %601 = vmatpush1.msra.mxu0 0.0
        %602 = vmatprep.mubr.f32.mxu0 0.0
        %603 = vmatmul.mubr.f32.gmra.mrb[0].mxu0 %v533
        %v604 = vpop.f32.mrb[0].mxu0
        %v605 = vadd.f32 0.0, %v604
        %v606 = vpop.f32.mrb[0].mxu0
        %607 = vdwg.mxu0
        %v608 = vadd.f32 %v517, %v605
        %609 = vset.pattern.permute.xlu0 4
        %610 = vperm.xlu0 %609, %v241
        %v611 = vpop.permute.xlu0 %610
        %vm612 = vcmp.eq.s32.totalorder %v611, %v244
        %v613 = vsel %vm612, 1, 0
        %v614 = vcvt.s32.f32 %v613
        %v615 = vlaneseq
        %v616 = vshrl.u32 %v615, 7
        %v617 = vsub.s32 4, %v616
        %v618 = vrot.slane %v214, %v617
        %v619 = vmul.f32 %v210, %v618
        %v620 = vmul.f32 %v211, %v618
        %v621 = vmul.f32 %v212, %v618
        %v622 = vmul.f32 %v213, %v618
        %v624 = vsel %vm273, %v614, 0
        %v627 = vsel %vm277, %v622, 0
        %629 = vmatprep.subr.mxu0 0.0
        %630 = vmatpush1.msra.mxu0 %v619
        %631 = vmatprep.subr.mxu0 0.0
        %632 = vmatpush1.msra.mxu0 %v620
        %633 = vmatprep.subr.mxu0 0.0
        %634 = vmatpush1.msra.mxu0 %v621
        %635 = vmatprep.subr.mxu0 0.0
        %636 = vmatpush1.msra.mxu0 %v627
        %637 = vmatprep.subr.mxu0 0.0
        %638 = vmatpush1.msra.mxu0 0.0
        %639 = vmatprep.subr.mxu0 0.0
        %640 = vmatpush1.msra.mxu0 0.0
        %641 = vmatprep.subr.mxu0 0.0
        %642 = vmatpush1.msra.mxu0 0.0
        %643 = vmatprep.subr.mxu0 0.0
        %644 = vmatpush1.msra.mxu0 0.0
        %645 = vmatprep.subr.mxu0 0.0
        %646 = vmatpush1.msra.mxu0 0.0
        %647 = vmatprep.subr.mxu0 0.0
        %648 = vmatpush1.msra.mxu0 0.0
        %649 = vmatprep.subr.mxu0 0.0
        %650 = vmatpush1.msra.mxu0 0.0
        %651 = vmatprep.subr.mxu0 0.0
        %652 = vmatpush1.msra.mxu0 0.0
        %653 = vmatprep.subr.mxu0 0.0
        %654 = vmatpush1.msra.mxu0 0.0
        %655 = vmatprep.subr.mxu0 0.0
        %656 = vmatpush1.msra.mxu0 0.0
        %657 = vmatprep.subr.mxu0 0.0
        %658 = vmatpush1.msra.mxu0 0.0
        %659 = vmatprep.subr.mxu0 0.0
        %660 = vmatpush1.msra.mxu0 0.0
        %661 = vmatprep.subr.mxu0 0.0
        %662 = vmatpush1.msra.mxu0 0.0
        %663 = vmatprep.subr.mxu0 0.0
        %664 = vmatpush1.msra.mxu0 0.0
        %665 = vmatprep.subr.mxu0 0.0
        %666 = vmatpush1.msra.mxu0 0.0
        %667 = vmatprep.subr.mxu0 0.0
        %668 = vmatpush1.msra.mxu0 0.0
        %669 = vmatprep.subr.mxu0 0.0
        %670 = vmatpush1.msra.mxu0 0.0
        %671 = vmatprep.subr.mxu0 0.0
        %672 = vmatpush1.msra.mxu0 0.0
        %673 = vmatprep.subr.mxu0 0.0
        %674 = vmatpush1.msra.mxu0 0.0
        %675 = vmatprep.subr.mxu0 0.0
        %676 = vmatpush1.msra.mxu0 0.0
        %677 = vmatprep.subr.mxu0 0.0
        %678 = vmatpush1.msra.mxu0 0.0
        %679 = vmatprep.subr.mxu0 0.0
        %680 = vmatpush1.msra.mxu0 0.0
        %681 = vmatprep.subr.mxu0 0.0
        %682 = vmatpush1.msra.mxu0 0.0
        %683 = vmatprep.subr.mxu0 0.0
        %684 = vmatpush1.msra.mxu0 0.0
        %685 = vmatprep.subr.mxu0 0.0
        %686 = vmatpush1.msra.mxu0 0.0
        %687 = vmatprep.subr.mxu0 0.0
        %688 = vmatpush1.msra.mxu0 0.0
        %689 = vmatprep.subr.mxu0 0.0
        %690 = vmatpush1.msra.mxu0 0.0
        %691 = vmatprep.subr.mxu0 0.0
        %692 = vmatpush1.msra.mxu0 0.0
        %693 = vmatprep.mubr.f32.mxu0 0.0
        %694 = vmatmul.mubr.f32.gmra.mrb[0].mxu0 %v624
        %v695 = vpop.f32.mrb[0].mxu0
        %v696 = vadd.f32 0.0, %v695
        %v697 = vpop.f32.mrb[0].mxu0
        %698 = vdwg.mxu0
        %v699 = vadd.f32 %v608, %v696
        %700 = vset.pattern.permute.xlu0 5
        %701 = vperm.xlu0 %700, %v241
        %v702 = vpop.permute.xlu0 %701
        %vm703 = vcmp.eq.s32.totalorder %v702, %v244
        %v704 = vsel %vm703, 1, 0
        %v705 = vcvt.s32.f32 %v704
        %v706 = vlaneseq
        %v707 = vshrl.u32 %v706, 7
        %v708 = vsub.s32 5, %v707
        %v709 = vrot.slane %v214, %v708
        %v710 = vmul.f32 %v210, %v709
        %v711 = vmul.f32 %v211, %v709
        %v712 = vmul.f32 %v212, %v709
        %v713 = vmul.f32 %v213, %v709
        %v715 = vsel %vm273, %v705, 0
        %v718 = vsel %vm277, %v713, 0
        %720 = vmatprep.subr.mxu0 0.0
        %721 = vmatpush1.msra.mxu0 %v710
        %722 = vmatprep.subr.mxu0 0.0
        %723 = vmatpush1.msra.mxu0 %v711
        %724 = vmatprep.subr.mxu0 0.0
        %725 = vmatpush1.msra.mxu0 %v712
        %726 = vmatprep.subr.mxu0 0.0
        %727 = vmatpush1.msra.mxu0 %v718
        %728 = vmatprep.subr.mxu0 0.0
        %729 = vmatpush1.msra.mxu0 0.0
        %730 = vmatprep.subr.mxu0 0.0
        %731 = vmatpush1.msra.mxu0 0.0
        %732 = vmatprep.subr.mxu0 0.0
        %733 = vmatpush1.msra.mxu0 0.0
        %734 = vmatprep.subr.mxu0 0.0
        %735 = vmatpush1.msra.mxu0 0.0
        %736 = vmatprep.subr.mxu0 0.0
        %737 = vmatpush1.msra.mxu0 0.0
        %738 = vmatprep.subr.mxu0 0.0
        %739 = vmatpush1.msra.mxu0 0.0
        %740 = vmatprep.subr.mxu0 0.0
        %741 = vmatpush1.msra.mxu0 0.0
        %742 = vmatprep.subr.mxu0 0.0
        %743 = vmatpush1.msra.mxu0 0.0
        %744 = vmatprep.subr.mxu0 0.0
        %745 = vmatpush1.msra.mxu0 0.0
        %746 = vmatprep.subr.mxu0 0.0
        %747 = vmatpush1.msra.mxu0 0.0
        %748 = vmatprep.subr.mxu0 0.0
        %749 = vmatpush1.msra.mxu0 0.0
        %750 = vmatprep.subr.mxu0 0.0
        %751 = vmatpush1.msra.mxu0 0.0
        %752 = vmatprep.subr.mxu0 0.0
        %753 = vmatpush1.msra.mxu0 0.0
        %754 = vmatprep.subr.mxu0 0.0
        %755 = vmatpush1.msra.mxu0 0.0
        %756 = vmatprep.subr.mxu0 0.0
        %757 = vmatpush1.msra.mxu0 0.0
        %758 = vmatprep.subr.mxu0 0.0
        %759 = vmatpush1.msra.mxu0 0.0
        %760 = vmatprep.subr.mxu0 0.0
        %761 = vmatpush1.msra.mxu0 0.0
        %762 = vmatprep.subr.mxu0 0.0
        %763 = vmatpush1.msra.mxu0 0.0
        %764 = vmatprep.subr.mxu0 0.0
        %765 = vmatpush1.msra.mxu0 0.0
        %766 = vmatprep.subr.mxu0 0.0
        %767 = vmatpush1.msra.mxu0 0.0
        %768 = vmatprep.subr.mxu0 0.0
        %769 = vmatpush1.msra.mxu0 0.0
        %770 = vmatprep.subr.mxu0 0.0
        %771 = vmatpush1.msra.mxu0 0.0
        %772 = vmatprep.subr.mxu0 0.0
        %773 = vmatpush1.msra.mxu0 0.0
        %774 = vmatprep.subr.mxu0 0.0
        %775 = vmatpush1.msra.mxu0 0.0
        %776 = vmatprep.subr.mxu0 0.0
        %777 = vmatpush1.msra.mxu0 0.0
        %778 = vmatprep.subr.mxu0 0.0
        %779 = vmatpush1.msra.mxu0 0.0
        %780 = vmatprep.subr.mxu0 0.0
        %781 = vmatpush1.msra.mxu0 0.0
        %782 = vmatprep.subr.mxu0 0.0
        %783 = vmatpush1.msra.mxu0 0.0
        %784 = vmatprep.mubr.f32.mxu0 0.0
        %785 = vmatmul.mubr.f32.gmra.mrb[0].mxu0 %v715
        %v786 = vpop.f32.mrb[0].mxu0
        %v787 = vadd.f32 0.0, %v786
        %v788 = vpop.f32.mrb[0].mxu0
        %789 = vdwg.mxu0
        %v790 = vadd.f32 %v699, %v787
        %791 = vset.pattern.permute.xlu0 6
        %792 = vperm.xlu0 %791, %v241
        %v793 = vpop.permute.xlu0 %792
        %vm794 = vcmp.eq.s32.totalorder %v793, %v244
        %v795 = vsel %vm794, 1, 0
        %v796 = vcvt.s32.f32 %v795
        %v797 = vlaneseq
        %v798 = vshrl.u32 %v797, 7
        %v799 = vsub.s32 6, %v798
        %v800 = vrot.slane %v214, %v799
        %v801 = vmul.f32 %v210, %v800
        %v802 = vmul.f32 %v211, %v800
        %v803 = vmul.f32 %v212, %v800
        %v804 = vmul.f32 %v213, %v800
        %v806 = vsel %vm273, %v796, 0
        %v809 = vsel %vm277, %v804, 0
        %811 = vmatprep.subr.mxu0 0.0
        %812 = vmatpush1.msra.mxu0 %v801
        %813 = vmatprep.subr.mxu0 0.0
        %814 = vmatpush1.msra.mxu0 %v802
        %815 = vmatprep.subr.mxu0 0.0
        %816 = vmatpush1.msra.mxu0 %v803
        %817 = vmatprep.subr.mxu0 0.0
        %818 = vmatpush1.msra.mxu0 %v809
        %819 = vmatprep.subr.mxu0 0.0
        %820 = vmatpush1.msra.mxu0 0.0
        %821 = vmatprep.subr.mxu0 0.0
        %822 = vmatpush1.msra.mxu0 0.0
        %823 = vmatprep.subr.mxu0 0.0
        %824 = vmatpush1.msra.mxu0 0.0
        %825 = vmatprep.subr.mxu0 0.0
        %826 = vmatpush1.msra.mxu0 0.0
        %827 = vmatprep.subr.mxu0 0.0
        %828 = vmatpush1.msra.mxu0 0.0
        %829 = vmatprep.subr.mxu0 0.0
        %830 = vmatpush1.msra.mxu0 0.0
        %831 = vmatprep.subr.mxu0 0.0
        %832 = vmatpush1.msra.mxu0 0.0
        %833 = vmatprep.subr.mxu0 0.0
        %834 = vmatpush1.msra.mxu0 0.0
        %835 = vmatprep.subr.mxu0 0.0
        %836 = vmatpush1.msra.mxu0 0.0
        %837 = vmatprep.subr.mxu0 0.0
        %838 = vmatpush1.msra.mxu0 0.0
        %839 = vmatprep.subr.mxu0 0.0
        %840 = vmatpush1.msra.mxu0 0.0
        %841 = vmatprep.subr.mxu0 0.0
        %842 = vmatpush1.msra.mxu0 0.0
        %843 = vmatprep.subr.mxu0 0.0
        %844 = vmatpush1.msra.mxu0 0.0
        %845 = vmatprep.subr.mxu0 0.0
        %846 = vmatpush1.msra.mxu0 0.0
        %847 = vmatprep.subr.mxu0 0.0
        %848 = vmatpush1.msra.mxu0 0.0
        %849 = vmatprep.subr.mxu0 0.0
        %850 = vmatpush1.msra.mxu0 0.0
        %851 = vmatprep.subr.mxu0 0.0
        %852 = vmatpush1.msra.mxu0 0.0
        %853 = vmatprep.subr.mxu0 0.0
        %854 = vmatpush1.msra.mxu0 0.0
        %855 = vmatprep.subr.mxu0 0.0
        %856 = vmatpush1.msra.mxu0 0.0
        %857 = vmatprep.subr.mxu0 0.0
        %858 = vmatpush1.msra.mxu0 0.0
        %859 = vmatprep.subr.mxu0 0.0
        %860 = vmatpush1.msra.mxu0 0.0
        %861 = vmatprep.subr.mxu0 0.0
        %862 = vmatpush1.msra.mxu0 0.0
        %863 = vmatprep.subr.mxu0 0.0
        %864 = vmatpush1.msra.mxu0 0.0
        %865 = vmatprep.subr.mxu0 0.0
        %866 = vmatpush1.msra.mxu0 0.0
        %867 = vmatprep.subr.mxu0 0.0
        %868 = vmatpush1.msra.mxu0 0.0
        %869 = vmatprep.subr.mxu0 0.0
        %870 = vmatpush1.msra.mxu0 0.0
        %871 = vmatprep.subr.mxu0 0.0
        %872 = vmatpush1.msra.mxu0 0.0
        %873 = vmatprep.subr.mxu0 0.0
        %874 = vmatpush1.msra.mxu0 0.0
        %875 = vmatprep.mubr.f32.mxu0 0.0
        %876 = vmatmul.mubr.f32.gmra.mrb[0].mxu0 %v806
        %v877 = vpop.f32.mrb[0].mxu0
        %v878 = vadd.f32 0.0, %v877
        %v879 = vpop.f32.mrb[0].mxu0
        %880 = vdwg.mxu0
        %v881 = vadd.f32 %v790, %v878
        %882 = vset.pattern.permute.xlu0 7
        %883 = vperm.xlu0 %882, %v241
        %v884 = vpop.permute.xlu0 %883
        %vm885 = vcmp.eq.s32.totalorder %v884, %v244
        %v886 = vsel %vm885, 1, 0
        %v887 = vcvt.s32.f32 %v886
        %v888 = vlaneseq
        %v889 = vshrl.u32 %v888, 7
        %v890 = vsub.s32 7, %v889
        %v891 = vrot.slane %v214, %v890
        %v892 = vmul.f32 %v210, %v891
        %v893 = vmul.f32 %v211, %v891
        %v894 = vmul.f32 %v212, %v891
        %v895 = vmul.f32 %v213, %v891
        %v897 = vsel %vm273, %v887, 0
        %v900 = vsel %vm277, %v895, 0
        %902 = vmatprep.subr.mxu0 0.0
        %903 = vmatpush1.msra.mxu0 %v892
        %904 = vmatprep.subr.mxu0 0.0
        %905 = vmatpush1.msra.mxu0 %v893
        %906 = vmatprep.subr.mxu0 0.0
        %907 = vmatpush1.msra.mxu0 %v894
        %908 = vmatprep.subr.mxu0 0.0
        %909 = vmatpush1.msra.mxu0 %v900
        %910 = vmatprep.subr.mxu0 0.0
        %911 = vmatpush1.msra.mxu0 0.0
        %912 = vmatprep.subr.mxu0 0.0
        %913 = vmatpush1.msra.mxu0 0.0
        %914 = vmatprep.subr.mxu0 0.0
        %915 = vmatpush1.msra.mxu0 0.0
        %916 = vmatprep.subr.mxu0 0.0
        %917 = vmatpush1.msra.mxu0 0.0
        %918 = vmatprep.subr.mxu0 0.0
        %919 = vmatpush1.msra.mxu0 0.0
        %920 = vmatprep.subr.mxu0 0.0
        %921 = vmatpush1.msra.mxu0 0.0
        %922 = vmatprep.subr.mxu0 0.0
        %923 = vmatpush1.msra.mxu0 0.0
        %924 = vmatprep.subr.mxu0 0.0
        %925 = vmatpush1.msra.mxu0 0.0
        %926 = vmatprep.subr.mxu0 0.0
        %927 = vmatpush1.msra.mxu0 0.0
        %928 = vmatprep.subr.mxu0 0.0
        %929 = vmatpush1.msra.mxu0 0.0
        %930 = vmatprep.subr.mxu0 0.0
        %931 = vmatpush1.msra.mxu0 0.0
        %932 = vmatprep.subr.mxu0 0.0
        %933 = vmatpush1.msra.mxu0 0.0
        %934 = vmatprep.subr.mxu0 0.0
        %935 = vmatpush1.msra.mxu0 0.0
        %936 = vmatprep.subr.mxu0 0.0
        %937 = vmatpush1.msra.mxu0 0.0
        %938 = vmatprep.subr.mxu0 0.0
        %939 = vmatpush1.msra.mxu0 0.0
        %940 = vmatprep.subr.mxu0 0.0
        %941 = vmatpush1.msra.mxu0 0.0
        %942 = vmatprep.subr.mxu0 0.0
        %943 = vmatpush1.msra.mxu0 0.0
        %944 = vmatprep.subr.mxu0 0.0
        %945 = vmatpush1.msra.mxu0 0.0
        %946 = vmatprep.subr.mxu0 0.0
        %947 = vmatpush1.msra.mxu0 0.0
        %948 = vmatprep.subr.mxu0 0.0
        %949 = vmatpush1.msra.mxu0 0.0
        %950 = vmatprep.subr.mxu0 0.0
        %951 = vmatpush1.msra.mxu0 0.0
        %952 = vmatprep.subr.mxu0 0.0
        %953 = vmatpush1.msra.mxu0 0.0
        %954 = vmatprep.subr.mxu0 0.0
        %955 = vmatpush1.msra.mxu0 0.0
        %956 = vmatprep.subr.mxu0 0.0
        %957 = vmatpush1.msra.mxu0 0.0
        %958 = vmatprep.subr.mxu0 0.0
        %959 = vmatpush1.msra.mxu0 0.0
        %960 = vmatprep.subr.mxu0 0.0
        %961 = vmatpush1.msra.mxu0 0.0
        %962 = vmatprep.subr.mxu0 0.0
        %963 = vmatpush1.msra.mxu0 0.0
        %964 = vmatprep.subr.mxu0 0.0
        %965 = vmatpush1.msra.mxu0 0.0
        %966 = vmatprep.mubr.f32.mxu0 0.0
        %967 = vmatmul.mubr.f32.gmra.mrb[0].mxu0 %v897
        %v968 = vpop.f32.mrb[0].mxu0
        %v969 = vadd.f32 0.0, %v968
        %v970 = vpop.f32.mrb[0].mxu0
        %971 = vdwg.mxu0
        %v972 = vadd.f32 %v881, %v969
        %973 = vset.pattern.permute.xlu0 8
        %974 = vperm.xlu0 %973, %v241
        %v975 = vpop.permute.xlu0 %974
        %vm976 = vcmp.eq.s32.totalorder %v975, %v244
        %v977 = vsel %vm976, 1, 0
        %v978 = vcvt.s32.f32 %v977
        %v979 = vlaneseq
        %v980 = vshrl.u32 %v979, 7
        %v981 = vsub.s32 0, %v980
        %v982 = vrot.slane %v215, %v981
        %v983 = vmul.f32 %v210, %v982
        %v984 = vmul.f32 %v211, %v982
        %v985 = vmul.f32 %v212, %v982
        %v986 = vmul.f32 %v213, %v982
        %v988 = vsel %vm273, %v978, 0
        %v991 = vsel %vm277, %v986, 0
        %993 = vmatprep.subr.mxu0 0.0
        %994 = vmatpush1.msra.mxu0 %v983
        %995 = vmatprep.subr.mxu0 0.0
        %996 = vmatpush1.msra.mxu0 %v984
        %997 = vmatprep.subr.mxu0 0.0
        %998 = vmatpush1.msra.mxu0 %v985
        %999 = vmatprep.subr.mxu0 0.0
        %1000 = vmatpush1.msra.mxu0 %v991
        %1001 = vmatprep.subr.mxu0 0.0
        %1002 = vmatpush1.msra.mxu0 0.0
        %1003 = vmatprep.subr.mxu0 0.0
        %1004 = vmatpush1.msra.mxu0 0.0
        %1005 = vmatprep.subr.mxu0 0.0
        %1006 = vmatpush1.msra.mxu0 0.0
        %1007 = vmatprep.subr.mxu0 0.0
        %1008 = vmatpush1.msra.mxu0 0.0
        %1009 = vmatprep.subr.mxu0 0.0
        %1010 = vmatpush1.msra.mxu0 0.0
        %1011 = vmatprep.subr.mxu0 0.0
        %1012 = vmatpush1.msra.mxu0 0.0
        %1013 = vmatprep.subr.mxu0 0.0
        %1014 = vmatpush1.msra.mxu0 0.0
        %1015 = vmatprep.subr.mxu0 0.0
        %1016 = vmatpush1.msra.mxu0 0.0
        %1017 = vmatprep.subr.mxu0 0.0
        %1018 = vmatpush1.msra.mxu0 0.0
        %1019 = vmatprep.subr.mxu0 0.0
        %1020 = vmatpush1.msra.mxu0 0.0
        %1021 = vmatprep.subr.mxu0 0.0
        %1022 = vmatpush1.msra.mxu0 0.0
        %1023 = vmatprep.subr.mxu0 0.0
        %1024 = vmatpush1.msra.mxu0 0.0
        %1025 = vmatprep.subr.mxu0 0.0
        %1026 = vmatpush1.msra.mxu0 0.0
        %1027 = vmatprep.subr.mxu0 0.0
        %1028 = vmatpush1.msra.mxu0 0.0
        %1029 = vmatprep.subr.mxu0 0.0
        %1030 = vmatpush1.msra.mxu0 0.0
        %1031 = vmatprep.subr.mxu0 0.0
        %1032 = vmatpush1.msra.mxu0 0.0
        %1033 = vmatprep.subr.mxu0 0.0
        %1034 = vmatpush1.msra.mxu0 0.0
        %1035 = vmatprep.subr.mxu0 0.0
        %1036 = vmatpush1.msra.mxu0 0.0
        %1037 = vmatprep.subr.mxu0 0.0
        %1038 = vmatpush1.msra.mxu0 0.0
        %1039 = vmatprep.subr.mxu0 0.0
        %1040 = vmatpush1.msra.mxu0 0.0
        %1041 = vmatprep.subr.mxu0 0.0
        %1042 = vmatpush1.msra.mxu0 0.0
        %1043 = vmatprep.subr.mxu0 0.0
        %1044 = vmatpush1.msra.mxu0 0.0
        %1045 = vmatprep.subr.mxu0 0.0
        %1046 = vmatpush1.msra.mxu0 0.0
        %1047 = vmatprep.subr.mxu0 0.0
        %1048 = vmatpush1.msra.mxu0 0.0
        %1049 = vmatprep.subr.mxu0 0.0
        %1050 = vmatpush1.msra.mxu0 0.0
        %1051 = vmatprep.subr.mxu0 0.0
        %1052 = vmatpush1.msra.mxu0 0.0
        %1053 = vmatprep.subr.mxu0 0.0
        %1054 = vmatpush1.msra.mxu0 0.0
        %1055 = vmatprep.subr.mxu0 0.0
        %1056 = vmatpush1.msra.mxu0 0.0
        %1057 = vmatprep.mubr.f32.mxu0 0.0
        %1058 = vmatmul.mubr.f32.gmra.mrb[0].mxu0 %v988
        %v1059 = vpop.f32.mrb[0].mxu0
        %v1060 = vadd.f32 0.0, %v1059
        %v1061 = vpop.f32.mrb[0].mxu0
        %1062 = vdwg.mxu0
        %v1063 = vadd.f32 %v972, %v1060
        %1064 = vset.pattern.permute.xlu0 9
        %1065 = vperm.xlu0 %1064, %v241
        %v1066 = vpop.permute.xlu0 %1065
        %vm1067 = vcmp.eq.s32.totalorder %v1066, %v244
        %v1068 = vsel %vm1067, 1, 0
        %v1069 = vcvt.s32.f32 %v1068
        %v1070 = vlaneseq
        %v1071 = vshrl.u32 %v1070, 7
        %v1072 = vsub.s32 1, %v1071
        %v1073 = vrot.slane %v215, %v1072
        %v1074 = vmul.f32 %v210, %v1073
        %v1075 = vmul.f32 %v211, %v1073
        %v1076 = vmul.f32 %v212, %v1073
        %v1077 = vmul.f32 %v213, %v1073
        %v1079 = vsel %vm273, %v1069, 0
        %v1082 = vsel %vm277, %v1077, 0
        %1084 = vmatprep.subr.mxu0 0.0
        %1085 = vmatpush1.msra.mxu0 %v1074
        %1086 = vmatprep.subr.mxu0 0.0
        %1087 = vmatpush1.msra.mxu0 %v1075
        %1088 = vmatprep.subr.mxu0 0.0
        %1089 = vmatpush1.msra.mxu0 %v1076
        %1090 = vmatprep.subr.mxu0 0.0
        %1091 = vmatpush1.msra.mxu0 %v1082
        %1092 = vmatprep.subr.mxu0 0.0
        %1093 = vmatpush1.msra.mxu0 0.0
        %1094 = vmatprep.subr.mxu0 0.0
        %1095 = vmatpush1.msra.mxu0 0.0
        %1096 = vmatprep.subr.mxu0 0.0
        %1097 = vmatpush1.msra.mxu0 0.0
        %1098 = vmatprep.subr.mxu0 0.0
        %1099 = vmatpush1.msra.mxu0 0.0
        %1100 = vmatprep.subr.mxu0 0.0
        %1101 = vmatpush1.msra.mxu0 0.0
        %1102 = vmatprep.subr.mxu0 0.0
        %1103 = vmatpush1.msra.mxu0 0.0
        %1104 = vmatprep.subr.mxu0 0.0
        %1105 = vmatpush1.msra.mxu0 0.0
        %1106 = vmatprep.subr.mxu0 0.0
        %1107 = vmatpush1.msra.mxu0 0.0
        %1108 = vmatprep.subr.mxu0 0.0
        %1109 = vmatpush1.msra.mxu0 0.0
        %1110 = vmatprep.subr.mxu0 0.0
        %1111 = vmatpush1.msra.mxu0 0.0
        %1112 = vmatprep.subr.mxu0 0.0
        %1113 = vmatpush1.msra.mxu0 0.0
        %1114 = vmatprep.subr.mxu0 0.0
        %1115 = vmatpush1.msra.mxu0 0.0
        %1116 = vmatprep.subr.mxu0 0.0
        %1117 = vmatpush1.msra.mxu0 0.0
        %1118 = vmatprep.subr.mxu0 0.0
        %1119 = vmatpush1.msra.mxu0 0.0
        %1120 = vmatprep.subr.mxu0 0.0
        %1121 = vmatpush1.msra.mxu0 0.0
        %1122 = vmatprep.subr.mxu0 0.0
        %1123 = vmatpush1.msra.mxu0 0.0
        %1124 = vmatprep.subr.mxu0 0.0
        %1125 = vmatpush1.msra.mxu0 0.0
        %1126 = vmatprep.subr.mxu0 0.0
        %1127 = vmatpush1.msra.mxu0 0.0
        %1128 = vmatprep.subr.mxu0 0.0
        %1129 = vmatpush1.msra.mxu0 0.0
        %1130 = vmatprep.subr.mxu0 0.0
        %1131 = vmatpush1.msra.mxu0 0.0
        %1132 = vmatprep.subr.mxu0 0.0
        %1133 = vmatpush1.msra.mxu0 0.0
        %1134 = vmatprep.subr.mxu0 0.0
        %1135 = vmatpush1.msra.mxu0 0.0
        %1136 = vmatprep.subr.mxu0 0.0
        %1137 = vmatpush1.msra.mxu0 0.0
        %1138 = vmatprep.subr.mxu0 0.0
        %1139 = vmatpush1.msra.mxu0 0.0
        %1140 = vmatprep.subr.mxu0 0.0
        %1141 = vmatpush1.msra.mxu0 0.0
        %1142 = vmatprep.subr.mxu0 0.0
        %1143 = vmatpush1.msra.mxu0 0.0
        %1144 = vmatprep.subr.mxu0 0.0
        %1145 = vmatpush1.msra.mxu0 0.0
        %1146 = vmatprep.subr.mxu0 0.0
        %1147 = vmatpush1.msra.mxu0 0.0
        %1148 = vmatprep.mubr.f32.mxu0 0.0
        %1149 = vmatmul.mubr.f32.gmra.mrb[0].mxu0 %v1079
        %v1150 = vpop.f32.mrb[0].mxu0
        %v1151 = vadd.f32 0.0, %v1150
        %v1152 = vpop.f32.mrb[0].mxu0
        %1153 = vdwg.mxu0
        %v1154 = vadd.f32 %v1063, %v1151
        %1155 = vset.pattern.permute.xlu0 10
        %1156 = vperm.xlu0 %1155, %v241
        %v1157 = vpop.permute.xlu0 %1156
        %vm1158 = vcmp.eq.s32.totalorder %v1157, %v244
        %v1159 = vsel %vm1158, 1, 0
        %v1160 = vcvt.s32.f32 %v1159
        %v1161 = vlaneseq
        %v1162 = vshrl.u32 %v1161, 7
        %v1163 = vsub.s32 2, %v1162
        %v1164 = vrot.slane %v215, %v1163
        %v1165 = vmul.f32 %v210, %v1164
        %v1166 = vmul.f32 %v211, %v1164
        %v1167 = vmul.f32 %v212, %v1164
        %v1168 = vmul.f32 %v213, %v1164
        %v1170 = vsel %vm273, %v1160, 0
        %v1173 = vsel %vm277, %v1168, 0
        %1175 = vmatprep.subr.mxu0 0.0
        %1176 = vmatpush1.msra.mxu0 %v1165
        %1177 = vmatprep.subr.mxu0 0.0
        %1178 = vmatpush1.msra.mxu0 %v1166
        %1179 = vmatprep.subr.mxu0 0.0
        %1180 = vmatpush1.msra.mxu0 %v1167
        %1181 = vmatprep.subr.mxu0 0.0
        %1182 = vmatpush1.msra.mxu0 %v1173
        %1183 = vmatprep.subr.mxu0 0.0
        %1184 = vmatpush1.msra.mxu0 0.0
        %1185 = vmatprep.subr.mxu0 0.0
        %1186 = vmatpush1.msra.mxu0 0.0
        %1187 = vmatprep.subr.mxu0 0.0
        %1188 = vmatpush1.msra.mxu0 0.0
        %1189 = vmatprep.subr.mxu0 0.0
        %1190 = vmatpush1.msra.mxu0 0.0
        %1191 = vmatprep.subr.mxu0 0.0
        %1192 = vmatpush1.msra.mxu0 0.0
        %1193 = vmatprep.subr.mxu0 0.0
        %1194 = vmatpush1.msra.mxu0 0.0
        %1195 = vmatprep.subr.mxu0 0.0
        %1196 = vmatpush1.msra.mxu0 0.0
        %1197 = vmatprep.subr.mxu0 0.0
        %1198 = vmatpush1.msra.mxu0 0.0
        %1199 = vmatprep.subr.mxu0 0.0
        %1200 = vmatpush1.msra.mxu0 0.0
        %1201 = vmatprep.subr.mxu0 0.0
        %1202 = vmatpush1.msra.mxu0 0.0
        %1203 = vmatprep.subr.mxu0 0.0
        %1204 = vmatpush1.msra.mxu0 0.0
        %1205 = vmatprep.subr.mxu0 0.0
        %1206 = vmatpush1.msra.mxu0 0.0
        %1207 = vmatprep.subr.mxu0 0.0
        %1208 = vmatpush1.msra.mxu0 0.0
        %1209 = vmatprep.subr.mxu0 0.0
        %1210 = vmatpush1.msra.mxu0 0.0
        %1211 = vmatprep.subr.mxu0 0.0
        %1212 = vmatpush1.msra.mxu0 0.0
        %1213 = vmatprep.subr.mxu0 0.0
        %1214 = vmatpush1.msra.mxu0 0.0
        %1215 = vmatprep.subr.mxu0 0.0
        %1216 = vmatpush1.msra.mxu0 0.0
        %1217 = vmatprep.subr.mxu0 0.0
        %1218 = vmatpush1.msra.mxu0 0.0
        %1219 = vmatprep.subr.mxu0 0.0
        %1220 = vmatpush1.msra.mxu0 0.0
        %1221 = vmatprep.subr.mxu0 0.0
        %1222 = vmatpush1.msra.mxu0 0.0
        %1223 = vmatprep.subr.mxu0 0.0
        %1224 = vmatpush1.msra.mxu0 0.0
        %1225 = vmatprep.subr.mxu0 0.0
        %1226 = vmatpush1.msra.mxu0 0.0
        %1227 = vmatprep.subr.mxu0 0.0
        %1228 = vmatpush1.msra.mxu0 0.0
        %1229 = vmatprep.subr.mxu0 0.0
        %1230 = vmatpush1.msra.mxu0 0.0
        %1231 = vmatprep.subr.mxu0 0.0
        %1232 = vmatpush1.msra.mxu0 0.0
        %1233 = vmatprep.subr.mxu0 0.0
        %1234 = vmatpush1.msra.mxu0 0.0
        %1235 = vmatprep.subr.mxu0 0.0
        %1236 = vmatpush1.msra.mxu0 0.0
        %1237 = vmatprep.subr.mxu0 0.0
        %1238 = vmatpush1.msra.mxu0 0.0
        %1239 = vmatprep.mubr.f32.mxu0 0.0
        %1240 = vmatmul.mubr.f32.gmra.mrb[0].mxu0 %v1170
        %v1241 = vpop.f32.mrb[0].mxu0
        %v1242 = vadd.f32 0.0, %v1241
        %v1243 = vpop.f32.mrb[0].mxu0
        %1244 = vdwg.mxu0
        %v1245 = vadd.f32 %v1154, %v1242
        %1246 = vset.pattern.permute.xlu0 11
        %1247 = vperm.xlu0 %1246, %v241
        %v1248 = vpop.permute.xlu0 %1247
        %vm1249 = vcmp.eq.s32.totalorder %v1248, %v244
        %v1250 = vsel %vm1249, 1, 0
        %v1251 = vcvt.s32.f32 %v1250
        %v1252 = vlaneseq
        %v1253 = vshrl.u32 %v1252, 7
        %v1254 = vsub.s32 3, %v1253
        %v1255 = vrot.slane %v215, %v1254
        %v1256 = vmul.f32 %v210, %v1255
        %v1257 = vmul.f32 %v211, %v1255
        %v1258 = vmul.f32 %v212, %v1255
        %v1259 = vmul.f32 %v213, %v1255
        %v1261 = vsel %vm273, %v1251, 0
        %v1264 = vsel %vm277, %v1259, 0
        %1266 = vmatprep.subr.mxu0 0.0
        %1267 = vmatpush1.msra.mxu0 %v1256
        %1268 = vmatprep.subr.mxu0 0.0
        %1269 = vmatpush1.msra.mxu0 %v1257
        %1270 = vmatprep.subr.mxu0 0.0
        %1271 = vmatpush1.msra.mxu0 %v1258
        %1272 = vmatprep.subr.mxu0 0.0
        %1273 = vmatpush1.msra.mxu0 %v1264
        %1274 = vmatprep.subr.mxu0 0.0
        %1275 = vmatpush1.msra.mxu0 0.0
        %1276 = vmatprep.subr.mxu0 0.0
        %1277 = vmatpush1.msra.mxu0 0.0
        %1278 = vmatprep.subr.mxu0 0.0
        %1279 = vmatpush1.msra.mxu0 0.0
        %1280 = vmatprep.subr.mxu0 0.0
        %1281 = vmatpush1.msra.mxu0 0.0
        %1282 = vmatprep.subr.mxu0 0.0
        %1283 = vmatpush1.msra.mxu0 0.0
        %1284 = vmatprep.subr.mxu0 0.0
        %1285 = vmatpush1.msra.mxu0 0.0
        %1286 = vmatprep.subr.mxu0 0.0
        %1287 = vmatpush1.msra.mxu0 0.0
        %1288 = vmatprep.subr.mxu0 0.0
        %1289 = vmatpush1.msra.mxu0 0.0
        %1290 = vmatprep.subr.mxu0 0.0
        %1291 = vmatpush1.msra.mxu0 0.0
        %1292 = vmatprep.subr.mxu0 0.0
        %1293 = vmatpush1.msra.mxu0 0.0
        %1294 = vmatprep.subr.mxu0 0.0
        %1295 = vmatpush1.msra.mxu0 0.0
        %1296 = vmatprep.subr.mxu0 0.0
        %1297 = vmatpush1.msra.mxu0 0.0
        %1298 = vmatprep.subr.mxu0 0.0
        %1299 = vmatpush1.msra.mxu0 0.0
        %1300 = vmatprep.subr.mxu0 0.0
        %1301 = vmatpush1.msra.mxu0 0.0
        %1302 = vmatprep.subr.mxu0 0.0
        %1303 = vmatpush1.msra.mxu0 0.0
        %1304 = vmatprep.subr.mxu0 0.0
        %1305 = vmatpush1.msra.mxu0 0.0
        %1306 = vmatprep.subr.mxu0 0.0
        %1307 = vmatpush1.msra.mxu0 0.0
        %1308 = vmatprep.subr.mxu0 0.0
        %1309 = vmatpush1.msra.mxu0 0.0
        %1310 = vmatprep.subr.mxu0 0.0
        %1311 = vmatpush1.msra.mxu0 0.0
        %1312 = vmatprep.subr.mxu0 0.0
        %1313 = vmatpush1.msra.mxu0 0.0
        %1314 = vmatprep.subr.mxu0 0.0
        %1315 = vmatpush1.msra.mxu0 0.0
        %1316 = vmatprep.subr.mxu0 0.0
        %1317 = vmatpush1.msra.mxu0 0.0
        %1318 = vmatprep.subr.mxu0 0.0
        %1319 = vmatpush1.msra.mxu0 0.0
        %1320 = vmatprep.subr.mxu0 0.0
        %1321 = vmatpush1.msra.mxu0 0.0
        %1322 = vmatprep.subr.mxu0 0.0
        %1323 = vmatpush1.msra.mxu0 0.0
        %1324 = vmatprep.subr.mxu0 0.0
        %1325 = vmatpush1.msra.mxu0 0.0
        %1326 = vmatprep.subr.mxu0 0.0
        %1327 = vmatpush1.msra.mxu0 0.0
        %1328 = vmatprep.subr.mxu0 0.0
        %1329 = vmatpush1.msra.mxu0 0.0
        %1330 = vmatprep.mubr.f32.mxu0 0.0
        %1331 = vmatmul.mubr.f32.gmra.mrb[0].mxu0 %v1261
        %v1332 = vpop.f32.mrb[0].mxu0
        %v1333 = vadd.f32 0.0, %v1332
        %v1334 = vpop.f32.mrb[0].mxu0
        %1335 = vdwg.mxu0
        %v1336 = vadd.f32 %v1245, %v1333
        %1337 = vset.pattern.permute.xlu0 12
        %1338 = vperm.xlu0 %1337, %v241
        %v1339 = vpop.permute.xlu0 %1338
        %vm1340 = vcmp.eq.s32.totalorder %v1339, %v244
        %v1341 = vsel %vm1340, 1, 0
        %v1342 = vcvt.s32.f32 %v1341
        %v1343 = vlaneseq
        %v1344 = vshrl.u32 %v1343, 7
        %v1345 = vsub.s32 4, %v1344
        %v1346 = vrot.slane %v215, %v1345
        %v1347 = vmul.f32 %v210, %v1346
        %v1348 = vmul.f32 %v211, %v1346
        %v1349 = vmul.f32 %v212, %v1346
        %v1350 = vmul.f32 %v213, %v1346
        %v1352 = vsel %vm273, %v1342, 0
        %v1355 = vsel %vm277, %v1350, 0
        %1357 = vmatprep.subr.mxu0 0.0
        %1358 = vmatpush1.msra.mxu0 %v1347
        %1359 = vmatprep.subr.mxu0 0.0
        %1360 = vmatpush1.msra.mxu0 %v1348
        %1361 = vmatprep.subr.mxu0 0.0
        %1362 = vmatpush1.msra.mxu0 %v1349
        %1363 = vmatprep.subr.mxu0 0.0
        %1364 = vmatpush1.msra.mxu0 %v1355
        %1365 = vmatprep.subr.mxu0 0.0
        %1366 = vmatpush1.msra.mxu0 0.0
        %1367 = vmatprep.subr.mxu0 0.0
        %1368 = vmatpush1.msra.mxu0 0.0
        %1369 = vmatprep.subr.mxu0 0.0
        %1370 = vmatpush1.msra.mxu0 0.0
        %1371 = vmatprep.subr.mxu0 0.0
        %1372 = vmatpush1.msra.mxu0 0.0
        %1373 = vmatprep.subr.mxu0 0.0
        %1374 = vmatpush1.msra.mxu0 0.0
        %1375 = vmatprep.subr.mxu0 0.0
        %1376 = vmatpush1.msra.mxu0 0.0
        %1377 = vmatprep.subr.mxu0 0.0
        %1378 = vmatpush1.msra.mxu0 0.0
        %1379 = vmatprep.subr.mxu0 0.0
        %1380 = vmatpush1.msra.mxu0 0.0
        %1381 = vmatprep.subr.mxu0 0.0
        %1382 = vmatpush1.msra.mxu0 0.0
        %1383 = vmatprep.subr.mxu0 0.0
        %1384 = vmatpush1.msra.mxu0 0.0
        %1385 = vmatprep.subr.mxu0 0.0
        %1386 = vmatpush1.msra.mxu0 0.0
        %1387 = vmatprep.subr.mxu0 0.0
        %1388 = vmatpush1.msra.mxu0 0.0
        %1389 = vmatprep.subr.mxu0 0.0
        %1390 = vmatpush1.msra.mxu0 0.0
        %1391 = vmatprep.subr.mxu0 0.0
        %1392 = vmatpush1.msra.mxu0 0.0
        %1393 = vmatprep.subr.mxu0 0.0
        %1394 = vmatpush1.msra.mxu0 0.0
        %1395 = vmatprep.subr.mxu0 0.0
        %1396 = vmatpush1.msra.mxu0 0.0
        %1397 = vmatprep.subr.mxu0 0.0
        %1398 = vmatpush1.msra.mxu0 0.0
        %1399 = vmatprep.subr.mxu0 0.0
        %1400 = vmatpush1.msra.mxu0 0.0
        %1401 = vmatprep.subr.mxu0 0.0
        %1402 = vmatpush1.msra.mxu0 0.0
        %1403 = vmatprep.subr.mxu0 0.0
        %1404 = vmatpush1.msra.mxu0 0.0
        %1405 = vmatprep.subr.mxu0 0.0
        %1406 = vmatpush1.msra.mxu0 0.0
        %1407 = vmatprep.subr.mxu0 0.0
        %1408 = vmatpush1.msra.mxu0 0.0
        %1409 = vmatprep.subr.mxu0 0.0
        %1410 = vmatpush1.msra.mxu0 0.0
        %1411 = vmatprep.subr.mxu0 0.0
        %1412 = vmatpush1.msra.mxu0 0.0
        %1413 = vmatprep.subr.mxu0 0.0
        %1414 = vmatpush1.msra.mxu0 0.0
        %1415 = vmatprep.subr.mxu0 0.0
        %1416 = vmatpush1.msra.mxu0 0.0
        %1417 = vmatprep.subr.mxu0 0.0
        %1418 = vmatpush1.msra.mxu0 0.0
        %1419 = vmatprep.subr.mxu0 0.0
        %1420 = vmatpush1.msra.mxu0 0.0
        %1421 = vmatprep.mubr.f32.mxu0 0.0
        %1422 = vmatmul.mubr.f32.gmra.mrb[0].mxu0 %v1352
        %v1423 = vpop.f32.mrb[0].mxu0
        %v1424 = vadd.f32 0.0, %v1423
        %v1425 = vpop.f32.mrb[0].mxu0
        %1426 = vdwg.mxu0
        %v1427 = vadd.f32 %v1336, %v1424
        %1428 = vset.pattern.permute.xlu0 13
        %1429 = vperm.xlu0 %1428, %v241
        %v1430 = vpop.permute.xlu0 %1429
        %vm1431 = vcmp.eq.s32.totalorder %v1430, %v244
        %v1432 = vsel %vm1431, 1, 0
        %v1433 = vcvt.s32.f32 %v1432
        %v1434 = vlaneseq
        %v1435 = vshrl.u32 %v1434, 7
        %v1436 = vsub.s32 5, %v1435
        %v1437 = vrot.slane %v215, %v1436
        %v1438 = vmul.f32 %v210, %v1437
        %v1439 = vmul.f32 %v211, %v1437
        %v1440 = vmul.f32 %v212, %v1437
        %v1441 = vmul.f32 %v213, %v1437
        %v1443 = vsel %vm273, %v1433, 0
        %v1446 = vsel %vm277, %v1441, 0
        %1448 = vmatprep.subr.mxu0 0.0
        %1449 = vmatpush1.msra.mxu0 %v1438
        %1450 = vmatprep.subr.mxu0 0.0
        %1451 = vmatpush1.msra.mxu0 %v1439
        %1452 = vmatprep.subr.mxu0 0.0
        %1453 = vmatpush1.msra.mxu0 %v1440
        %1454 = vmatprep.subr.mxu0 0.0
        %1455 = vmatpush1.msra.mxu0 %v1446
        %1456 = vmatprep.subr.mxu0 0.0
        %1457 = vmatpush1.msra.mxu0 0.0
        %1458 = vmatprep.subr.mxu0 0.0
        %1459 = vmatpush1.msra.mxu0 0.0
        %1460 = vmatprep.subr.mxu0 0.0
        %1461 = vmatpush1.msra.mxu0 0.0
        %1462 = vmatprep.subr.mxu0 0.0
        %1463 = vmatpush1.msra.mxu0 0.0
        %1464 = vmatprep.subr.mxu0 0.0
        %1465 = vmatpush1.msra.mxu0 0.0
        %1466 = vmatprep.subr.mxu0 0.0
        %1467 = vmatpush1.msra.mxu0 0.0
        %1468 = vmatprep.subr.mxu0 0.0
        %1469 = vmatpush1.msra.mxu0 0.0
        %1470 = vmatprep.subr.mxu0 0.0
        %1471 = vmatpush1.msra.mxu0 0.0
        %1472 = vmatprep.subr.mxu0 0.0
        %1473 = vmatpush1.msra.mxu0 0.0
        %1474 = vmatprep.subr.mxu0 0.0
        %1475 = vmatpush1.msra.mxu0 0.0
        %1476 = vmatprep.subr.mxu0 0.0
        %1477 = vmatpush1.msra.mxu0 0.0
        %1478 = vmatprep.subr.mxu0 0.0
        %1479 = vmatpush1.msra.mxu0 0.0
        %1480 = vmatprep.subr.mxu0 0.0
        %1481 = vmatpush1.msra.mxu0 0.0
        %1482 = vmatprep.subr.mxu0 0.0
        %1483 = vmatpush1.msra.mxu0 0.0
        %1484 = vmatprep.subr.mxu0 0.0
        %1485 = vmatpush1.msra.mxu0 0.0
        %1486 = vmatprep.subr.mxu0 0.0
        %1487 = vmatpush1.msra.mxu0 0.0
        %1488 = vmatprep.subr.mxu0 0.0
        %1489 = vmatpush1.msra.mxu0 0.0
        %1490 = vmatprep.subr.mxu0 0.0
        %1491 = vmatpush1.msra.mxu0 0.0
        %1492 = vmatprep.subr.mxu0 0.0
        %1493 = vmatpush1.msra.mxu0 0.0
        %1494 = vmatprep.subr.mxu0 0.0
        %1495 = vmatpush1.msra.mxu0 0.0
        %1496 = vmatprep.subr.mxu0 0.0
        %1497 = vmatpush1.msra.mxu0 0.0
        %1498 = vmatprep.subr.mxu0 0.0
        %1499 = vmatpush1.msra.mxu0 0.0
        %1500 = vmatprep.subr.mxu0 0.0
        %1501 = vmatpush1.msra.mxu0 0.0
        %1502 = vmatprep.subr.mxu0 0.0
        %1503 = vmatpush1.msra.mxu0 0.0
        %1504 = vmatprep.subr.mxu0 0.0
        %1505 = vmatpush1.msra.mxu0 0.0
        %1506 = vmatprep.subr.mxu0 0.0
        %1507 = vmatpush1.msra.mxu0 0.0
        %1508 = vmatprep.subr.mxu0 0.0
        %1509 = vmatpush1.msra.mxu0 0.0
        %1510 = vmatprep.subr.mxu0 0.0
        %1511 = vmatpush1.msra.mxu0 0.0
        %1512 = vmatprep.mubr.f32.mxu0 0.0
        %1513 = vmatmul.mubr.f32.gmra.mrb[0].mxu0 %v1443
        %v1514 = vpop.f32.mrb[0].mxu0
        %v1515 = vadd.f32 0.0, %v1514
        %v1516 = vpop.f32.mrb[0].mxu0
        %1517 = vdwg.mxu0
        %v1518 = vadd.f32 %v1427, %v1515
        %1519 = vset.pattern.permute.xlu0 14
        %1520 = vperm.xlu0 %1519, %v241
        %v1521 = vpop.permute.xlu0 %1520
        %vm1522 = vcmp.eq.s32.totalorder %v1521, %v244
        %v1523 = vsel %vm1522, 1, 0
        %v1524 = vcvt.s32.f32 %v1523
        %v1525 = vlaneseq
        %v1526 = vshrl.u32 %v1525, 7
        %v1527 = vsub.s32 6, %v1526
        %v1528 = vrot.slane %v215, %v1527
        %v1529 = vmul.f32 %v210, %v1528
        %v1530 = vmul.f32 %v211, %v1528
        %v1531 = vmul.f32 %v212, %v1528
        %v1532 = vmul.f32 %v213, %v1528
        %v1534 = vsel %vm273, %v1524, 0
        %v1537 = vsel %vm277, %v1532, 0
        %1539 = vmatprep.subr.mxu0 0.0
        %1540 = vmatpush1.msra.mxu0 %v1529
        %1541 = vmatprep.subr.mxu0 0.0
        %1542 = vmatpush1.msra.mxu0 %v1530
        %1543 = vmatprep.subr.mxu0 0.0
        %1544 = vmatpush1.msra.mxu0 %v1531
        %1545 = vmatprep.subr.mxu0 0.0
        %1546 = vmatpush1.msra.mxu0 %v1537
        %1547 = vmatprep.subr.mxu0 0.0
        %1548 = vmatpush1.msra.mxu0 0.0
        %1549 = vmatprep.subr.mxu0 0.0
        %1550 = vmatpush1.msra.mxu0 0.0
        %1551 = vmatprep.subr.mxu0 0.0
        %1552 = vmatpush1.msra.mxu0 0.0
        %1553 = vmatprep.subr.mxu0 0.0
        %1554 = vmatpush1.msra.mxu0 0.0
        %1555 = vmatprep.subr.mxu0 0.0
        %1556 = vmatpush1.msra.mxu0 0.0
        %1557 = vmatprep.subr.mxu0 0.0
        %1558 = vmatpush1.msra.mxu0 0.0
        %1559 = vmatprep.subr.mxu0 0.0
        %1560 = vmatpush1.msra.mxu0 0.0
        %1561 = vmatprep.subr.mxu0 0.0
        %1562 = vmatpush1.msra.mxu0 0.0
        %1563 = vmatprep.subr.mxu0 0.0
        %1564 = vmatpush1.msra.mxu0 0.0
        %1565 = vmatprep.subr.mxu0 0.0
        %1566 = vmatpush1.msra.mxu0 0.0
        %1567 = vmatprep.subr.mxu0 0.0
        %1568 = vmatpush1.msra.mxu0 0.0
        %1569 = vmatprep.subr.mxu0 0.0
        %1570 = vmatpush1.msra.mxu0 0.0
        %1571 = vmatprep.subr.mxu0 0.0
        %1572 = vmatpush1.msra.mxu0 0.0
        %1573 = vmatprep.subr.mxu0 0.0
        %1574 = vmatpush1.msra.mxu0 0.0
        %1575 = vmatprep.subr.mxu0 0.0
        %1576 = vmatpush1.msra.mxu0 0.0
        %1577 = vmatprep.subr.mxu0 0.0
        %1578 = vmatpush1.msra.mxu0 0.0
        %1579 = vmatprep.subr.mxu0 0.0
        %1580 = vmatpush1.msra.mxu0 0.0
        %1581 = vmatprep.subr.mxu0 0.0
        %1582 = vmatpush1.msra.mxu0 0.0
        %1583 = vmatprep.subr.mxu0 0.0
        %1584 = vmatpush1.msra.mxu0 0.0
        %1585 = vmatprep.subr.mxu0 0.0
        %1586 = vmatpush1.msra.mxu0 0.0
        %1587 = vmatprep.subr.mxu0 0.0
        %1588 = vmatpush1.msra.mxu0 0.0
        %1589 = vmatprep.subr.mxu0 0.0
        %1590 = vmatpush1.msra.mxu0 0.0
        %1591 = vmatprep.subr.mxu0 0.0
        %1592 = vmatpush1.msra.mxu0 0.0
        %1593 = vmatprep.subr.mxu0 0.0
        %1594 = vmatpush1.msra.mxu0 0.0
        %1595 = vmatprep.subr.mxu0 0.0
        %1596 = vmatpush1.msra.mxu0 0.0
        %1597 = vmatprep.subr.mxu0 0.0
        %1598 = vmatpush1.msra.mxu0 0.0
        %1599 = vmatprep.subr.mxu0 0.0
        %1600 = vmatpush1.msra.mxu0 0.0
        %1601 = vmatprep.subr.mxu0 0.0
        %1602 = vmatpush1.msra.mxu0 0.0
        %1603 = vmatprep.mubr.f32.mxu0 0.0
        %1604 = vmatmul.mubr.f32.gmra.mrb[0].mxu0 %v1534
        %v1605 = vpop.f32.mrb[0].mxu0
        %v1606 = vadd.f32 0.0, %v1605
        %v1607 = vpop.f32.mrb[0].mxu0
        %1608 = vdwg.mxu0
        %v1609 = vadd.f32 %v1518, %v1606
        %1610 = vset.pattern.permute.xlu0 15
        %1611 = vperm.xlu0 %1610, %v241
        %v1612 = vpop.permute.xlu0 %1611
        %vm1613 = vcmp.eq.s32.totalorder %v1612, %v244
        %v1614 = vsel %vm1613, 1, 0
        %v1615 = vcvt.s32.f32 %v1614
        %v1616 = vlaneseq
        %v1617 = vshrl.u32 %v1616, 7
        %v1618 = vsub.s32 7, %v1617
        %v1619 = vrot.slane %v215, %v1618
        %v1620 = vmul.f32 %v210, %v1619
        %v1621 = vmul.f32 %v211, %v1619
        %v1622 = vmul.f32 %v212, %v1619
        %v1623 = vmul.f32 %v213, %v1619
        %v1625 = vsel %vm273, %v1615, 0
        %v1628 = vsel %vm277, %v1623, 0
        %1630 = vmatprep.subr.mxu0 0.0
        %1631 = vmatpush1.msra.mxu0 %v1620
        %1632 = vmatprep.subr.mxu0 0.0
        %1633 = vmatpush1.msra.mxu0 %v1621
        %1634 = vmatprep.subr.mxu0 0.0
        %1635 = vmatpush1.msra.mxu0 %v1622
        %1636 = vmatprep.subr.mxu0 0.0
        %1637 = vmatpush1.msra.mxu0 %v1628
        %1638 = vmatprep.subr.mxu0 0.0
        %1639 = vmatpush1.msra.mxu0 0.0
        %1640 = vmatprep.subr.mxu0 0.0
        %1641 = vmatpush1.msra.mxu0 0.0
        %1642 = vmatprep.subr.mxu0 0.0
        %1643 = vmatpush1.msra.mxu0 0.0
        %1644 = vmatprep.subr.mxu0 0.0
        %1645 = vmatpush1.msra.mxu0 0.0
        %1646 = vmatprep.subr.mxu0 0.0
        %1647 = vmatpush1.msra.mxu0 0.0
        %1648 = vmatprep.subr.mxu0 0.0
        %1649 = vmatpush1.msra.mxu0 0.0
        %1650 = vmatprep.subr.mxu0 0.0
        %1651 = vmatpush1.msra.mxu0 0.0
        %1652 = vmatprep.subr.mxu0 0.0
        %1653 = vmatpush1.msra.mxu0 0.0
        %1654 = vmatprep.subr.mxu0 0.0
        %1655 = vmatpush1.msra.mxu0 0.0
        %1656 = vmatprep.subr.mxu0 0.0
        %1657 = vmatpush1.msra.mxu0 0.0
        %1658 = vmatprep.subr.mxu0 0.0
        %1659 = vmatpush1.msra.mxu0 0.0
        %1660 = vmatprep.subr.mxu0 0.0
        %1661 = vmatpush1.msra.mxu0 0.0
        %1662 = vmatprep.subr.mxu0 0.0
        %1663 = vmatpush1.msra.mxu0 0.0
        %1664 = vmatprep.subr.mxu0 0.0
        %1665 = vmatpush1.msra.mxu0 0.0
        %1666 = vmatprep.subr.mxu0 0.0
        %1667 = vmatpush1.msra.mxu0 0.0
        %1668 = vmatprep.subr.mxu0 0.0
        %1669 = vmatpush1.msra.mxu0 0.0
        %1670 = vmatprep.subr.mxu0 0.0
        %1671 = vmatpush1.msra.mxu0 0.0
        %1672 = vmatprep.subr.mxu0 0.0
        %1673 = vmatpush1.msra.mxu0 0.0
        %1674 = vmatprep.subr.mxu0 0.0
        %1675 = vmatpush1.msra.mxu0 0.0
        %1676 = vmatprep.subr.mxu0 0.0
        %1677 = vmatpush1.msra.mxu0 0.0
        %1678 = vmatprep.subr.mxu0 0.0
        %1679 = vmatpush1.msra.mxu0 0.0
        %1680 = vmatprep.subr.mxu0 0.0
        %1681 = vmatpush1.msra.mxu0 0.0
        %1682 = vmatprep.subr.mxu0 0.0
        %1683 = vmatpush1.msra.mxu0 0.0
        %1684 = vmatprep.subr.mxu0 0.0
        %1685 = vmatpush1.msra.mxu0 0.0
        %1686 = vmatprep.subr.mxu0 0.0
        %1687 = vmatpush1.msra.mxu0 0.0
        %1688 = vmatprep.subr.mxu0 0.0
        %1689 = vmatpush1.msra.mxu0 0.0
        %1690 = vmatprep.subr.mxu0 0.0
        %1691 = vmatpush1.msra.mxu0 0.0
        %1692 = vmatprep.subr.mxu0 0.0
        %1693 = vmatpush1.msra.mxu0 0.0
        %1694 = vmatprep.mubr.f32.mxu0 0.0
        %1695 = vmatmul.mubr.f32.gmra.mrb[0].mxu0 %v1625
        %v1696 = vpop.f32.mrb[0].mxu0
        %v1697 = vadd.f32 0.0, %v1696
        %v1698 = vpop.f32.mrb[0].mxu0
        %1699 = vdwg.mxu0
        %v1700 = vadd.f32 %v1609, %v1697
        %1701 = vset.pattern.permute.xlu0 16
        %1702 = vperm.xlu0 %1701, %v241
        %v1703 = vpop.permute.xlu0 %1702
        %vm1704 = vcmp.eq.s32.totalorder %v1703, %v244
        %v1705 = vsel %vm1704, 1, 0
        %v1706 = vcvt.s32.f32 %v1705
        %v1707 = vlaneseq
        %v1708 = vshrl.u32 %v1707, 7
        %v1709 = vsub.s32 0, %v1708
        %v1710 = vrot.slane %v216, %v1709
        %v1711 = vmul.f32 %v210, %v1710
        %v1712 = vmul.f32 %v211, %v1710
        %v1713 = vmul.f32 %v212, %v1710
        %v1714 = vmul.f32 %v213, %v1710
        %v1716 = vsel %vm273, %v1706, 0
        %v1719 = vsel %vm277, %v1714, 0
        %1721 = vmatprep.subr.mxu0 0.0
        %1722 = vmatpush1.msra.mxu0 %v1711
        %1723 = vmatprep.subr.mxu0 0.0
        %1724 = vmatpush1.msra.mxu0 %v1712
        %1725 = vmatprep.subr.mxu0 0.0
        %1726 = vmatpush1.msra.mxu0 %v1713
        %1727 = vmatprep.subr.mxu0 0.0
        %1728 = vmatpush1.msra.mxu0 %v1719
        %1729 = vmatprep.subr.mxu0 0.0
        %1730 = vmatpush1.msra.mxu0 0.0
        %1731 = vmatprep.subr.mxu0 0.0
        %1732 = vmatpush1.msra.mxu0 0.0
        %1733 = vmatprep.subr.mxu0 0.0
        %1734 = vmatpush1.msra.mxu0 0.0
        %1735 = vmatprep.subr.mxu0 0.0
        %1736 = vmatpush1.msra.mxu0 0.0
        %1737 = vmatprep.subr.mxu0 0.0
        %1738 = vmatpush1.msra.mxu0 0.0
        %1739 = vmatprep.subr.mxu0 0.0
        %1740 = vmatpush1.msra.mxu0 0.0
        %1741 = vmatprep.subr.mxu0 0.0
        %1742 = vmatpush1.msra.mxu0 0.0
        %1743 = vmatprep.subr.mxu0 0.0
        %1744 = vmatpush1.msra.mxu0 0.0
        %1745 = vmatprep.subr.mxu0 0.0
        %1746 = vmatpush1.msra.mxu0 0.0
        %1747 = vmatprep.subr.mxu0 0.0
        %1748 = vmatpush1.msra.mxu0 0.0
        %1749 = vmatprep.subr.mxu0 0.0
        %1750 = vmatpush1.msra.mxu0 0.0
        %1751 = vmatprep.subr.mxu0 0.0
        %1752 = vmatpush1.msra.mxu0 0.0
        %1753 = vmatprep.subr.mxu0 0.0
        %1754 = vmatpush1.msra.mxu0 0.0
        %1755 = vmatprep.subr.mxu0 0.0
        %1756 = vmatpush1.msra.mxu0 0.0
        %1757 = vmatprep.subr.mxu0 0.0
        %1758 = vmatpush1.msra.mxu0 0.0
        %1759 = vmatprep.subr.mxu0 0.0
        %1760 = vmatpush1.msra.mxu0 0.0
        %1761 = vmatprep.subr.mxu0 0.0
        %1762 = vmatpush1.msra.mxu0 0.0
        %1763 = vmatprep.subr.mxu0 0.0
        %1764 = vmatpush1.msra.mxu0 0.0
        %1765 = vmatprep.subr.mxu0 0.0
        %1766 = vmatpush1.msra.mxu0 0.0
        %1767 = vmatprep.subr.mxu0 0.0
        %1768 = vmatpush1.msra.mxu0 0.0
        %1769 = vmatprep.subr.mxu0 0.0
        %1770 = vmatpush1.msra.mxu0 0.0
        %1771 = vmatprep.subr.mxu0 0.0
        %1772 = vmatpush1.msra.mxu0 0.0
        %1773 = vmatprep.subr.mxu0 0.0
        %1774 = vmatpush1.msra.mxu0 0.0
        %1775 = vmatprep.subr.mxu0 0.0
        %1776 = vmatpush1.msra.mxu0 0.0
        %1777 = vmatprep.subr.mxu0 0.0
        %1778 = vmatpush1.msra.mxu0 0.0
        %1779 = vmatprep.subr.mxu0 0.0
        %1780 = vmatpush1.msra.mxu0 0.0
        %1781 = vmatprep.subr.mxu0 0.0
        %1782 = vmatpush1.msra.mxu0 0.0
        %1783 = vmatprep.subr.mxu0 0.0
        %1784 = vmatpush1.msra.mxu0 0.0
        %1785 = vmatprep.mubr.f32.mxu0 0.0
        %1786 = vmatmul.mubr.f32.gmra.mrb[0].mxu0 %v1716
        %v1787 = vpop.f32.mrb[0].mxu0
        %v1788 = vadd.f32 0.0, %v1787
        %v1789 = vpop.f32.mrb[0].mxu0
        %1790 = vdwg.mxu0
        %v1791 = vadd.f32 %v1700, %v1788
        %1792 = vset.pattern.permute.xlu0 17
        %1793 = vperm.xlu0 %1792, %v241
        %v1794 = vpop.permute.xlu0 %1793
        %vm1795 = vcmp.eq.s32.totalorder %v1794, %v244
        %v1796 = vsel %vm1795, 1, 0
        %v1797 = vcvt.s32.f32 %v1796
        %v1798 = vlaneseq
        %v1799 = vshrl.u32 %v1798, 7
        %v1800 = vsub.s32 1, %v1799
        %v1801 = vrot.slane %v216, %v1800
        %v1802 = vmul.f32 %v210, %v1801
        %v1803 = vmul.f32 %v211, %v1801
        %v1804 = vmul.f32 %v212, %v1801
        %v1805 = vmul.f32 %v213, %v1801
        %v1807 = vsel %vm273, %v1797, 0
        %v1810 = vsel %vm277, %v1805, 0
        %1812 = vmatprep.subr.mxu0 0.0
        %1813 = vmatpush1.msra.mxu0 %v1802
        %1814 = vmatprep.subr.mxu0 0.0
        %1815 = vmatpush1.msra.mxu0 %v1803
        %1816 = vmatprep.subr.mxu0 0.0
        %1817 = vmatpush1.msra.mxu0 %v1804
        %1818 = vmatprep.subr.mxu0 0.0
        %1819 = vmatpush1.msra.mxu0 %v1810
        %1820 = vmatprep.subr.mxu0 0.0
        %1821 = vmatpush1.msra.mxu0 0.0
        %1822 = vmatprep.subr.mxu0 0.0
        %1823 = vmatpush1.msra.mxu0 0.0
        %1824 = vmatprep.subr.mxu0 0.0
        %1825 = vmatpush1.msra.mxu0 0.0
        %1826 = vmatprep.subr.mxu0 0.0
        %1827 = vmatpush1.msra.mxu0 0.0
        %1828 = vmatprep.subr.mxu0 0.0
        %1829 = vmatpush1.msra.mxu0 0.0
        %1830 = vmatprep.subr.mxu0 0.0
        %1831 = vmatpush1.msra.mxu0 0.0
        %1832 = vmatprep.subr.mxu0 0.0
        %1833 = vmatpush1.msra.mxu0 0.0
        %1834 = vmatprep.subr.mxu0 0.0
        %1835 = vmatpush1.msra.mxu0 0.0
        %1836 = vmatprep.subr.mxu0 0.0
        %1837 = vmatpush1.msra.mxu0 0.0
        %1838 = vmatprep.subr.mxu0 0.0
        %1839 = vmatpush1.msra.mxu0 0.0
        %1840 = vmatprep.subr.mxu0 0.0
        %1841 = vmatpush1.msra.mxu0 0.0
        %1842 = vmatprep.subr.mxu0 0.0
        %1843 = vmatpush1.msra.mxu0 0.0
        %1844 = vmatprep.subr.mxu0 0.0
        %1845 = vmatpush1.msra.mxu0 0.0
        %1846 = vmatprep.subr.mxu0 0.0
        %1847 = vmatpush1.msra.mxu0 0.0
        %1848 = vmatprep.subr.mxu0 0.0
        %1849 = vmatpush1.msra.mxu0 0.0
        %1850 = vmatprep.subr.mxu0 0.0
        %1851 = vmatpush1.msra.mxu0 0.0
        %1852 = vmatprep.subr.mxu0 0.0
        %1853 = vmatpush1.msra.mxu0 0.0
        %1854 = vmatprep.subr.mxu0 0.0
        %1855 = vmatpush1.msra.mxu0 0.0
        %1856 = vmatprep.subr.mxu0 0.0
        %1857 = vmatpush1.msra.mxu0 0.0
        %1858 = vmatprep.subr.mxu0 0.0
        %1859 = vmatpush1.msra.mxu0 0.0
        %1860 = vmatprep.subr.mxu0 0.0
        %1861 = vmatpush1.msra.mxu0 0.0
        %1862 = vmatprep.subr.mxu0 0.0
        %1863 = vmatpush1.msra.mxu0 0.0
        %1864 = vmatprep.subr.mxu0 0.0
        %1865 = vmatpush1.msra.mxu0 0.0
        %1866 = vmatprep.subr.mxu0 0.0
        %1867 = vmatpush1.msra.mxu0 0.0
        %1868 = vmatprep.subr.mxu0 0.0
        %1869 = vmatpush1.msra.mxu0 0.0
        %1870 = vmatprep.subr.mxu0 0.0
        %1871 = vmatpush1.msra.mxu0 0.0
        %1872 = vmatprep.subr.mxu0 0.0
        %1873 = vmatpush1.msra.mxu0 0.0
        %1874 = vmatprep.subr.mxu0 0.0
        %1875 = vmatpush1.msra.mxu0 0.0
        %1876 = vmatprep.mubr.f32.mxu0 0.0
        %1877 = vmatmul.mubr.f32.gmra.mrb[0].mxu0 %v1807
        %v1878 = vpop.f32.mrb[0].mxu0
        %v1879 = vadd.f32 0.0, %v1878
        %v1880 = vpop.f32.mrb[0].mxu0
        %1881 = vdwg.mxu0
        %v1882 = vadd.f32 %v1791, %v1879
        %1883 = vset.pattern.permute.xlu0 18
        %1884 = vperm.xlu0 %1883, %v241
        %v1885 = vpop.permute.xlu0 %1884
        %vm1886 = vcmp.eq.s32.totalorder %v1885, %v244
        %v1887 = vsel %vm1886, 1, 0
        %v1888 = vcvt.s32.f32 %v1887
        %v1889 = vlaneseq
        %v1890 = vshrl.u32 %v1889, 7
        %v1891 = vsub.s32 2, %v1890
        %v1892 = vrot.slane %v216, %v1891
        %v1893 = vmul.f32 %v210, %v1892
        %v1894 = vmul.f32 %v211, %v1892
        %v1895 = vmul.f32 %v212, %v1892
        %v1896 = vmul.f32 %v213, %v1892
        %v1898 = vsel %vm273, %v1888, 0
        %v1901 = vsel %vm277, %v1896, 0
        %1903 = vmatprep.subr.mxu0 0.0
        %1904 = vmatpush1.msra.mxu0 %v1893
        %1905 = vmatprep.subr.mxu0 0.0
        %1906 = vmatpush1.msra.mxu0 %v1894
        %1907 = vmatprep.subr.mxu0 0.0
        %1908 = vmatpush1.msra.mxu0 %v1895
        %1909 = vmatprep.subr.mxu0 0.0
        %1910 = vmatpush1.msra.mxu0 %v1901
        %1911 = vmatprep.subr.mxu0 0.0
        %1912 = vmatpush1.msra.mxu0 0.0
        %1913 = vmatprep.subr.mxu0 0.0
        %1914 = vmatpush1.msra.mxu0 0.0
        %1915 = vmatprep.subr.mxu0 0.0
        %1916 = vmatpush1.msra.mxu0 0.0
        %1917 = vmatprep.subr.mxu0 0.0
        %1918 = vmatpush1.msra.mxu0 0.0
        %1919 = vmatprep.subr.mxu0 0.0
        %1920 = vmatpush1.msra.mxu0 0.0
        %1921 = vmatprep.subr.mxu0 0.0
        %1922 = vmatpush1.msra.mxu0 0.0
        %1923 = vmatprep.subr.mxu0 0.0
        %1924 = vmatpush1.msra.mxu0 0.0
        %1925 = vmatprep.subr.mxu0 0.0
        %1926 = vmatpush1.msra.mxu0 0.0
        %1927 = vmatprep.subr.mxu0 0.0
        %1928 = vmatpush1.msra.mxu0 0.0
        %1929 = vmatprep.subr.mxu0 0.0
        %1930 = vmatpush1.msra.mxu0 0.0
        %1931 = vmatprep.subr.mxu0 0.0
        %1932 = vmatpush1.msra.mxu0 0.0
        %1933 = vmatprep.subr.mxu0 0.0
        %1934 = vmatpush1.msra.mxu0 0.0
        %1935 = vmatprep.subr.mxu0 0.0
        %1936 = vmatpush1.msra.mxu0 0.0
        %1937 = vmatprep.subr.mxu0 0.0
        %1938 = vmatpush1.msra.mxu0 0.0
        %1939 = vmatprep.subr.mxu0 0.0
        %1940 = vmatpush1.msra.mxu0 0.0
        %1941 = vmatprep.subr.mxu0 0.0
        %1942 = vmatpush1.msra.mxu0 0.0
        %1943 = vmatprep.subr.mxu0 0.0
        %1944 = vmatpush1.msra.mxu0 0.0
        %1945 = vmatprep.subr.mxu0 0.0
        %1946 = vmatpush1.msra.mxu0 0.0
        %1947 = vmatprep.subr.mxu0 0.0
        %1948 = vmatpush1.msra.mxu0 0.0
        %1949 = vmatprep.subr.mxu0 0.0
        %1950 = vmatpush1.msra.mxu0 0.0
        %1951 = vmatprep.subr.mxu0 0.0
        %1952 = vmatpush1.msra.mxu0 0.0
        %1953 = vmatprep.subr.mxu0 0.0
        %1954 = vmatpush1.msra.mxu0 0.0
        %1955 = vmatprep.subr.mxu0 0.0
        %1956 = vmatpush1.msra.mxu0 0.0
        %1957 = vmatprep.subr.mxu0 0.0
        %1958 = vmatpush1.msra.mxu0 0.0
        %1959 = vmatprep.subr.mxu0 0.0
        %1960 = vmatpush1.msra.mxu0 0.0
        %1961 = vmatprep.subr.mxu0 0.0
        %1962 = vmatpush1.msra.mxu0 0.0
        %1963 = vmatprep.subr.mxu0 0.0
        %1964 = vmatpush1.msra.mxu0 0.0
        %1965 = vmatprep.subr.mxu0 0.0
        %1966 = vmatpush1.msra.mxu0 0.0
        %1967 = vmatprep.mubr.f32.mxu0 0.0
        %1968 = vmatmul.mubr.f32.gmra.mrb[0].mxu0 %v1898
        %v1969 = vpop.f32.mrb[0].mxu0
        %v1970 = vadd.f32 0.0, %v1969
        %v1971 = vpop.f32.mrb[0].mxu0
        %1972 = vdwg.mxu0
        %v1973 = vadd.f32 %v1882, %v1970
        %1974 = vset.pattern.permute.xlu0 19
        %1975 = vperm.xlu0 %1974, %v241
        %v1976 = vpop.permute.xlu0 %1975
        %vm1977 = vcmp.eq.s32.totalorder %v1976, %v244
        %v1978 = vsel %vm1977, 1, 0
        %v1979 = vcvt.s32.f32 %v1978
        %v1980 = vlaneseq
        %v1981 = vshrl.u32 %v1980, 7
        %v1982 = vsub.s32 3, %v1981
        %v1983 = vrot.slane %v216, %v1982
        %v1984 = vmul.f32 %v210, %v1983
        %v1985 = vmul.f32 %v211, %v1983
        %v1986 = vmul.f32 %v212, %v1983
        %v1987 = vmul.f32 %v213, %v1983
        %v1989 = vsel %vm273, %v1979, 0
        %v1992 = vsel %vm277, %v1987, 0
        %1994 = vmatprep.subr.mxu0 0.0
        %1995 = vmatpush1.msra.mxu0 %v1984
        %1996 = vmatprep.subr.mxu0 0.0
        %1997 = vmatpush1.msra.mxu0 %v1985
        %1998 = vmatprep.subr.mxu0 0.0
        %1999 = vmatpush1.msra.mxu0 %v1986
        %2000 = vmatprep.subr.mxu0 0.0
        %2001 = vmatpush1.msra.mxu0 %v1992
        %2002 = vmatprep.subr.mxu0 0.0
        %2003 = vmatpush1.msra.mxu0 0.0
        %2004 = vmatprep.subr.mxu0 0.0
        %2005 = vmatpush1.msra.mxu0 0.0
        %2006 = vmatprep.subr.mxu0 0.0
        %2007 = vmatpush1.msra.mxu0 0.0
        %2008 = vmatprep.subr.mxu0 0.0
        %2009 = vmatpush1.msra.mxu0 0.0
        %2010 = vmatprep.subr.mxu0 0.0
        %2011 = vmatpush1.msra.mxu0 0.0
        %2012 = vmatprep.subr.mxu0 0.0
        %2013 = vmatpush1.msra.mxu0 0.0
        %2014 = vmatprep.subr.mxu0 0.0
        %2015 = vmatpush1.msra.mxu0 0.0
        %2016 = vmatprep.subr.mxu0 0.0
        %2017 = vmatpush1.msra.mxu0 0.0
        %2018 = vmatprep.subr.mxu0 0.0
        %2019 = vmatpush1.msra.mxu0 0.0
        %2020 = vmatprep.subr.mxu0 0.0
        %2021 = vmatpush1.msra.mxu0 0.0
        %2022 = vmatprep.subr.mxu0 0.0
        %2023 = vmatpush1.msra.mxu0 0.0
        %2024 = vmatprep.subr.mxu0 0.0
        %2025 = vmatpush1.msra.mxu0 0.0
        %2026 = vmatprep.subr.mxu0 0.0
        %2027 = vmatpush1.msra.mxu0 0.0
        %2028 = vmatprep.subr.mxu0 0.0
        %2029 = vmatpush1.msra.mxu0 0.0
        %2030 = vmatprep.subr.mxu0 0.0
        %2031 = vmatpush1.msra.mxu0 0.0
        %2032 = vmatprep.subr.mxu0 0.0
        %2033 = vmatpush1.msra.mxu0 0.0
        %2034 = vmatprep.subr.mxu0 0.0
        %2035 = vmatpush1.msra.mxu0 0.0
        %2036 = vmatprep.subr.mxu0 0.0
        %2037 = vmatpush1.msra.mxu0 0.0
        %2038 = vmatprep.subr.mxu0 0.0
        %2039 = vmatpush1.msra.mxu0 0.0
        %2040 = vmatprep.subr.mxu0 0.0
        %2041 = vmatpush1.msra.mxu0 0.0
        %2042 = vmatprep.subr.mxu0 0.0
        %2043 = vmatpush1.msra.mxu0 0.0
        %2044 = vmatprep.subr.mxu0 0.0
        %2045 = vmatpush1.msra.mxu0 0.0
        %2046 = vmatprep.subr.mxu0 0.0
        %2047 = vmatpush1.msra.mxu0 0.0
        %2048 = vmatprep.subr.mxu0 0.0
        %2049 = vmatpush1.msra.mxu0 0.0
        %2050 = vmatprep.subr.mxu0 0.0
        %2051 = vmatpush1.msra.mxu0 0.0
        %2052 = vmatprep.subr.mxu0 0.0
        %2053 = vmatpush1.msra.mxu0 0.0
        %2054 = vmatprep.subr.mxu0 0.0
        %2055 = vmatpush1.msra.mxu0 0.0
        %2056 = vmatprep.subr.mxu0 0.0
        %2057 = vmatpush1.msra.mxu0 0.0
        %2058 = vmatprep.mubr.f32.mxu0 0.0
        %2059 = vmatmul.mubr.f32.gmra.mrb[0].mxu0 %v1989
        %v2060 = vpop.f32.mrb[0].mxu0
        %v2061 = vadd.f32 0.0, %v2060
        %v2062 = vpop.f32.mrb[0].mxu0
        %2063 = vdwg.mxu0
        %v2064 = vadd.f32 %v1973, %v2061
        %2065 = vset.pattern.permute.xlu0 20
        %2066 = vperm.xlu0 %2065, %v241
        %v2067 = vpop.permute.xlu0 %2066
        %vm2068 = vcmp.eq.s32.totalorder %v2067, %v244
        %v2069 = vsel %vm2068, 1, 0
        %v2070 = vcvt.s32.f32 %v2069
        %v2071 = vlaneseq
        %v2072 = vshrl.u32 %v2071, 7
        %v2073 = vsub.s32 4, %v2072
        %v2074 = vrot.slane %v216, %v2073
        %v2075 = vmul.f32 %v210, %v2074
        %v2076 = vmul.f32 %v211, %v2074
        %v2077 = vmul.f32 %v212, %v2074
        %v2078 = vmul.f32 %v213, %v2074
        %v2080 = vsel %vm273, %v2070, 0
        %v2083 = vsel %vm277, %v2078, 0
        %2085 = vmatprep.subr.mxu0 0.0
        %2086 = vmatpush1.msra.mxu0 %v2075
        %2087 = vmatprep.subr.mxu0 0.0
        %2088 = vmatpush1.msra.mxu0 %v2076
        %2089 = vmatprep.subr.mxu0 0.0
        %2090 = vmatpush1.msra.mxu0 %v2077
        %2091 = vmatprep.subr.mxu0 0.0
        %2092 = vmatpush1.msra.mxu0 %v2083
        %2093 = vmatprep.subr.mxu0 0.0
        %2094 = vmatpush1.msra.mxu0 0.0
        %2095 = vmatprep.subr.mxu0 0.0
        %2096 = vmatpush1.msra.mxu0 0.0
        %2097 = vmatprep.subr.mxu0 0.0
        %2098 = vmatpush1.msra.mxu0 0.0
        %2099 = vmatprep.subr.mxu0 0.0
        %2100 = vmatpush1.msra.mxu0 0.0
        %2101 = vmatprep.subr.mxu0 0.0
        %2102 = vmatpush1.msra.mxu0 0.0
        %2103 = vmatprep.subr.mxu0 0.0
        %2104 = vmatpush1.msra.mxu0 0.0
        %2105 = vmatprep.subr.mxu0 0.0
        %2106 = vmatpush1.msra.mxu0 0.0
        %2107 = vmatprep.subr.mxu0 0.0
        %2108 = vmatpush1.msra.mxu0 0.0
        %2109 = vmatprep.subr.mxu0 0.0
        %2110 = vmatpush1.msra.mxu0 0.0
        %2111 = vmatprep.subr.mxu0 0.0
        %2112 = vmatpush1.msra.mxu0 0.0
        %2113 = vmatprep.subr.mxu0 0.0
        %2114 = vmatpush1.msra.mxu0 0.0
        %2115 = vmatprep.subr.mxu0 0.0
        %2116 = vmatpush1.msra.mxu0 0.0
        %2117 = vmatprep.subr.mxu0 0.0
        %2118 = vmatpush1.msra.mxu0 0.0
        %2119 = vmatprep.subr.mxu0 0.0
        %2120 = vmatpush1.msra.mxu0 0.0
        %2121 = vmatprep.subr.mxu0 0.0
        %2122 = vmatpush1.msra.mxu0 0.0
        %2123 = vmatprep.subr.mxu0 0.0
        %2124 = vmatpush1.msra.mxu0 0.0
        %2125 = vmatprep.subr.mxu0 0.0
        %2126 = vmatpush1.msra.mxu0 0.0
        %2127 = vmatprep.subr.mxu0 0.0
        %2128 = vmatpush1.msra.mxu0 0.0
        %2129 = vmatprep.subr.mxu0 0.0
        %2130 = vmatpush1.msra.mxu0 0.0
        %2131 = vmatprep.subr.mxu0 0.0
        %2132 = vmatpush1.msra.mxu0 0.0
        %2133 = vmatprep.subr.mxu0 0.0
        %2134 = vmatpush1.msra.mxu0 0.0
        %2135 = vmatprep.subr.mxu0 0.0
        %2136 = vmatpush1.msra.mxu0 0.0
        %2137 = vmatprep.subr.mxu0 0.0
        %2138 = vmatpush1.msra.mxu0 0.0
        %2139 = vmatprep.subr.mxu0 0.0
        %2140 = vmatpush1.msra.mxu0 0.0
        %2141 = vmatprep.subr.mxu0 0.0
        %2142 = vmatpush1.msra.mxu0 0.0
        %2143 = vmatprep.subr.mxu0 0.0
        %2144 = vmatpush1.msra.mxu0 0.0
        %2145 = vmatprep.subr.mxu0 0.0
        %2146 = vmatpush1.msra.mxu0 0.0
        %2147 = vmatprep.subr.mxu0 0.0
        %2148 = vmatpush1.msra.mxu0 0.0
        %2149 = vmatprep.mubr.f32.mxu0 0.0
        %2150 = vmatmul.mubr.f32.gmra.mrb[0].mxu0 %v2080
        %v2151 = vpop.f32.mrb[0].mxu0
        %v2152 = vadd.f32 0.0, %v2151
        %v2153 = vpop.f32.mrb[0].mxu0
        %2154 = vdwg.mxu0
        %v2155 = vadd.f32 %v2064, %v2152
        %2156 = vset.pattern.permute.xlu0 21
        %2157 = vperm.xlu0 %2156, %v241
        %v2158 = vpop.permute.xlu0 %2157
        %vm2159 = vcmp.eq.s32.totalorder %v2158, %v244
        %v2160 = vsel %vm2159, 1, 0
        %v2161 = vcvt.s32.f32 %v2160
        %v2162 = vlaneseq
        %v2163 = vshrl.u32 %v2162, 7
        %v2164 = vsub.s32 5, %v2163
        %v2165 = vrot.slane %v216, %v2164
        %v2166 = vmul.f32 %v210, %v2165
        %v2167 = vmul.f32 %v211, %v2165
        %v2168 = vmul.f32 %v212, %v2165
        %v2169 = vmul.f32 %v213, %v2165
        %v2171 = vsel %vm273, %v2161, 0
        %v2174 = vsel %vm277, %v2169, 0
        %2176 = vmatprep.subr.mxu0 0.0
        %2177 = vmatpush1.msra.mxu0 %v2166
        %2178 = vmatprep.subr.mxu0 0.0
        %2179 = vmatpush1.msra.mxu0 %v2167
        %2180 = vmatprep.subr.mxu0 0.0
        %2181 = vmatpush1.msra.mxu0 %v2168
        %2182 = vmatprep.subr.mxu0 0.0
        %2183 = vmatpush1.msra.mxu0 %v2174
        %2184 = vmatprep.subr.mxu0 0.0
        %2185 = vmatpush1.msra.mxu0 0.0
        %2186 = vmatprep.subr.mxu0 0.0
        %2187 = vmatpush1.msra.mxu0 0.0
        %2188 = vmatprep.subr.mxu0 0.0
        %2189 = vmatpush1.msra.mxu0 0.0
        %2190 = vmatprep.subr.mxu0 0.0
        %2191 = vmatpush1.msra.mxu0 0.0
        %2192 = vmatprep.subr.mxu0 0.0
        %2193 = vmatpush1.msra.mxu0 0.0
        %2194 = vmatprep.subr.mxu0 0.0
        %2195 = vmatpush1.msra.mxu0 0.0
        %2196 = vmatprep.subr.mxu0 0.0
        %2197 = vmatpush1.msra.mxu0 0.0
        %2198 = vmatprep.subr.mxu0 0.0
        %2199 = vmatpush1.msra.mxu0 0.0
        %2200 = vmatprep.subr.mxu0 0.0
        %2201 = vmatpush1.msra.mxu0 0.0
        %2202 = vmatprep.subr.mxu0 0.0
        %2203 = vmatpush1.msra.mxu0 0.0
        %2204 = vmatprep.subr.mxu0 0.0
        %2205 = vmatpush1.msra.mxu0 0.0
        %2206 = vmatprep.subr.mxu0 0.0
        %2207 = vmatpush1.msra.mxu0 0.0
        %2208 = vmatprep.subr.mxu0 0.0
        %2209 = vmatpush1.msra.mxu0 0.0
        %2210 = vmatprep.subr.mxu0 0.0
        %2211 = vmatpush1.msra.mxu0 0.0
        %2212 = vmatprep.subr.mxu0 0.0
        %2213 = vmatpush1.msra.mxu0 0.0
        %2214 = vmatprep.subr.mxu0 0.0
        %2215 = vmatpush1.msra.mxu0 0.0
        %2216 = vmatprep.subr.mxu0 0.0
        %2217 = vmatpush1.msra.mxu0 0.0
        %2218 = vmatprep.subr.mxu0 0.0
        %2219 = vmatpush1.msra.mxu0 0.0
        %2220 = vmatprep.subr.mxu0 0.0
        %2221 = vmatpush1.msra.mxu0 0.0
        %2222 = vmatprep.subr.mxu0 0.0
        %2223 = vmatpush1.msra.mxu0 0.0
        %2224 = vmatprep.subr.mxu0 0.0
        %2225 = vmatpush1.msra.mxu0 0.0
        %2226 = vmatprep.subr.mxu0 0.0
        %2227 = vmatpush1.msra.mxu0 0.0
        %2228 = vmatprep.subr.mxu0 0.0
        %2229 = vmatpush1.msra.mxu0 0.0
        %2230 = vmatprep.subr.mxu0 0.0
        %2231 = vmatpush1.msra.mxu0 0.0
        %2232 = vmatprep.subr.mxu0 0.0
        %2233 = vmatpush1.msra.mxu0 0.0
        %2234 = vmatprep.subr.mxu0 0.0
        %2235 = vmatpush1.msra.mxu0 0.0
        %2236 = vmatprep.subr.mxu0 0.0
        %2237 = vmatpush1.msra.mxu0 0.0
        %2238 = vmatprep.subr.mxu0 0.0
        %2239 = vmatpush1.msra.mxu0 0.0
        %2240 = vmatprep.mubr.f32.mxu0 0.0
        %2241 = vmatmul.mubr.f32.gmra.mrb[0].mxu0 %v2171
        %v2242 = vpop.f32.mrb[0].mxu0
        %v2243 = vadd.f32 0.0, %v2242
        %v2244 = vpop.f32.mrb[0].mxu0
        %2245 = vdwg.mxu0
        %v2246 = vadd.f32 %v2155, %v2243
        %2247 = vset.pattern.permute.xlu0 22
        %2248 = vperm.xlu0 %2247, %v241
        %v2249 = vpop.permute.xlu0 %2248
        %vm2250 = vcmp.eq.s32.totalorder %v2249, %v244
        %v2251 = vsel %vm2250, 1, 0
        %v2252 = vcvt.s32.f32 %v2251
        %v2253 = vlaneseq
        %v2254 = vshrl.u32 %v2253, 7
        %v2255 = vsub.s32 6, %v2254
        %v2256 = vrot.slane %v216, %v2255
        %v2257 = vmul.f32 %v210, %v2256
        %v2258 = vmul.f32 %v211, %v2256
        %v2259 = vmul.f32 %v212, %v2256
        %v2260 = vmul.f32 %v213, %v2256
        %v2262 = vsel %vm273, %v2252, 0
        %v2265 = vsel %vm277, %v2260, 0
        %2267 = vmatprep.subr.mxu0 0.0
        %2268 = vmatpush1.msra.mxu0 %v2257
        %2269 = vmatprep.subr.mxu0 0.0
        %2270 = vmatpush1.msra.mxu0 %v2258
        %2271 = vmatprep.subr.mxu0 0.0
        %2272 = vmatpush1.msra.mxu0 %v2259
        %2273 = vmatprep.subr.mxu0 0.0
        %2274 = vmatpush1.msra.mxu0 %v2265
        %2275 = vmatprep.subr.mxu0 0.0
        %2276 = vmatpush1.msra.mxu0 0.0
        %2277 = vmatprep.subr.mxu0 0.0
        %2278 = vmatpush1.msra.mxu0 0.0
        %2279 = vmatprep.subr.mxu0 0.0
        %2280 = vmatpush1.msra.mxu0 0.0
        %2281 = vmatprep.subr.mxu0 0.0
        %2282 = vmatpush1.msra.mxu0 0.0
        %2283 = vmatprep.subr.mxu0 0.0
        %2284 = vmatpush1.msra.mxu0 0.0
        %2285 = vmatprep.subr.mxu0 0.0
        %2286 = vmatpush1.msra.mxu0 0.0
        %2287 = vmatprep.subr.mxu0 0.0
        %2288 = vmatpush1.msra.mxu0 0.0
        %2289 = vmatprep.subr.mxu0 0.0
        %2290 = vmatpush1.msra.mxu0 0.0
        %2291 = vmatprep.subr.mxu0 0.0
        %2292 = vmatpush1.msra.mxu0 0.0
        %2293 = vmatprep.subr.mxu0 0.0
        %2294 = vmatpush1.msra.mxu0 0.0
        %2295 = vmatprep.subr.mxu0 0.0
        %2296 = vmatpush1.msra.mxu0 0.0
        %2297 = vmatprep.subr.mxu0 0.0
        %2298 = vmatpush1.msra.mxu0 0.0
        %2299 = vmatprep.subr.mxu0 0.0
        %2300 = vmatpush1.msra.mxu0 0.0
        %2301 = vmatprep.subr.mxu0 0.0
        %2302 = vmatpush1.msra.mxu0 0.0
        %2303 = vmatprep.subr.mxu0 0.0
        %2304 = vmatpush1.msra.mxu0 0.0
        %2305 = vmatprep.subr.mxu0 0.0
        %2306 = vmatpush1.msra.mxu0 0.0
        %2307 = vmatprep.subr.mxu0 0.0
        %2308 = vmatpush1.msra.mxu0 0.0
        %2309 = vmatprep.subr.mxu0 0.0
        %2310 = vmatpush1.msra.mxu0 0.0
        %2311 = vmatprep.subr.mxu0 0.0
        %2312 = vmatpush1.msra.mxu0 0.0
        %2313 = vmatprep.subr.mxu0 0.0
        %2314 = vmatpush1.msra.mxu0 0.0
        %2315 = vmatprep.subr.mxu0 0.0
        %2316 = vmatpush1.msra.mxu0 0.0
        %2317 = vmatprep.subr.mxu0 0.0
        %2318 = vmatpush1.msra.mxu0 0.0
        %2319 = vmatprep.subr.mxu0 0.0
        %2320 = vmatpush1.msra.mxu0 0.0
        %2321 = vmatprep.subr.mxu0 0.0
        %2322 = vmatpush1.msra.mxu0 0.0
        %2323 = vmatprep.subr.mxu0 0.0
        %2324 = vmatpush1.msra.mxu0 0.0
        %2325 = vmatprep.subr.mxu0 0.0
        %2326 = vmatpush1.msra.mxu0 0.0
        %2327 = vmatprep.subr.mxu0 0.0
        %2328 = vmatpush1.msra.mxu0 0.0
        %2329 = vmatprep.subr.mxu0 0.0
        %2330 = vmatpush1.msra.mxu0 0.0
        %2331 = vmatprep.mubr.f32.mxu0 0.0
        %2332 = vmatmul.mubr.f32.gmra.mrb[0].mxu0 %v2262
        %v2333 = vpop.f32.mrb[0].mxu0
        %v2334 = vadd.f32 0.0, %v2333
        %v2335 = vpop.f32.mrb[0].mxu0
        %2336 = vdwg.mxu0
        %v2337 = vadd.f32 %v2246, %v2334
        %2338 = vset.pattern.permute.xlu0 23
        %2339 = vperm.xlu0 %2338, %v241
        %v2340 = vpop.permute.xlu0 %2339
        %vm2341 = vcmp.eq.s32.totalorder %v2340, %v244
        %v2342 = vsel %vm2341, 1, 0
        %v2343 = vcvt.s32.f32 %v2342
        %v2344 = vlaneseq
        %v2345 = vshrl.u32 %v2344, 7
        %v2346 = vsub.s32 7, %v2345
        %v2347 = vrot.slane %v216, %v2346
        %v2348 = vmul.f32 %v210, %v2347
        %v2349 = vmul.f32 %v211, %v2347
        %v2350 = vmul.f32 %v212, %v2347
        %v2351 = vmul.f32 %v213, %v2347
        %v2353 = vsel %vm273, %v2343, 0
        %v2356 = vsel %vm277, %v2351, 0
        %2358 = vmatprep.subr.mxu0 0.0
        %2359 = vmatpush1.msra.mxu0 %v2348
        %2360 = vmatprep.subr.mxu0 0.0
        %2361 = vmatpush1.msra.mxu0 %v2349
        %2362 = vmatprep.subr.mxu0 0.0
        %2363 = vmatpush1.msra.mxu0 %v2350
        %2364 = vmatprep.subr.mxu0 0.0
        %2365 = vmatpush1.msra.mxu0 %v2356
        %2366 = vmatprep.subr.mxu0 0.0
        %2367 = vmatpush1.msra.mxu0 0.0
        %2368 = vmatprep.subr.mxu0 0.0
        %2369 = vmatpush1.msra.mxu0 0.0
        %2370 = vmatprep.subr.mxu0 0.0
        %2371 = vmatpush1.msra.mxu0 0.0
        %2372 = vmatprep.subr.mxu0 0.0
        %2373 = vmatpush1.msra.mxu0 0.0
        %2374 = vmatprep.subr.mxu0 0.0
        %2375 = vmatpush1.msra.mxu0 0.0
        %2376 = vmatprep.subr.mxu0 0.0
        %2377 = vmatpush1.msra.mxu0 0.0
        %2378 = vmatprep.subr.mxu0 0.0
        %2379 = vmatpush1.msra.mxu0 0.0
        %2380 = vmatprep.subr.mxu0 0.0
        %2381 = vmatpush1.msra.mxu0 0.0
        %2382 = vmatprep.subr.mxu0 0.0
        %2383 = vmatpush1.msra.mxu0 0.0
        %2384 = vmatprep.subr.mxu0 0.0
        %2385 = vmatpush1.msra.mxu0 0.0
        %2386 = vmatprep.subr.mxu0 0.0
        %2387 = vmatpush1.msra.mxu0 0.0
        %2388 = vmatprep.subr.mxu0 0.0
        %2389 = vmatpush1.msra.mxu0 0.0
        %2390 = vmatprep.subr.mxu0 0.0
        %2391 = vmatpush1.msra.mxu0 0.0
        %2392 = vmatprep.subr.mxu0 0.0
        %2393 = vmatpush1.msra.mxu0 0.0
        %2394 = vmatprep.subr.mxu0 0.0
        %2395 = vmatpush1.msra.mxu0 0.0
        %2396 = vmatprep.subr.mxu0 0.0
        %2397 = vmatpush1.msra.mxu0 0.0
        %2398 = vmatprep.subr.mxu0 0.0
        %2399 = vmatpush1.msra.mxu0 0.0
        %2400 = vmatprep.subr.mxu0 0.0
        %2401 = vmatpush1.msra.mxu0 0.0
        %2402 = vmatprep.subr.mxu0 0.0
        %2403 = vmatpush1.msra.mxu0 0.0
        %2404 = vmatprep.subr.mxu0 0.0
        %2405 = vmatpush1.msra.mxu0 0.0
        %2406 = vmatprep.subr.mxu0 0.0
        %2407 = vmatpush1.msra.mxu0 0.0
        %2408 = vmatprep.subr.mxu0 0.0
        %2409 = vmatpush1.msra.mxu0 0.0
        %2410 = vmatprep.subr.mxu0 0.0
        %2411 = vmatpush1.msra.mxu0 0.0
        %2412 = vmatprep.subr.mxu0 0.0
        %2413 = vmatpush1.msra.mxu0 0.0
        %2414 = vmatprep.subr.mxu0 0.0
        %2415 = vmatpush1.msra.mxu0 0.0
        %2416 = vmatprep.subr.mxu0 0.0
        %2417 = vmatpush1.msra.mxu0 0.0
        %2418 = vmatprep.subr.mxu0 0.0
        %2419 = vmatpush1.msra.mxu0 0.0
        %2420 = vmatprep.subr.mxu0 0.0
        %2421 = vmatpush1.msra.mxu0 0.0
        %2422 = vmatprep.mubr.f32.mxu0 0.0
        %2423 = vmatmul.mubr.f32.gmra.mrb[0].mxu0 %v2353
        %v2424 = vpop.f32.mrb[0].mxu0
        %v2425 = vadd.f32 0.0, %v2424
        %v2426 = vpop.f32.mrb[0].mxu0
        %2427 = vdwg.mxu0
        %v2428 = vadd.f32 %v2337, %v2425
        %2429 = vset.pattern.permute.xlu0 0
        %2430 = vperm.xlu0 %2429, %v242
        %v2431 = vpop.permute.xlu0 %2430
        %vm2432 = vcmp.eq.s32.totalorder %v2431, %v244
        %v2433 = vsel %vm2432, 1, 0
        %v2434 = vcvt.s32.f32 %v2433
        %v2435 = vlaneseq
        %v2436 = vshrl.u32 %v2435, 7
        %v2437 = vsub.s32 0, %v2436
        %v2438 = vrot.slane %v217, %v2437
        %v2439 = vmul.f32 %v210, %v2438
        %v2440 = vmul.f32 %v211, %v2438
        %v2441 = vmul.f32 %v212, %v2438
        %v2442 = vmul.f32 %v213, %v2438
        %2443 = vset.pattern.permute.xlu0 1
        %2444 = vperm.xlu0 %2443, %v242
        %v2445 = vpop.permute.xlu0 %2444
        %vm2446 = vcmp.eq.s32.totalorder %v2445, %v244
        %v2447 = vsel %vm2446, 1, 0
        %v2448 = vcvt.s32.f32 %v2447
        %v2449 = vlaneseq
        %v2450 = vshrl.u32 %v2449, 7
        %v2451 = vsub.s32 1, %v2450
        %v2452 = vrot.slane %v217, %v2451
        %v2453 = vmul.f32 %v210, %v2452
        %v2454 = vmul.f32 %v211, %v2452
        %v2455 = vmul.f32 %v212, %v2452
        %v2456 = vmul.f32 %v213, %v2452
        %v2458 = vsel %vm273, %v2448, 0
        %v2461 = vsel %vm277, %v2456, 0
        %2463 = vmatprep.subr.mxu0 0.0
        %2464 = vmatpush1.msra.mxu0 %v2453
        %2465 = vmatprep.subr.mxu0 0.0
        %2466 = vmatpush1.msra.mxu0 %v2454
        %2467 = vmatprep.subr.mxu0 0.0
        %2468 = vmatpush1.msra.mxu0 %v2455
        %2469 = vmatprep.subr.mxu0 0.0
        %2470 = vmatpush1.msra.mxu0 %v2461
        %2471 = vmatprep.subr.mxu0 0.0
        %2472 = vmatpush1.msra.mxu0 0.0
        %2473 = vmatprep.subr.mxu0 0.0
        %2474 = vmatpush1.msra.mxu0 0.0
        %2475 = vmatprep.subr.mxu0 0.0
        %2476 = vmatpush1.msra.mxu0 0.0
        %2477 = vmatprep.subr.mxu0 0.0
        %2478 = vmatpush1.msra.mxu0 0.0
        %2479 = vmatprep.subr.mxu0 0.0
        %2480 = vmatpush1.msra.mxu0 0.0
        %2481 = vmatprep.subr.mxu0 0.0
        %2482 = vmatpush1.msra.mxu0 0.0
        %2483 = vmatprep.subr.mxu0 0.0
        %2484 = vmatpush1.msra.mxu0 0.0
        %2485 = vmatprep.subr.mxu0 0.0
        %2486 = vmatpush1.msra.mxu0 0.0
        %2487 = vmatprep.subr.mxu0 0.0
        %2488 = vmatpush1.msra.mxu0 0.0
        %2489 = vmatprep.subr.mxu0 0.0
        %2490 = vmatpush1.msra.mxu0 0.0
        %2491 = vmatprep.subr.mxu0 0.0
        %2492 = vmatpush1.msra.mxu0 0.0
        %2493 = vmatprep.subr.mxu0 0.0
        %2494 = vmatpush1.msra.mxu0 0.0
        %2495 = vmatprep.subr.mxu0 0.0
        %2496 = vmatpush1.msra.mxu0 0.0
        %2497 = vmatprep.subr.mxu0 0.0
        %2498 = vmatpush1.msra.mxu0 0.0
        %2499 = vmatprep.subr.mxu0 0.0
        %2500 = vmatpush1.msra.mxu0 0.0
        %2501 = vmatprep.subr.mxu0 0.0
        %2502 = vmatpush1.msra.mxu0 0.0
        %2503 = vmatprep.subr.mxu0 0.0
        %2504 = vmatpush1.msra.mxu0 0.0
        %2505 = vmatprep.subr.mxu0 0.0
        %2506 = vmatpush1.msra.mxu0 0.0
        %2507 = vmatprep.subr.mxu0 0.0
        %2508 = vmatpush1.msra.mxu0 0.0
        %2509 = vmatprep.subr.mxu0 0.0
        %2510 = vmatpush1.msra.mxu0 0.0
        %2511 = vmatprep.subr.mxu0 0.0
        %2512 = vmatpush1.msra.mxu0 0.0
        %2513 = vmatprep.subr.mxu0 0.0
        %2514 = vmatpush1.msra.mxu0 0.0
        %2515 = vmatprep.subr.mxu0 0.0
        %2516 = vmatpush1.msra.mxu0 0.0
        %2517 = vmatprep.subr.mxu0 0.0
        %2518 = vmatpush1.msra.mxu0 0.0
        %2519 = vmatprep.subr.mxu0 0.0
        %2520 = vmatpush1.msra.mxu0 0.0
        %2521 = vmatprep.subr.mxu0 0.0
        %2522 = vmatpush1.msra.mxu0 0.0
        %2523 = vmatprep.subr.mxu0 0.0
        %2524 = vmatpush1.msra.mxu0 0.0
        %2525 = vmatprep.subr.mxu0 0.0
        %2526 = vmatpush1.msra.mxu0 0.0
        %2527 = vmatprep.mubr.f32.mxu0 0.0
        %2528 = vmatmul.mubr.f32.gmra.mrb[0].mxu0 %v2458
        %v2529 = vpop.f32.mrb[0].mxu0
        %v2530 = vadd.f32 0.0, %v2529
        %v2531 = vpop.f32.mrb[0].mxu0
        %2532 = vdwg.mxu0
        %v2534 = vsel %vm273, %v2434, 0
        %v2537 = vsel %vm277, %v2442, 0
        %2539 = vmatprep.subr.mxu0 0.0
        %2540 = vmatpush1.msra.mxu0 %v2439
        %2541 = vmatprep.subr.mxu0 0.0
        %2542 = vmatpush1.msra.mxu0 %v2440
        %2543 = vmatprep.subr.mxu0 0.0
        %2544 = vmatpush1.msra.mxu0 %v2441
        %2545 = vmatprep.subr.mxu0 0.0
        %2546 = vmatpush1.msra.mxu0 %v2537
        %2547 = vmatprep.subr.mxu0 0.0
        %2548 = vmatpush1.msra.mxu0 0.0
        %2549 = vmatprep.subr.mxu0 0.0
        %2550 = vmatpush1.msra.mxu0 0.0
        %2551 = vmatprep.subr.mxu0 0.0
        %2552 = vmatpush1.msra.mxu0 0.0
        %2553 = vmatprep.subr.mxu0 0.0
        %2554 = vmatpush1.msra.mxu0 0.0
        %2555 = vmatprep.subr.mxu0 0.0
        %2556 = vmatpush1.msra.mxu0 0.0
        %2557 = vmatprep.subr.mxu0 0.0
        %2558 = vmatpush1.msra.mxu0 0.0
        %2559 = vmatprep.subr.mxu0 0.0
        %2560 = vmatpush1.msra.mxu0 0.0
        %2561 = vmatprep.subr.mxu0 0.0
        %2562 = vmatpush1.msra.mxu0 0.0
        %2563 = vmatprep.subr.mxu0 0.0
        %2564 = vmatpush1.msra.mxu0 0.0
        %2565 = vmatprep.subr.mxu0 0.0
        %2566 = vmatpush1.msra.mxu0 0.0
        %2567 = vmatprep.subr.mxu0 0.0
        %2568 = vmatpush1.msra.mxu0 0.0
        %2569 = vmatprep.subr.mxu0 0.0
        %2570 = vmatpush1.msra.mxu0 0.0
        %2571 = vmatprep.subr.mxu0 0.0
        %2572 = vmatpush1.msra.mxu0 0.0
        %2573 = vmatprep.subr.mxu0 0.0
        %2574 = vmatpush1.msra.mxu0 0.0
        %2575 = vmatprep.subr.mxu0 0.0
        %2576 = vmatpush1.msra.mxu0 0.0
        %2577 = vmatprep.subr.mxu0 0.0
        %2578 = vmatpush1.msra.mxu0 0.0
        %2579 = vmatprep.subr.mxu0 0.0
        %2580 = vmatpush1.msra.mxu0 0.0
        %2581 = vmatprep.subr.mxu0 0.0
        %2582 = vmatpush1.msra.mxu0 0.0
        %2583 = vmatprep.subr.mxu0 0.0
        %2584 = vmatpush1.msra.mxu0 0.0
        %2585 = vmatprep.subr.mxu0 0.0
        %2586 = vmatpush1.msra.mxu0 0.0
        %2587 = vmatprep.subr.mxu0 0.0
        %2588 = vmatpush1.msra.mxu0 0.0
        %2589 = vmatprep.subr.mxu0 0.0
        %2590 = vmatpush1.msra.mxu0 0.0
        %2591 = vmatprep.subr.mxu0 0.0
        %2592 = vmatpush1.msra.mxu0 0.0
        %2593 = vmatprep.subr.mxu0 0.0
        %2594 = vmatpush1.msra.mxu0 0.0
        %2595 = vmatprep.subr.mxu0 0.0
        %2596 = vmatpush1.msra.mxu0 0.0
        %2597 = vmatprep.subr.mxu0 0.0
        %2598 = vmatpush1.msra.mxu0 0.0
        %2599 = vmatprep.subr.mxu0 0.0
        %2600 = vmatpush1.msra.mxu0 0.0
        %2601 = vmatprep.subr.mxu0 0.0
        %2602 = vmatpush1.msra.mxu0 0.0
        %2603 = vmatprep.mubr.f32.mxu0 0.0
        %2604 = vmatmul.mubr.f32.gmra.mrb[0].mxu0 %v2534
        %v2605 = vpop.f32.mrb[0].mxu0
        %v2606 = vadd.f32 %v2530, %v2605
        %v2607 = vpop.f32.mrb[0].mxu0
        %2608 = vdwg.mxu0
        %2609 = vset.pattern.permute.xlu0 2
        %2610 = vperm.xlu0 %2609, %v242
        %v2611 = vpop.permute.xlu0 %2610
        %vm2612 = vcmp.eq.s32.totalorder %v2611, %v244
        %v2613 = vsel %vm2612, 1, 0
        %v2614 = vcvt.s32.f32 %v2613
        %v2615 = vlaneseq
        %v2616 = vshrl.u32 %v2615, 7
        %v2617 = vsub.s32 2, %v2616
        %v2618 = vrot.slane %v217, %v2617
        %v2619 = vmul.f32 %v210, %v2618
        %v2620 = vmul.f32 %v211, %v2618
        %v2621 = vmul.f32 %v212, %v2618
        %v2622 = vmul.f32 %v213, %v2618
        %v2624 = vsel %vm273, %v2614, 0
        %v2627 = vsel %vm277, %v2622, 0
        %2629 = vmatprep.subr.mxu0 0.0
        %2630 = vmatpush1.msra.mxu0 %v2619
        %2631 = vmatprep.subr.mxu0 0.0
        %2632 = vmatpush1.msra.mxu0 %v2620
        %2633 = vmatprep.subr.mxu0 0.0
        %2634 = vmatpush1.msra.mxu0 %v2621
        %2635 = vmatprep.subr.mxu0 0.0
        %2636 = vmatpush1.msra.mxu0 %v2627
        %2637 = vmatprep.subr.mxu0 0.0
        %2638 = vmatpush1.msra.mxu0 0.0
        %2639 = vmatprep.subr.mxu0 0.0
        %2640 = vmatpush1.msra.mxu0 0.0
        %2641 = vmatprep.subr.mxu0 0.0
        %2642 = vmatpush1.msra.mxu0 0.0
        %2643 = vmatprep.subr.mxu0 0.0
        %2644 = vmatpush1.msra.mxu0 0.0
        %2645 = vmatprep.subr.mxu0 0.0
        %2646 = vmatpush1.msra.mxu0 0.0
        %2647 = vmatprep.subr.mxu0 0.0
        %2648 = vmatpush1.msra.mxu0 0.0
        %2649 = vmatprep.subr.mxu0 0.0
        %2650 = vmatpush1.msra.mxu0 0.0
        %2651 = vmatprep.subr.mxu0 0.0
        %2652 = vmatpush1.msra.mxu0 0.0
        %2653 = vmatprep.subr.mxu0 0.0
        %2654 = vmatpush1.msra.mxu0 0.0
        %2655 = vmatprep.subr.mxu0 0.0
        %2656 = vmatpush1.msra.mxu0 0.0
        %2657 = vmatprep.subr.mxu0 0.0
        %2658 = vmatpush1.msra.mxu0 0.0
        %2659 = vmatprep.subr.mxu0 0.0
        %2660 = vmatpush1.msra.mxu0 0.0
        %2661 = vmatprep.subr.mxu0 0.0
        %2662 = vmatpush1.msra.mxu0 0.0
        %2663 = vmatprep.subr.mxu0 0.0
        %2664 = vmatpush1.msra.mxu0 0.0
        %2665 = vmatprep.subr.mxu0 0.0
        %2666 = vmatpush1.msra.mxu0 0.0
        %2667 = vmatprep.subr.mxu0 0.0
        %2668 = vmatpush1.msra.mxu0 0.0
        %2669 = vmatprep.subr.mxu0 0.0
        %2670 = vmatpush1.msra.mxu0 0.0
        %2671 = vmatprep.subr.mxu0 0.0
        %2672 = vmatpush1.msra.mxu0 0.0
        %2673 = vmatprep.subr.mxu0 0.0
        %2674 = vmatpush1.msra.mxu0 0.0
        %2675 = vmatprep.subr.mxu0 0.0
        %2676 = vmatpush1.msra.mxu0 0.0
        %2677 = vmatprep.subr.mxu0 0.0
        %2678 = vmatpush1.msra.mxu0 0.0
        %2679 = vmatprep.subr.mxu0 0.0
        %2680 = vmatpush1.msra.mxu0 0.0
        %2681 = vmatprep.subr.mxu0 0.0
        %2682 = vmatpush1.msra.mxu0 0.0
        %2683 = vmatprep.subr.mxu0 0.0
        %2684 = vmatpush1.msra.mxu0 0.0
        %2685 = vmatprep.subr.mxu0 0.0
        %2686 = vmatpush1.msra.mxu0 0.0
        %2687 = vmatprep.subr.mxu0 0.0
        %2688 = vmatpush1.msra.mxu0 0.0
        %2689 = vmatprep.subr.mxu0 0.0
        %2690 = vmatpush1.msra.mxu0 0.0
        %2691 = vmatprep.subr.mxu0 0.0
        %2692 = vmatpush1.msra.mxu0 0.0
        %2693 = vmatprep.mubr.f32.mxu0 0.0
        %2694 = vmatmul.mubr.f32.gmra.mrb[0].mxu0 %v2624
        %v2695 = vpop.f32.mrb[0].mxu0
        %v2696 = vadd.f32 0.0, %v2695
        %v2697 = vpop.f32.mrb[0].mxu0
        %2698 = vdwg.mxu0
        %v2699 = vadd.f32 %v2606, %v2696
        %2700 = vset.pattern.permute.xlu0 3
        %2701 = vperm.xlu0 %2700, %v242
        %v2702 = vpop.permute.xlu0 %2701
        %vm2703 = vcmp.eq.s32.totalorder %v2702, %v244
        %v2704 = vsel %vm2703, 1, 0
        %v2705 = vcvt.s32.f32 %v2704
        %v2706 = vlaneseq
        %v2707 = vshrl.u32 %v2706, 7
        %v2708 = vsub.s32 3, %v2707
        %v2709 = vrot.slane %v217, %v2708
        %v2710 = vmul.f32 %v210, %v2709
        %v2711 = vmul.f32 %v211, %v2709
        %v2712 = vmul.f32 %v212, %v2709
        %v2713 = vmul.f32 %v213, %v2709
        %v2715 = vsel %vm273, %v2705, 0
        %v2718 = vsel %vm277, %v2713, 0
        %2720 = vmatprep.subr.mxu0 0.0
        %2721 = vmatpush1.msra.mxu0 %v2710
        %2722 = vmatprep.subr.mxu0 0.0
        %2723 = vmatpush1.msra.mxu0 %v2711
        %2724 = vmatprep.subr.mxu0 0.0
        %2725 = vmatpush1.msra.mxu0 %v2712
        %2726 = vmatprep.subr.mxu0 0.0
        %2727 = vmatpush1.msra.mxu0 %v2718
        %2728 = vmatprep.subr.mxu0 0.0
        %2729 = vmatpush1.msra.mxu0 0.0
        %2730 = vmatprep.subr.mxu0 0.0
        %2731 = vmatpush1.msra.mxu0 0.0
        %2732 = vmatprep.subr.mxu0 0.0
        %2733 = vmatpush1.msra.mxu0 0.0
        %2734 = vmatprep.subr.mxu0 0.0
        %2735 = vmatpush1.msra.mxu0 0.0
        %2736 = vmatprep.subr.mxu0 0.0
        %2737 = vmatpush1.msra.mxu0 0.0
        %2738 = vmatprep.subr.mxu0 0.0
        %2739 = vmatpush1.msra.mxu0 0.0
        %2740 = vmatprep.subr.mxu0 0.0
        %2741 = vmatpush1.msra.mxu0 0.0
        %2742 = vmatprep.subr.mxu0 0.0
        %2743 = vmatpush1.msra.mxu0 0.0
        %2744 = vmatprep.subr.mxu0 0.0
        %2745 = vmatpush1.msra.mxu0 0.0
        %2746 = vmatprep.subr.mxu0 0.0
        %2747 = vmatpush1.msra.mxu0 0.0
        %2748 = vmatprep.subr.mxu0 0.0
        %2749 = vmatpush1.msra.mxu0 0.0
        %2750 = vmatprep.subr.mxu0 0.0
        %2751 = vmatpush1.msra.mxu0 0.0
        %2752 = vmatprep.subr.mxu0 0.0
        %2753 = vmatpush1.msra.mxu0 0.0
        %2754 = vmatprep.subr.mxu0 0.0
        %2755 = vmatpush1.msra.mxu0 0.0
        %2756 = vmatprep.subr.mxu0 0.0
        %2757 = vmatpush1.msra.mxu0 0.0
        %2758 = vmatprep.subr.mxu0 0.0
        %2759 = vmatpush1.msra.mxu0 0.0
        %2760 = vmatprep.subr.mxu0 0.0
        %2761 = vmatpush1.msra.mxu0 0.0
        %2762 = vmatprep.subr.mxu0 0.0
        %2763 = vmatpush1.msra.mxu0 0.0
        %2764 = vmatprep.subr.mxu0 0.0
        %2765 = vmatpush1.msra.mxu0 0.0
        %2766 = vmatprep.subr.mxu0 0.0
        %2767 = vmatpush1.msra.mxu0 0.0
        %2768 = vmatprep.subr.mxu0 0.0
        %2769 = vmatpush1.msra.mxu0 0.0
        %2770 = vmatprep.subr.mxu0 0.0
        %2771 = vmatpush1.msra.mxu0 0.0
        %2772 = vmatprep.subr.mxu0 0.0
        %2773 = vmatpush1.msra.mxu0 0.0
        %2774 = vmatprep.subr.mxu0 0.0
        %2775 = vmatpush1.msra.mxu0 0.0
        %2776 = vmatprep.subr.mxu0 0.0
        %2777 = vmatpush1.msra.mxu0 0.0
        %2778 = vmatprep.subr.mxu0 0.0
        %2779 = vmatpush1.msra.mxu0 0.0
        %2780 = vmatprep.subr.mxu0 0.0
        %2781 = vmatpush1.msra.mxu0 0.0
        %2782 = vmatprep.subr.mxu0 0.0
        %2783 = vmatpush1.msra.mxu0 0.0
        %2784 = vmatprep.mubr.f32.mxu0 0.0
        %2785 = vmatmul.mubr.f32.gmra.mrb[0].mxu0 %v2715
        %v2786 = vpop.f32.mrb[0].mxu0
        %v2787 = vadd.f32 0.0, %v2786
        %v2788 = vpop.f32.mrb[0].mxu0
        %2789 = vdwg.mxu0
        %v2790 = vadd.f32 %v2699, %v2787
        %2791 = vset.pattern.permute.xlu0 4
        %2792 = vperm.xlu0 %2791, %v242
        %v2793 = vpop.permute.xlu0 %2792
        %vm2794 = vcmp.eq.s32.totalorder %v2793, %v244
        %v2795 = vsel %vm2794, 1, 0
        %v2796 = vcvt.s32.f32 %v2795
        %v2797 = vlaneseq
        %v2798 = vshrl.u32 %v2797, 7
        %v2799 = vsub.s32 4, %v2798
        %v2800 = vrot.slane %v217, %v2799
        %v2801 = vmul.f32 %v210, %v2800
        %v2802 = vmul.f32 %v211, %v2800
        %v2803 = vmul.f32 %v212, %v2800
        %v2804 = vmul.f32 %v213, %v2800
        %v2806 = vsel %vm273, %v2796, 0
        %v2809 = vsel %vm277, %v2804, 0
        %2811 = vmatprep.subr.mxu0 0.0
        %2812 = vmatpush1.msra.mxu0 %v2801
        %2813 = vmatprep.subr.mxu0 0.0
        %2814 = vmatpush1.msra.mxu0 %v2802
        %2815 = vmatprep.subr.mxu0 0.0
        %2816 = vmatpush1.msra.mxu0 %v2803
        %2817 = vmatprep.subr.mxu0 0.0
        %2818 = vmatpush1.msra.mxu0 %v2809
        %2819 = vmatprep.subr.mxu0 0.0
        %2820 = vmatpush1.msra.mxu0 0.0
        %2821 = vmatprep.subr.mxu0 0.0
        %2822 = vmatpush1.msra.mxu0 0.0
        %2823 = vmatprep.subr.mxu0 0.0
        %2824 = vmatpush1.msra.mxu0 0.0
        %2825 = vmatprep.subr.mxu0 0.0
        %2826 = vmatpush1.msra.mxu0 0.0
        %2827 = vmatprep.subr.mxu0 0.0
        %2828 = vmatpush1.msra.mxu0 0.0
        %2829 = vmatprep.subr.mxu0 0.0
        %2830 = vmatpush1.msra.mxu0 0.0
        %2831 = vmatprep.subr.mxu0 0.0
        %2832 = vmatpush1.msra.mxu0 0.0
        %2833 = vmatprep.subr.mxu0 0.0
        %2834 = vmatpush1.msra.mxu0 0.0
        %2835 = vmatprep.subr.mxu0 0.0
        %2836 = vmatpush1.msra.mxu0 0.0
        %2837 = vmatprep.subr.mxu0 0.0
        %2838 = vmatpush1.msra.mxu0 0.0
        %2839 = vmatprep.subr.mxu0 0.0
        %2840 = vmatpush1.msra.mxu0 0.0
        %2841 = vmatprep.subr.mxu0 0.0
        %2842 = vmatpush1.msra.mxu0 0.0
        %2843 = vmatprep.subr.mxu0 0.0
        %2844 = vmatpush1.msra.mxu0 0.0
        %2845 = vmatprep.subr.mxu0 0.0
        %2846 = vmatpush1.msra.mxu0 0.0
        %2847 = vmatprep.subr.mxu0 0.0
        %2848 = vmatpush1.msra.mxu0 0.0
        %2849 = vmatprep.subr.mxu0 0.0
        %2850 = vmatpush1.msra.mxu0 0.0
        %2851 = vmatprep.subr.mxu0 0.0
        %2852 = vmatpush1.msra.mxu0 0.0
        %2853 = vmatprep.subr.mxu0 0.0
        %2854 = vmatpush1.msra.mxu0 0.0
        %2855 = vmatprep.subr.mxu0 0.0
        %2856 = vmatpush1.msra.mxu0 0.0
        %2857 = vmatprep.subr.mxu0 0.0
        %2858 = vmatpush1.msra.mxu0 0.0
        %2859 = vmatprep.subr.mxu0 0.0
        %2860 = vmatpush1.msra.mxu0 0.0
        %2861 = vmatprep.subr.mxu0 0.0
        %2862 = vmatpush1.msra.mxu0 0.0
        %2863 = vmatprep.subr.mxu0 0.0
        %2864 = vmatpush1.msra.mxu0 0.0
        %2865 = vmatprep.subr.mxu0 0.0
        %2866 = vmatpush1.msra.mxu0 0.0
        %2867 = vmatprep.subr.mxu0 0.0
        %2868 = vmatpush1.msra.mxu0 0.0
        %2869 = vmatprep.subr.mxu0 0.0
        %2870 = vmatpush1.msra.mxu0 0.0
        %2871 = vmatprep.subr.mxu0 0.0
        %2872 = vmatpush1.msra.mxu0 0.0
        %2873 = vmatprep.subr.mxu0 0.0
        %2874 = vmatpush1.msra.mxu0 0.0
        %2875 = vmatprep.mubr.f32.mxu0 0.0
        %2876 = vmatmul.mubr.f32.gmra.mrb[0].mxu0 %v2806
        %v2877 = vpop.f32.mrb[0].mxu0
        %v2878 = vadd.f32 0.0, %v2877
        %v2879 = vpop.f32.mrb[0].mxu0
        %2880 = vdwg.mxu0
        %v2881 = vadd.f32 %v2790, %v2878
        %2882 = vset.pattern.permute.xlu0 5
        %2883 = vperm.xlu0 %2882, %v242
        %v2884 = vpop.permute.xlu0 %2883
        %vm2885 = vcmp.eq.s32.totalorder %v2884, %v244
        %v2886 = vsel %vm2885, 1, 0
        %v2887 = vcvt.s32.f32 %v2886
        %v2888 = vlaneseq
        %v2889 = vshrl.u32 %v2888, 7
        %v2890 = vsub.s32 5, %v2889
        %v2891 = vrot.slane %v217, %v2890
        %v2892 = vmul.f32 %v210, %v2891
        %v2893 = vmul.f32 %v211, %v2891
        %v2894 = vmul.f32 %v212, %v2891
        %v2895 = vmul.f32 %v213, %v2891
        %v2897 = vsel %vm273, %v2887, 0
        %v2900 = vsel %vm277, %v2895, 0
        %2902 = vmatprep.subr.mxu0 0.0
        %2903 = vmatpush1.msra.mxu0 %v2892
        %2904 = vmatprep.subr.mxu0 0.0
        %2905 = vmatpush1.msra.mxu0 %v2893
        %2906 = vmatprep.subr.mxu0 0.0
        %2907 = vmatpush1.msra.mxu0 %v2894
        %2908 = vmatprep.subr.mxu0 0.0
        %2909 = vmatpush1.msra.mxu0 %v2900
        %2910 = vmatprep.subr.mxu0 0.0
        %2911 = vmatpush1.msra.mxu0 0.0
        %2912 = vmatprep.subr.mxu0 0.0
        %2913 = vmatpush1.msra.mxu0 0.0
        %2914 = vmatprep.subr.mxu0 0.0
        %2915 = vmatpush1.msra.mxu0 0.0
        %2916 = vmatprep.subr.mxu0 0.0
        %2917 = vmatpush1.msra.mxu0 0.0
        %2918 = vmatprep.subr.mxu0 0.0
        %2919 = vmatpush1.msra.mxu0 0.0
        %2920 = vmatprep.subr.mxu0 0.0
        %2921 = vmatpush1.msra.mxu0 0.0
        %2922 = vmatprep.subr.mxu0 0.0
        %2923 = vmatpush1.msra.mxu0 0.0
        %2924 = vmatprep.subr.mxu0 0.0
        %2925 = vmatpush1.msra.mxu0 0.0
        %2926 = vmatprep.subr.mxu0 0.0
        %2927 = vmatpush1.msra.mxu0 0.0
        %2928 = vmatprep.subr.mxu0 0.0
        %2929 = vmatpush1.msra.mxu0 0.0
        %2930 = vmatprep.subr.mxu0 0.0
        %2931 = vmatpush1.msra.mxu0 0.0
        %2932 = vmatprep.subr.mxu0 0.0
        %2933 = vmatpush1.msra.mxu0 0.0
        %2934 = vmatprep.subr.mxu0 0.0
        %2935 = vmatpush1.msra.mxu0 0.0
        %2936 = vmatprep.subr.mxu0 0.0
        %2937 = vmatpush1.msra.mxu0 0.0
        %2938 = vmatprep.subr.mxu0 0.0
        %2939 = vmatpush1.msra.mxu0 0.0
        %2940 = vmatprep.subr.mxu0 0.0
        %2941 = vmatpush1.msra.mxu0 0.0
        %2942 = vmatprep.subr.mxu0 0.0
        %2943 = vmatpush1.msra.mxu0 0.0
        %2944 = vmatprep.subr.mxu0 0.0
        %2945 = vmatpush1.msra.mxu0 0.0
        %2946 = vmatprep.subr.mxu0 0.0
        %2947 = vmatpush1.msra.mxu0 0.0
        %2948 = vmatprep.subr.mxu0 0.0
        %2949 = vmatpush1.msra.mxu0 0.0
        %2950 = vmatprep.subr.mxu0 0.0
        %2951 = vmatpush1.msra.mxu0 0.0
        %2952 = vmatprep.subr.mxu0 0.0
        %2953 = vmatpush1.msra.mxu0 0.0
        %2954 = vmatprep.subr.mxu0 0.0
        %2955 = vmatpush1.msra.mxu0 0.0
        %2956 = vmatprep.subr.mxu0 0.0
        %2957 = vmatpush1.msra.mxu0 0.0
        %2958 = vmatprep.subr.mxu0 0.0
        %2959 = vmatpush1.msra.mxu0 0.0
        %2960 = vmatprep.subr.mxu0 0.0
        %2961 = vmatpush1.msra.mxu0 0.0
        %2962 = vmatprep.subr.mxu0 0.0
        %2963 = vmatpush1.msra.mxu0 0.0
        %2964 = vmatprep.subr.mxu0 0.0
        %2965 = vmatpush1.msra.mxu0 0.0
        %2966 = vmatprep.mubr.f32.mxu0 0.0
        %2967 = vmatmul.mubr.f32.gmra.mrb[0].mxu0 %v2897
        %v2968 = vpop.f32.mrb[0].mxu0
        %v2969 = vadd.f32 0.0, %v2968
        %v2970 = vpop.f32.mrb[0].mxu0
        %2971 = vdwg.mxu0
        %v2972 = vadd.f32 %v2881, %v2969
        %2973 = vset.pattern.permute.xlu0 6
        %2974 = vperm.xlu0 %2973, %v242
        %v2975 = vpop.permute.xlu0 %2974
        %vm2976 = vcmp.eq.s32.totalorder %v2975, %v244
        %v2977 = vsel %vm2976, 1, 0
        %v2978 = vcvt.s32.f32 %v2977
        %v2979 = vlaneseq
        %v2980 = vshrl.u32 %v2979, 7
        %v2981 = vsub.s32 6, %v2980
        %v2982 = vrot.slane %v217, %v2981
        %v2983 = vmul.f32 %v210, %v2982
        %v2984 = vmul.f32 %v211, %v2982
        %v2985 = vmul.f32 %v212, %v2982
        %v2986 = vmul.f32 %v213, %v2982
        %v2988 = vsel %vm273, %v2978, 0
        %v2991 = vsel %vm277, %v2986, 0
        %2993 = vmatprep.subr.mxu0 0.0
        %2994 = vmatpush1.msra.mxu0 %v2983
        %2995 = vmatprep.subr.mxu0 0.0
        %2996 = vmatpush1.msra.mxu0 %v2984
        %2997 = vmatprep.subr.mxu0 0.0
        %2998 = vmatpush1.msra.mxu0 %v2985
        %2999 = vmatprep.subr.mxu0 0.0
        %3000 = vmatpush1.msra.mxu0 %v2991
        %3001 = vmatprep.subr.mxu0 0.0
        %3002 = vmatpush1.msra.mxu0 0.0
        %3003 = vmatprep.subr.mxu0 0.0
        %3004 = vmatpush1.msra.mxu0 0.0
        %3005 = vmatprep.subr.mxu0 0.0
        %3006 = vmatpush1.msra.mxu0 0.0
        %3007 = vmatprep.subr.mxu0 0.0
        %3008 = vmatpush1.msra.mxu0 0.0
        %3009 = vmatprep.subr.mxu0 0.0
        %3010 = vmatpush1.msra.mxu0 0.0
        %3011 = vmatprep.subr.mxu0 0.0
        %3012 = vmatpush1.msra.mxu0 0.0
        %3013 = vmatprep.subr.mxu0 0.0
        %3014 = vmatpush1.msra.mxu0 0.0
        %3015 = vmatprep.subr.mxu0 0.0
        %3016 = vmatpush1.msra.mxu0 0.0
        %3017 = vmatprep.subr.mxu0 0.0
        %3018 = vmatpush1.msra.mxu0 0.0
        %3019 = vmatprep.subr.mxu0 0.0
        %3020 = vmatpush1.msra.mxu0 0.0
        %3021 = vmatprep.subr.mxu0 0.0
        %3022 = vmatpush1.msra.mxu0 0.0
        %3023 = vmatprep.subr.mxu0 0.0
        %3024 = vmatpush1.msra.mxu0 0.0
        %3025 = vmatprep.subr.mxu0 0.0
        %3026 = vmatpush1.msra.mxu0 0.0
        %3027 = vmatprep.subr.mxu0 0.0
        %3028 = vmatpush1.msra.mxu0 0.0
        %3029 = vmatprep.subr.mxu0 0.0
        %3030 = vmatpush1.msra.mxu0 0.0
        %3031 = vmatprep.subr.mxu0 0.0
        %3032 = vmatpush1.msra.mxu0 0.0
        %3033 = vmatprep.subr.mxu0 0.0
        %3034 = vmatpush1.msra.mxu0 0.0
        %3035 = vmatprep.subr.mxu0 0.0
        %3036 = vmatpush1.msra.mxu0 0.0
        %3037 = vmatprep.subr.mxu0 0.0
        %3038 = vmatpush1.msra.mxu0 0.0
        %3039 = vmatprep.subr.mxu0 0.0
        %3040 = vmatpush1.msra.mxu0 0.0
        %3041 = vmatprep.subr.mxu0 0.0
        %3042 = vmatpush1.msra.mxu0 0.0
        %3043 = vmatprep.subr.mxu0 0.0
        %3044 = vmatpush1.msra.mxu0 0.0
        %3045 = vmatprep.subr.mxu0 0.0
        %3046 = vmatpush1.msra.mxu0 0.0
        %3047 = vmatprep.subr.mxu0 0.0
        %3048 = vmatpush1.msra.mxu0 0.0
        %3049 = vmatprep.subr.mxu0 0.0
        %3050 = vmatpush1.msra.mxu0 0.0
        %3051 = vmatprep.subr.mxu0 0.0
        %3052 = vmatpush1.msra.mxu0 0.0
        %3053 = vmatprep.subr.mxu0 0.0
        %3054 = vmatpush1.msra.mxu0 0.0
        %3055 = vmatprep.subr.mxu0 0.0
        %3056 = vmatpush1.msra.mxu0 0.0
        %3057 = vmatprep.mubr.f32.mxu0 0.0
        %3058 = vmatmul.mubr.f32.gmra.mrb[0].mxu0 %v2988
        %v3059 = vpop.f32.mrb[0].mxu0
        %v3060 = vadd.f32 0.0, %v3059
        %v3061 = vpop.f32.mrb[0].mxu0
        %3062 = vdwg.mxu0
        %v3063 = vadd.f32 %v2972, %v3060
        %3064 = vset.pattern.permute.xlu0 7
        %3065 = vperm.xlu0 %3064, %v242
        %v3066 = vpop.permute.xlu0 %3065
        %vm3067 = vcmp.eq.s32.totalorder %v3066, %v244
        %v3068 = vsel %vm3067, 1, 0
        %v3069 = vcvt.s32.f32 %v3068
        %v3070 = vlaneseq
        %v3071 = vshrl.u32 %v3070, 7
        %v3072 = vsub.s32 7, %v3071
        %v3073 = vrot.slane %v217, %v3072
        %v3074 = vmul.f32 %v210, %v3073
        %v3075 = vmul.f32 %v211, %v3073
        %v3076 = vmul.f32 %v212, %v3073
        %v3077 = vmul.f32 %v213, %v3073
        %v3079 = vsel %vm273, %v3069, 0
        %v3082 = vsel %vm277, %v3077, 0
        %3084 = vmatprep.subr.mxu0 0.0
        %3085 = vmatpush1.msra.mxu0 %v3074
        %3086 = vmatprep.subr.mxu0 0.0
        %3087 = vmatpush1.msra.mxu0 %v3075
        %3088 = vmatprep.subr.mxu0 0.0
        %3089 = vmatpush1.msra.mxu0 %v3076
        %3090 = vmatprep.subr.mxu0 0.0
        %3091 = vmatpush1.msra.mxu0 %v3082
        %3092 = vmatprep.subr.mxu0 0.0
        %3093 = vmatpush1.msra.mxu0 0.0
        %3094 = vmatprep.subr.mxu0 0.0
        %3095 = vmatpush1.msra.mxu0 0.0
        %3096 = vmatprep.subr.mxu0 0.0
        %3097 = vmatpush1.msra.mxu0 0.0
        %3098 = vmatprep.subr.mxu0 0.0
        %3099 = vmatpush1.msra.mxu0 0.0
        %3100 = vmatprep.subr.mxu0 0.0
        %3101 = vmatpush1.msra.mxu0 0.0
        %3102 = vmatprep.subr.mxu0 0.0
        %3103 = vmatpush1.msra.mxu0 0.0
        %3104 = vmatprep.subr.mxu0 0.0
        %3105 = vmatpush1.msra.mxu0 0.0
        %3106 = vmatprep.subr.mxu0 0.0
        %3107 = vmatpush1.msra.mxu0 0.0
        %3108 = vmatprep.subr.mxu0 0.0
        %3109 = vmatpush1.msra.mxu0 0.0
        %3110 = vmatprep.subr.mxu0 0.0
        %3111 = vmatpush1.msra.mxu0 0.0
        %3112 = vmatprep.subr.mxu0 0.0
        %3113 = vmatpush1.msra.mxu0 0.0
        %3114 = vmatprep.subr.mxu0 0.0
        %3115 = vmatpush1.msra.mxu0 0.0
        %3116 = vmatprep.subr.mxu0 0.0
        %3117 = vmatpush1.msra.mxu0 0.0
        %3118 = vmatprep.subr.mxu0 0.0
        %3119 = vmatpush1.msra.mxu0 0.0
        %3120 = vmatprep.subr.mxu0 0.0
        %3121 = vmatpush1.msra.mxu0 0.0
        %3122 = vmatprep.subr.mxu0 0.0
        %3123 = vmatpush1.msra.mxu0 0.0
        %3124 = vmatprep.subr.mxu0 0.0
        %3125 = vmatpush1.msra.mxu0 0.0
        %3126 = vmatprep.subr.mxu0 0.0
        %3127 = vmatpush1.msra.mxu0 0.0
        %3128 = vmatprep.subr.mxu0 0.0
        %3129 = vmatpush1.msra.mxu0 0.0
        %3130 = vmatprep.subr.mxu0 0.0
        %3131 = vmatpush1.msra.mxu0 0.0
        %3132 = vmatprep.subr.mxu0 0.0
        %3133 = vmatpush1.msra.mxu0 0.0
        %3134 = vmatprep.subr.mxu0 0.0
        %3135 = vmatpush1.msra.mxu0 0.0
        %3136 = vmatprep.subr.mxu0 0.0
        %3137 = vmatpush1.msra.mxu0 0.0
        %3138 = vmatprep.subr.mxu0 0.0
        %3139 = vmatpush1.msra.mxu0 0.0
        %3140 = vmatprep.subr.mxu0 0.0
        %3141 = vmatpush1.msra.mxu0 0.0
        %3142 = vmatprep.subr.mxu0 0.0
        %3143 = vmatpush1.msra.mxu0 0.0
        %3144 = vmatprep.subr.mxu0 0.0
        %3145 = vmatpush1.msra.mxu0 0.0
        %3146 = vmatprep.subr.mxu0 0.0
        %3147 = vmatpush1.msra.mxu0 0.0
        %3148 = vmatprep.mubr.f32.mxu0 0.0
        %3149 = vmatmul.mubr.f32.gmra.mrb[0].mxu0 %v3079
        %v3150 = vpop.f32.mrb[0].mxu0
        %v3151 = vadd.f32 0.0, %v3150
        %v3152 = vpop.f32.mrb[0].mxu0
        %3153 = vdwg.mxu0
        %v3154 = vadd.f32 %v3063, %v3151
        %vm3155 = vcmask 261120
        %v3157 = vsel %vm3155, %v2428, 0
        %3159 = vmatprep.subr.mxu0 0.0
        %3160 = vmatpush1.msra.mxu0 %v229
        %3161 = vmatprep.subr.mxu0 0.0
        %3162 = vmatpush1.msra.mxu0 %v230
        %3163 = vmatprep.subr.mxu0 0.0
        %3164 = vmatpush1.msra.mxu0 %v231
        %3165 = vmatprep.subr.mxu0 0.0
        %3166 = vmatpush1.msra.mxu0 %v232
        %3167 = vmatprep.subr.mxu0 0.0
        %3168 = vmatpush1.msra.mxu0 0.0
        %3169 = vmatprep.subr.mxu0 0.0
        %3170 = vmatpush1.msra.mxu0 0.0
        %3171 = vmatprep.subr.mxu0 0.0
        %3172 = vmatpush1.msra.mxu0 0.0
        %3173 = vmatprep.subr.mxu0 0.0
        %3174 = vmatpush1.msra.mxu0 0.0
        %3175 = vmatprep.subr.mxu0 0.0
        %3176 = vmatpush1.msra.mxu0 0.0
        %3177 = vmatprep.subr.mxu0 0.0
        %3178 = vmatpush1.msra.mxu0 0.0
        %3179 = vmatprep.subr.mxu0 0.0
        %3180 = vmatpush1.msra.mxu0 0.0
        %3181 = vmatprep.subr.mxu0 0.0
        %3182 = vmatpush1.msra.mxu0 0.0
        %3183 = vmatprep.subr.mxu0 0.0
        %3184 = vmatpush1.msra.mxu0 0.0
        %3185 = vmatprep.subr.mxu0 0.0
        %3186 = vmatpush1.msra.mxu0 0.0
        %3187 = vmatprep.subr.mxu0 0.0
        %3188 = vmatpush1.msra.mxu0 0.0
        %3189 = vmatprep.subr.mxu0 0.0
        %3190 = vmatpush1.msra.mxu0 0.0
        %3191 = vmatprep.subr.mxu0 0.0
        %3192 = vmatpush1.msra.mxu0 0.0
        %3193 = vmatprep.subr.mxu0 0.0
        %3194 = vmatpush1.msra.mxu0 0.0
        %3195 = vmatprep.subr.mxu0 0.0
        %3196 = vmatpush1.msra.mxu0 0.0
        %3197 = vmatprep.subr.mxu0 0.0
        %3198 = vmatpush1.msra.mxu0 0.0
        %3199 = vmatprep.subr.mxu0 0.0
        %3200 = vmatpush1.msra.mxu0 0.0
        %3201 = vmatprep.subr.mxu0 0.0
        %3202 = vmatpush1.msra.mxu0 0.0
        %3203 = vmatprep.subr.mxu0 0.0
        %3204 = vmatpush1.msra.mxu0 0.0
        %3205 = vmatprep.subr.mxu0 0.0
        %3206 = vmatpush1.msra.mxu0 0.0
        %3207 = vmatprep.subr.mxu0 0.0
        %3208 = vmatpush1.msra.mxu0 0.0
        %3209 = vmatprep.subr.mxu0 0.0
        %3210 = vmatpush1.msra.mxu0 0.0
        %3211 = vmatprep.subr.mxu0 0.0
        %3212 = vmatpush1.msra.mxu0 0.0
        %3213 = vmatprep.subr.mxu0 0.0
        %3214 = vmatpush1.msra.mxu0 0.0
        %3215 = vmatprep.subr.mxu0 0.0
        %3216 = vmatpush1.msra.mxu0 0.0
        %3217 = vmatprep.subr.mxu0 0.0
        %3218 = vmatpush1.msra.mxu0 0.0
        %3219 = vmatprep.subr.mxu0 0.0
        %3220 = vmatpush1.msra.mxu0 0.0
        %3221 = vmatprep.subr.mxu0 0.0
        %3222 = vmatpush1.msra.mxu0 0.0
        %3223 = vmatprep.mubr.f32.mxu0 0.0
        %3224 = vmatmul.mubr.f32.gmra.mrb[0].mxu0 %v3157
        %v3225 = vpop.f32.mrb[0].mxu0
        %v3226 = vadd.f32 0.0, %v3225
        %v3227 = vpop.f32.mrb[0].mxu0
        %3228 = vdwg.mxu0
        %v3230 = vsel %vm3155, %v218, 0
        %3232 = vmatprep.subr.mxu0 0.0
        %3233 = vmatpush1.msra.mxu0 %v225
        %3234 = vmatprep.subr.mxu0 0.0
        %3235 = vmatpush1.msra.mxu0 %v226
        %3236 = vmatprep.subr.mxu0 0.0
        %3237 = vmatpush1.msra.mxu0 %v227
        %3238 = vmatprep.subr.mxu0 0.0
        %3239 = vmatpush1.msra.mxu0 %v228
        %3240 = vmatprep.subr.mxu0 0.0
        %3241 = vmatpush1.msra.mxu0 0.0
        %3242 = vmatprep.subr.mxu0 0.0
        %3243 = vmatpush1.msra.mxu0 0.0
        %3244 = vmatprep.subr.mxu0 0.0
        %3245 = vmatpush1.msra.mxu0 0.0
        %3246 = vmatprep.subr.mxu0 0.0
        %3247 = vmatpush1.msra.mxu0 0.0
        %3248 = vmatprep.subr.mxu0 0.0
        %3249 = vmatpush1.msra.mxu0 0.0
        %3250 = vmatprep.subr.mxu0 0.0
        %3251 = vmatpush1.msra.mxu0 0.0
        %3252 = vmatprep.subr.mxu0 0.0
        %3253 = vmatpush1.msra.mxu0 0.0
        %3254 = vmatprep.subr.mxu0 0.0
        %3255 = vmatpush1.msra.mxu0 0.0
        %3256 = vmatprep.subr.mxu0 0.0
        %3257 = vmatpush1.msra.mxu0 0.0
        %3258 = vmatprep.subr.mxu0 0.0
        %3259 = vmatpush1.msra.mxu0 0.0
        %3260 = vmatprep.subr.mxu0 0.0
        %3261 = vmatpush1.msra.mxu0 0.0
        %3262 = vmatprep.subr.mxu0 0.0
        %3263 = vmatpush1.msra.mxu0 0.0
        %3264 = vmatprep.subr.mxu0 0.0
        %3265 = vmatpush1.msra.mxu0 0.0
        %3266 = vmatprep.subr.mxu0 0.0
        %3267 = vmatpush1.msra.mxu0 0.0
        %3268 = vmatprep.subr.mxu0 0.0
        %3269 = vmatpush1.msra.mxu0 0.0
        %3270 = vmatprep.subr.mxu0 0.0
        %3271 = vmatpush1.msra.mxu0 0.0
        %3272 = vmatprep.subr.mxu0 0.0
        %3273 = vmatpush1.msra.mxu0 0.0
        %3274 = vmatprep.subr.mxu0 0.0
        %3275 = vmatpush1.msra.mxu0 0.0
        %3276 = vmatprep.subr.mxu0 0.0
        %3277 = vmatpush1.msra.mxu0 0.0
        %3278 = vmatprep.subr.mxu0 0.0
        %3279 = vmatpush1.msra.mxu0 0.0
        %3280 = vmatprep.subr.mxu0 0.0
        %3281 = vmatpush1.msra.mxu0 0.0
        %3282 = vmatprep.subr.mxu0 0.0
        %3283 = vmatpush1.msra.mxu0 0.0
        %3284 = vmatprep.subr.mxu0 0.0
        %3285 = vmatpush1.msra.mxu0 0.0
        %3286 = vmatprep.subr.mxu0 0.0
        %3287 = vmatpush1.msra.mxu0 0.0
        %3288 = vmatprep.subr.mxu0 0.0
        %3289 = vmatpush1.msra.mxu0 0.0
        %3290 = vmatprep.subr.mxu0 0.0
        %3291 = vmatpush1.msra.mxu0 0.0
        %3292 = vmatprep.subr.mxu0 0.0
        %3293 = vmatpush1.msra.mxu0 0.0
        %3294 = vmatprep.subr.mxu0 0.0
        %3295 = vmatpush1.msra.mxu0 0.0
        %3296 = vmatprep.mubr.f32.mxu0 0.0
        %3297 = vmatmul.mubr.f32.gmra.mrb[0].mxu0 %v3230
        %v3298 = vpop.f32.mrb[0].mxu0
        %v3299 = vadd.f32 0.0, %v3298
        %v3300 = vpop.f32.mrb[0].mxu0
        %3301 = vdwg.mxu0
        %v3302 = vlaneseq
        %v3303 = vshrl.u32 %v3302, 7
        %v3304 = vsub.s32 0, %v3303
        %v3305 = vrot.slane %v219, %v3304
        %v3306 = vadd.f32 %v3305, %v3299
        %v3307 = vlaneseq
        %v3308 = vshrl.u32 %v3307, 7
        %v3309 = vmul.u32 %v244, 4
        %vm3310 = vcmp.ge.s32.totalorder %v3308, %v3309
        %v3311 = vadd.s32 %v3309, 4
        %vm3312 = vcmp.lt.s32.totalorder %v3308, %v3311
        %vm3313 = vmand %vm3310, %vm3312
        %v3314 = vsel %vm3313, 1, 0
        %v3315 = vcvt.s32.f32 %v3314
        %v3316 = vmul.u32 %v3308, 3
        %vm3317 = vcmp.eq.s32.totalorder %v244, %v3316
        %v3318 = vsel %vm3317, 1, 0
        %v3319 = vcvt.s32.f32 %v3318
        %vm3320 = vcmask 48128
        %v3322 = vsel %vm3320, %v3319, 0
        %vm3324 = vcmask 1045504
        %v3325 = vsel %vm3324, %v2428, 0
        %3327 = vmatprep.subr.mxu0 0.0
        %3328 = vmatpush1.msra.mxu0 %v3325
        %3329 = vmatprep.subr.mxu0 0.0
        %3330 = vmatpush1.msra.mxu0 0.0
        %3331 = vmatprep.subr.mxu0 0.0
        %3332 = vmatpush1.msra.mxu0 0.0
        %3333 = vmatprep.subr.mxu0 0.0
        %3334 = vmatpush1.msra.mxu0 0.0
        %3335 = vmatprep.subr.mxu0 0.0
        %3336 = vmatpush1.msra.mxu0 0.0
        %3337 = vmatprep.subr.mxu0 0.0
        %3338 = vmatpush1.msra.mxu0 0.0
        %3339 = vmatprep.subr.mxu0 0.0
        %3340 = vmatpush1.msra.mxu0 0.0
        %3341 = vmatprep.subr.mxu0 0.0
        %3342 = vmatpush1.msra.mxu0 0.0
        %3343 = vmatprep.subr.mxu0 0.0
        %3344 = vmatpush1.msra.mxu0 0.0
        %3345 = vmatprep.subr.mxu0 0.0
        %3346 = vmatpush1.msra.mxu0 0.0
        %3347 = vmatprep.subr.mxu0 0.0
        %3348 = vmatpush1.msra.mxu0 0.0
        %3349 = vmatprep.subr.mxu0 0.0
        %3350 = vmatpush1.msra.mxu0 0.0
        %3351 = vmatprep.subr.mxu0 0.0
        %3352 = vmatpush1.msra.mxu0 0.0
        %3353 = vmatprep.subr.mxu0 0.0
        %3354 = vmatpush1.msra.mxu0 0.0
        %3355 = vmatprep.subr.mxu0 0.0
        %3356 = vmatpush1.msra.mxu0 0.0
        %3357 = vmatprep.subr.mxu0 0.0
        %3358 = vmatpush1.msra.mxu0 0.0
        %3359 = vmatprep.subr.mxu0 0.0
        %3360 = vmatpush1.msra.mxu0 0.0
        %3361 = vmatprep.subr.mxu0 0.0
        %3362 = vmatpush1.msra.mxu0 0.0
        %3363 = vmatprep.subr.mxu0 0.0
        %3364 = vmatpush1.msra.mxu0 0.0
        %3365 = vmatprep.subr.mxu0 0.0
        %3366 = vmatpush1.msra.mxu0 0.0
        %3367 = vmatprep.subr.mxu0 0.0
        %3368 = vmatpush1.msra.mxu0 0.0
        %3369 = vmatprep.subr.mxu0 0.0
        %3370 = vmatpush1.msra.mxu0 0.0
        %3371 = vmatprep.subr.mxu0 0.0
        %3372 = vmatpush1.msra.mxu0 0.0
        %3373 = vmatprep.subr.mxu0 0.0
        %3374 = vmatpush1.msra.mxu0 0.0
        %3375 = vmatprep.subr.mxu0 0.0
        %3376 = vmatpush1.msra.mxu0 0.0
        %3377 = vmatprep.subr.mxu0 0.0
        %3378 = vmatpush1.msra.mxu0 0.0
        %3379 = vmatprep.subr.mxu0 0.0
        %3380 = vmatpush1.msra.mxu0 0.0
        %3381 = vmatprep.subr.mxu0 0.0
        %3382 = vmatpush1.msra.mxu0 0.0
        %3383 = vmatprep.subr.mxu0 0.0
        %3384 = vmatpush1.msra.mxu0 0.0
        %3385 = vmatprep.subr.mxu0 0.0
        %3386 = vmatpush1.msra.mxu0 0.0
        %3387 = vmatprep.subr.mxu0 0.0
        %3388 = vmatpush1.msra.mxu0 0.0
        %3389 = vmatprep.subr.mxu0 0.0
        %3390 = vmatpush1.msra.mxu0 0.0
        %3391 = vmatprep.mubr.f32.mxu0 0.0
        %3392 = vmatmul.mubr.f32.gmra.mrb[0].mxu0 %v3322
        %v3393 = vpop.f32.mrb[0].mxu0
        %v3394 = vadd.f32 0.0, %v3393
        %v3395 = vpop.f32.mrb[0].mxu0
        %3396 = vdwg.mxu0
        %vm3397 = vcmask 15360
        %v3399 = vsel %vm3397, %v3315, 0
        %vm3401 = vcmask 1041408
        %v3403 = vsel %vm3401, %v3394, 0
        %3405 = vmatprep.subr.mxu0 0.0
        %3406 = vmatpush1.msra.mxu0 %v3403
        %3407 = vmatprep.subr.mxu0 0.0
        %3408 = vmatpush1.msra.mxu0 0.0
        %3409 = vmatprep.subr.mxu0 0.0
        %3410 = vmatpush1.msra.mxu0 0.0
        %3411 = vmatprep.subr.mxu0 0.0
        %3412 = vmatpush1.msra.mxu0 0.0
        %3413 = vmatprep.subr.mxu0 0.0
        %3414 = vmatpush1.msra.mxu0 0.0
        %3415 = vmatprep.subr.mxu0 0.0
        %3416 = vmatpush1.msra.mxu0 0.0
        %3417 = vmatprep.subr.mxu0 0.0
        %3418 = vmatpush1.msra.mxu0 0.0
        %3419 = vmatprep.subr.mxu0 0.0
        %3420 = vmatpush1.msra.mxu0 0.0
        %3421 = vmatprep.subr.mxu0 0.0
        %3422 = vmatpush1.msra.mxu0 0.0
        %3423 = vmatprep.subr.mxu0 0.0
        %3424 = vmatpush1.msra.mxu0 0.0
        %3425 = vmatprep.subr.mxu0 0.0
        %3426 = vmatpush1.msra.mxu0 0.0
        %3427 = vmatprep.subr.mxu0 0.0
        %3428 = vmatpush1.msra.mxu0 0.0
        %3429 = vmatprep.subr.mxu0 0.0
        %3430 = vmatpush1.msra.mxu0 0.0
        %3431 = vmatprep.subr.mxu0 0.0
        %3432 = vmatpush1.msra.mxu0 0.0
        %3433 = vmatprep.subr.mxu0 0.0
        %3434 = vmatpush1.msra.mxu0 0.0
        %3435 = vmatprep.subr.mxu0 0.0
        %3436 = vmatpush1.msra.mxu0 0.0
        %3437 = vmatprep.subr.mxu0 0.0
        %3438 = vmatpush1.msra.mxu0 0.0
        %3439 = vmatprep.subr.mxu0 0.0
        %3440 = vmatpush1.msra.mxu0 0.0
        %3441 = vmatprep.subr.mxu0 0.0
        %3442 = vmatpush1.msra.mxu0 0.0
        %3443 = vmatprep.subr.mxu0 0.0
        %3444 = vmatpush1.msra.mxu0 0.0
        %3445 = vmatprep.subr.mxu0 0.0
        %3446 = vmatpush1.msra.mxu0 0.0
        %3447 = vmatprep.subr.mxu0 0.0
        %3448 = vmatpush1.msra.mxu0 0.0
        %3449 = vmatprep.subr.mxu0 0.0
        %3450 = vmatpush1.msra.mxu0 0.0
        %3451 = vmatprep.subr.mxu0 0.0
        %3452 = vmatpush1.msra.mxu0 0.0
        %3453 = vmatprep.subr.mxu0 0.0
        %3454 = vmatpush1.msra.mxu0 0.0
        %3455 = vmatprep.subr.mxu0 0.0
        %3456 = vmatpush1.msra.mxu0 0.0
        %3457 = vmatprep.subr.mxu0 0.0
        %3458 = vmatpush1.msra.mxu0 0.0
        %3459 = vmatprep.subr.mxu0 0.0
        %3460 = vmatpush1.msra.mxu0 0.0
        %3461 = vmatprep.subr.mxu0 0.0
        %3462 = vmatpush1.msra.mxu0 0.0
        %3463 = vmatprep.subr.mxu0 0.0
        %3464 = vmatpush1.msra.mxu0 0.0
        %3465 = vmatprep.subr.mxu0 0.0
        %3466 = vmatpush1.msra.mxu0 0.0
        %3467 = vmatprep.subr.mxu0 0.0
        %3468 = vmatpush1.msra.mxu0 0.0
        %3469 = vmatprep.mubr.f32.mxu0 0.0
        %3470 = vmatmul.mubr.f32.gmra.mrb[0].mxu0 %v3399
        %v3471 = vpop.f32.mrb[0].mxu0
        %v3472 = vadd.f32 0.0, %v3471
        %v3473 = vpop.f32.mrb[0].mxu0
        %3474 = vdwg.mxu0
        %v3476 = vsel %vm3324, %v3226, 0
        %3478 = vmatprep.subr.mxu0 0.0
        %3479 = vmatpush1.msra.mxu0 %v3476
        %3480 = vmatprep.subr.mxu0 0.0
        %3481 = vmatpush1.msra.mxu0 0.0
        %3482 = vmatprep.subr.mxu0 0.0
        %3483 = vmatpush1.msra.mxu0 0.0
        %3484 = vmatprep.subr.mxu0 0.0
        %3485 = vmatpush1.msra.mxu0 0.0
        %3486 = vmatprep.subr.mxu0 0.0
        %3487 = vmatpush1.msra.mxu0 0.0
        %3488 = vmatprep.subr.mxu0 0.0
        %3489 = vmatpush1.msra.mxu0 0.0
        %3490 = vmatprep.subr.mxu0 0.0
        %3491 = vmatpush1.msra.mxu0 0.0
        %3492 = vmatprep.subr.mxu0 0.0
        %3493 = vmatpush1.msra.mxu0 0.0
        %3494 = vmatprep.subr.mxu0 0.0
        %3495 = vmatpush1.msra.mxu0 0.0
        %3496 = vmatprep.subr.mxu0 0.0
        %3497 = vmatpush1.msra.mxu0 0.0
        %3498 = vmatprep.subr.mxu0 0.0
        %3499 = vmatpush1.msra.mxu0 0.0
        %3500 = vmatprep.subr.mxu0 0.0
        %3501 = vmatpush1.msra.mxu0 0.0
        %3502 = vmatprep.subr.mxu0 0.0
        %3503 = vmatpush1.msra.mxu0 0.0
        %3504 = vmatprep.subr.mxu0 0.0
        %3505 = vmatpush1.msra.mxu0 0.0
        %3506 = vmatprep.subr.mxu0 0.0
        %3507 = vmatpush1.msra.mxu0 0.0
        %3508 = vmatprep.subr.mxu0 0.0
        %3509 = vmatpush1.msra.mxu0 0.0
        %3510 = vmatprep.subr.mxu0 0.0
        %3511 = vmatpush1.msra.mxu0 0.0
        %3512 = vmatprep.subr.mxu0 0.0
        %3513 = vmatpush1.msra.mxu0 0.0
        %3514 = vmatprep.subr.mxu0 0.0
        %3515 = vmatpush1.msra.mxu0 0.0
        %3516 = vmatprep.subr.mxu0 0.0
        %3517 = vmatpush1.msra.mxu0 0.0
        %3518 = vmatprep.subr.mxu0 0.0
        %3519 = vmatpush1.msra.mxu0 0.0
        %3520 = vmatprep.subr.mxu0 0.0
        %3521 = vmatpush1.msra.mxu0 0.0
        %3522 = vmatprep.subr.mxu0 0.0
        %3523 = vmatpush1.msra.mxu0 0.0
        %3524 = vmatprep.subr.mxu0 0.0
        %3525 = vmatpush1.msra.mxu0 0.0
        %3526 = vmatprep.subr.mxu0 0.0
        %3527 = vmatpush1.msra.mxu0 0.0
        %3528 = vmatprep.subr.mxu0 0.0
        %3529 = vmatpush1.msra.mxu0 0.0
        %3530 = vmatprep.subr.mxu0 0.0
        %3531 = vmatpush1.msra.mxu0 0.0
        %3532 = vmatprep.subr.mxu0 0.0
        %3533 = vmatpush1.msra.mxu0 0.0
        %3534 = vmatprep.subr.mxu0 0.0
        %3535 = vmatpush1.msra.mxu0 0.0
        %3536 = vmatprep.subr.mxu0 0.0
        %3537 = vmatpush1.msra.mxu0 0.0
        %3538 = vmatprep.subr.mxu0 0.0
        %3539 = vmatpush1.msra.mxu0 0.0
        %3540 = vmatprep.subr.mxu0 0.0
        %3541 = vmatpush1.msra.mxu0 0.0
        %3542 = vmatprep.mubr.f32.mxu0 0.0
        %3543 = vmatmul.mubr.f32.gmra.mrb[0].mxu0 %v3322
        %v3544 = vpop.f32.mrb[0].mxu0
        %v3545 = vadd.f32 0.0, %v3544
        %v3546 = vpop.f32.mrb[0].mxu0
        %3547 = vdwg.mxu0
        %v3549 = vsel %vm3401, %v3545, 0
        %3551 = vmatprep.subr.mxu0 0.0
        %3552 = vmatpush1.msra.mxu0 %v3549
        %3553 = vmatprep.subr.mxu0 0.0
        %3554 = vmatpush1.msra.mxu0 0.0
        %3555 = vmatprep.subr.mxu0 0.0
        %3556 = vmatpush1.msra.mxu0 0.0
        %3557 = vmatprep.subr.mxu0 0.0
        %3558 = vmatpush1.msra.mxu0 0.0
        %3559 = vmatprep.subr.mxu0 0.0
        %3560 = vmatpush1.msra.mxu0 0.0
        %3561 = vmatprep.subr.mxu0 0.0
        %3562 = vmatpush1.msra.mxu0 0.0
        %3563 = vmatprep.subr.mxu0 0.0
        %3564 = vmatpush1.msra.mxu0 0.0
        %3565 = vmatprep.subr.mxu0 0.0
        %3566 = vmatpush1.msra.mxu0 0.0
        %3567 = vmatprep.subr.mxu0 0.0
        %3568 = vmatpush1.msra.mxu0 0.0
        %3569 = vmatprep.subr.mxu0 0.0
        %3570 = vmatpush1.msra.mxu0 0.0
        %3571 = vmatprep.subr.mxu0 0.0
        %3572 = vmatpush1.msra.mxu0 0.0
        %3573 = vmatprep.subr.mxu0 0.0
        %3574 = vmatpush1.msra.mxu0 0.0
        %3575 = vmatprep.subr.mxu0 0.0
        %3576 = vmatpush1.msra.mxu0 0.0
        %3577 = vmatprep.subr.mxu0 0.0
        %3578 = vmatpush1.msra.mxu0 0.0
        %3579 = vmatprep.subr.mxu0 0.0
        %3580 = vmatpush1.msra.mxu0 0.0
        %3581 = vmatprep.subr.mxu0 0.0
        %3582 = vmatpush1.msra.mxu0 0.0
        %3583 = vmatprep.subr.mxu0 0.0
        %3584 = vmatpush1.msra.mxu0 0.0
        %3585 = vmatprep.subr.mxu0 0.0
        %3586 = vmatpush1.msra.mxu0 0.0
        %3587 = vmatprep.subr.mxu0 0.0
        %3588 = vmatpush1.msra.mxu0 0.0
        %3589 = vmatprep.subr.mxu0 0.0
        %3590 = vmatpush1.msra.mxu0 0.0
        %3591 = vmatprep.subr.mxu0 0.0
        %3592 = vmatpush1.msra.mxu0 0.0
        %3593 = vmatprep.subr.mxu0 0.0
        %3594 = vmatpush1.msra.mxu0 0.0
        %3595 = vmatprep.subr.mxu0 0.0
        %3596 = vmatpush1.msra.mxu0 0.0
        %3597 = vmatprep.subr.mxu0 0.0
        %3598 = vmatpush1.msra.mxu0 0.0
        %3599 = vmatprep.subr.mxu0 0.0
        %3600 = vmatpush1.msra.mxu0 0.0
        %3601 = vmatprep.subr.mxu0 0.0
        %3602 = vmatpush1.msra.mxu0 0.0
        %3603 = vmatprep.subr.mxu0 0.0
        %3604 = vmatpush1.msra.mxu0 0.0
        %3605 = vmatprep.subr.mxu0 0.0
        %3606 = vmatpush1.msra.mxu0 0.0
        %3607 = vmatprep.subr.mxu0 0.0
        %3608 = vmatpush1.msra.mxu0 0.0
        %3609 = vmatprep.subr.mxu0 0.0
        %3610 = vmatpush1.msra.mxu0 0.0
        %3611 = vmatprep.subr.mxu0 0.0
        %3612 = vmatpush1.msra.mxu0 0.0
        %3613 = vmatprep.subr.mxu0 0.0
        %3614 = vmatpush1.msra.mxu0 0.0
        %3615 = vmatprep.mubr.f32.mxu0 0.0
        %3616 = vmatmul.mubr.f32.gmra.mrb[0].mxu0 %v3399
        %v3617 = vpop.f32.mrb[0].mxu0
        %v3618 = vadd.f32 0.0, %v3617
        %v3619 = vpop.f32.mrb[0].mxu0
        %3620 = vdwg.mxu0
        %v3621 = vadd.f32 %v218, %v218
        %v3622 = vmul.f32 %v3472, %v3621
        %v3623 = vsel %vm3155, %v3622, 0.0
        %3624 = vadd.xlane.f32.xlu0 %v3623
        %v3625 = vpop.xlane.xlu0 %3624
        %v3626 = vxor.u32 %v3625, 2147483648
        %v3627 = vmul.f32 %v3626, 1.442695
        %v3628 = vpow.pop %v3627
        %v3629 = vadd.f32 %v3628, 1.0
        %v3630 = vrcp.pop %v3629
        %v3631 = vmul.f32 1.0, %v3630
        %3632 = vmatprep.subr.mxu0 0.0
        %3633 = vmatpush1.msra.mxu0 %v221
        %3634 = vmatprep.subr.mxu0 0.0
        %3635 = vmatpush1.msra.mxu0 %v222
        %3636 = vmatprep.subr.mxu0 0.0
        %3637 = vmatpush1.msra.mxu0 %v223
        %3638 = vmatprep.subr.mxu0 0.0
        %3639 = vmatpush1.msra.mxu0 %v224
        %3640 = vmatprep.subr.mxu0 0.0
        %3641 = vmatpush1.msra.mxu0 0.0
        %3642 = vmatprep.subr.mxu0 0.0
        %3643 = vmatpush1.msra.mxu0 0.0
        %3644 = vmatprep.subr.mxu0 0.0
        %3645 = vmatpush1.msra.mxu0 0.0
        %3646 = vmatprep.subr.mxu0 0.0
        %3647 = vmatpush1.msra.mxu0 0.0
        %3648 = vmatprep.subr.mxu0 0.0
        %3649 = vmatpush1.msra.mxu0 0.0
        %3650 = vmatprep.subr.mxu0 0.0
        %3651 = vmatpush1.msra.mxu0 0.0
        %3652 = vmatprep.subr.mxu0 0.0
        %3653 = vmatpush1.msra.mxu0 0.0
        %3654 = vmatprep.subr.mxu0 0.0
        %3655 = vmatpush1.msra.mxu0 0.0
        %3656 = vmatprep.subr.mxu0 0.0
        %3657 = vmatpush1.msra.mxu0 0.0
        %3658 = vmatprep.subr.mxu0 0.0
        %3659 = vmatpush1.msra.mxu0 0.0
        %3660 = vmatprep.subr.mxu0 0.0
        %3661 = vmatpush1.msra.mxu0 0.0
        %3662 = vmatprep.subr.mxu0 0.0
        %3663 = vmatpush1.msra.mxu0 0.0
        %3664 = vmatprep.subr.mxu0 0.0
        %3665 = vmatpush1.msra.mxu0 0.0
        %3666 = vmatprep.subr.mxu0 0.0
        %3667 = vmatpush1.msra.mxu0 0.0
        %3668 = vmatprep.subr.mxu0 0.0
        %3669 = vmatpush1.msra.mxu0 0.0
        %3670 = vmatprep.subr.mxu0 0.0
        %3671 = vmatpush1.msra.mxu0 0.0
        %3672 = vmatprep.subr.mxu0 0.0
        %3673 = vmatpush1.msra.mxu0 0.0
        %3674 = vmatprep.subr.mxu0 0.0
        %3675 = vmatpush1.msra.mxu0 0.0
        %3676 = vmatprep.subr.mxu0 0.0
        %3677 = vmatpush1.msra.mxu0 0.0
        %3678 = vmatprep.subr.mxu0 0.0
        %3679 = vmatpush1.msra.mxu0 0.0
        %3680 = vmatprep.subr.mxu0 0.0
        %3681 = vmatpush1.msra.mxu0 0.0
        %3682 = vmatprep.subr.mxu0 0.0
        %3683 = vmatpush1.msra.mxu0 0.0
        %3684 = vmatprep.subr.mxu0 0.0
        %3685 = vmatpush1.msra.mxu0 0.0
        %3686 = vmatprep.subr.mxu0 0.0
        %3687 = vmatpush1.msra.mxu0 0.0
        %3688 = vmatprep.subr.mxu0 0.0
        %3689 = vmatpush1.msra.mxu0 0.0
        %3690 = vmatprep.subr.mxu0 0.0
        %3691 = vmatpush1.msra.mxu0 0.0
        %3692 = vmatprep.subr.mxu0 0.0
        %3693 = vmatpush1.msra.mxu0 0.0
        %3694 = vmatprep.subr.mxu0 0.0
        %3695 = vmatpush1.msra.mxu0 0.0
        %3696 = vmatprep.mubr.f32.mxu0 0.0
        %3697 = vmatmul.mubr.f32.gmra.mrb[0].mxu0 %v3230
        %v3698 = vpop.f32.mrb[0].mxu0
        %v3699 = vadd.f32 %v3306, %v3698
        %v3700 = vpop.f32.mrb[0].mxu0
        %3701 = vdwg.mxu0
        %v3702 = vadd.f32 %v3699, %v3618
        %vm3703 = vcmp.gt.f32.partialorder %v3702, 0.0
        %v3704 = vlaneseq
        %v3705 = vshrl.u32 %v3704, 7
        %v3706 = vsub.s32 0, %v3705
        %v3707 = vrot.slane %v220, %v3706
        %v3708 = vmul.f32 %v3707, %v3702
        %v3709 = vsel %vm3703, %v3702, %v3708
        %v3710 = vmul.f32 %v3631, %v3709
        %v3711 = vadd.f32 %v218, %v3710
        %v3712 = vmul.f32 %v3711, %v3711
        %v3713 = vsel %vm3155, %v3712, 0.0
        %3714 = vadd.xlane.f32.xlu0 %v3713
        %v3715 = vpop.xlane.xlu0 %3714
        %v3716 = vrsqrt.pop %v3715
        %v3717 = vmul.f32 %v3715, %v3716
        %vm3718 = vcmp.eq.f32.partialorder %v3715, inf
        %v3719 = vsel %vm3718, %v3715, %v3717
        %vm3720 = vcmp.eq.f32.partialorder %v3715, 0.0
        %v3721 = vand.u32 %v3715, 2147483648
        %v3722 = vsel %vm3720, %v3721, %v3719
        %v3723 = vadd.f32 %v3722, 1e-08
        %vm3724 = vcmp.gt.f32.partialorder %v3711, 0.0
        %v3725 = vsel %vm3724, %v3711, 1.0
        %v3726 = vrcp.pop %v3723
        %v3727 = vmul.f32 %v3725, %v3726
        %v3728 = vadd.s32 %v3316, 1
        %vm3729 = vcmp.eq.s32.totalorder %v244, %v3728
        %v3730 = vsel %vm3729, 1, 0
        %v3731 = vcvt.s32.f32 %v3730
        %v3733 = vsel %vm3320, %v3731, 0
        %3735 = vmatprep.subr.mxu0 0.0
        %3736 = vmatpush1.msra.mxu0 %v3325
        %3737 = vmatprep.subr.mxu0 0.0
        %3738 = vmatpush1.msra.mxu0 0.0
        %3739 = vmatprep.subr.mxu0 0.0
        %3740 = vmatpush1.msra.mxu0 0.0
        %3741 = vmatprep.subr.mxu0 0.0
        %3742 = vmatpush1.msra.mxu0 0.0
        %3743 = vmatprep.subr.mxu0 0.0
        %3744 = vmatpush1.msra.mxu0 0.0
        %3745 = vmatprep.subr.mxu0 0.0
        %3746 = vmatpush1.msra.mxu0 0.0
        %3747 = vmatprep.subr.mxu0 0.0
        %3748 = vmatpush1.msra.mxu0 0.0
        %3749 = vmatprep.subr.mxu0 0.0
        %3750 = vmatpush1.msra.mxu0 0.0
        %3751 = vmatprep.subr.mxu0 0.0
        %3752 = vmatpush1.msra.mxu0 0.0
        %3753 = vmatprep.subr.mxu0 0.0
        %3754 = vmatpush1.msra.mxu0 0.0
        %3755 = vmatprep.subr.mxu0 0.0
        %3756 = vmatpush1.msra.mxu0 0.0
        %3757 = vmatprep.subr.mxu0 0.0
        %3758 = vmatpush1.msra.mxu0 0.0
        %3759 = vmatprep.subr.mxu0 0.0
        %3760 = vmatpush1.msra.mxu0 0.0
        %3761 = vmatprep.subr.mxu0 0.0
        %3762 = vmatpush1.msra.mxu0 0.0
        %3763 = vmatprep.subr.mxu0 0.0
        %3764 = vmatpush1.msra.mxu0 0.0
        %3765 = vmatprep.subr.mxu0 0.0
        %3766 = vmatpush1.msra.mxu0 0.0
        %3767 = vmatprep.subr.mxu0 0.0
        %3768 = vmatpush1.msra.mxu0 0.0
        %3769 = vmatprep.subr.mxu0 0.0
        %3770 = vmatpush1.msra.mxu0 0.0
        %3771 = vmatprep.subr.mxu0 0.0
        %3772 = vmatpush1.msra.mxu0 0.0
        %3773 = vmatprep.subr.mxu0 0.0
        %3774 = vmatpush1.msra.mxu0 0.0
        %3775 = vmatprep.subr.mxu0 0.0
        %3776 = vmatpush1.msra.mxu0 0.0
        %3777 = vmatprep.subr.mxu0 0.0
        %3778 = vmatpush1.msra.mxu0 0.0
        %3779 = vmatprep.subr.mxu0 0.0
        %3780 = vmatpush1.msra.mxu0 0.0
        %3781 = vmatprep.subr.mxu0 0.0
        %3782 = vmatpush1.msra.mxu0 0.0
        %3783 = vmatprep.subr.mxu0 0.0
        %3784 = vmatpush1.msra.mxu0 0.0
        %3785 = vmatprep.subr.mxu0 0.0
        %3786 = vmatpush1.msra.mxu0 0.0
        %3787 = vmatprep.subr.mxu0 0.0
        %3788 = vmatpush1.msra.mxu0 0.0
        %3789 = vmatprep.subr.mxu0 0.0
        %3790 = vmatpush1.msra.mxu0 0.0
        %3791 = vmatprep.subr.mxu0 0.0
        %3792 = vmatpush1.msra.mxu0 0.0
        %3793 = vmatprep.subr.mxu0 0.0
        %3794 = vmatpush1.msra.mxu0 0.0
        %3795 = vmatprep.subr.mxu0 0.0
        %3796 = vmatpush1.msra.mxu0 0.0
        %3797 = vmatprep.subr.mxu0 0.0
        %3798 = vmatpush1.msra.mxu0 0.0
        %3799 = vmatprep.mubr.f32.mxu0 0.0
        %3800 = vmatmul.mubr.f32.gmra.mrb[0].mxu0 %v3733
        %v3801 = vpop.f32.mrb[0].mxu0
        %v3802 = vadd.f32 0.0, %v3801
        %v3803 = vpop.f32.mrb[0].mxu0
        %3804 = vdwg.mxu0
        %v3806 = vsel %vm3401, %v3802, 0
        %3808 = vmatprep.subr.mxu0 0.0
        %3809 = vmatpush1.msra.mxu0 %v3806
        %3810 = vmatprep.subr.mxu0 0.0
        %3811 = vmatpush1.msra.mxu0 0.0
        %3812 = vmatprep.subr.mxu0 0.0
        %3813 = vmatpush1.msra.mxu0 0.0
        %3814 = vmatprep.subr.mxu0 0.0
        %3815 = vmatpush1.msra.mxu0 0.0
        %3816 = vmatprep.subr.mxu0 0.0
        %3817 = vmatpush1.msra.mxu0 0.0
        %3818 = vmatprep.subr.mxu0 0.0
        %3819 = vmatpush1.msra.mxu0 0.0
        %3820 = vmatprep.subr.mxu0 0.0
        %3821 = vmatpush1.msra.mxu0 0.0
        %3822 = vmatprep.subr.mxu0 0.0
        %3823 = vmatpush1.msra.mxu0 0.0
        %3824 = vmatprep.subr.mxu0 0.0
        %3825 = vmatpush1.msra.mxu0 0.0
        %3826 = vmatprep.subr.mxu0 0.0
        %3827 = vmatpush1.msra.mxu0 0.0
        %3828 = vmatprep.subr.mxu0 0.0
        %3829 = vmatpush1.msra.mxu0 0.0
        %3830 = vmatprep.subr.mxu0 0.0
        %3831 = vmatpush1.msra.mxu0 0.0
        %3832 = vmatprep.subr.mxu0 0.0
        %3833 = vmatpush1.msra.mxu0 0.0
        %3834 = vmatprep.subr.mxu0 0.0
        %3835 = vmatpush1.msra.mxu0 0.0
        %3836 = vmatprep.subr.mxu0 0.0
        %3837 = vmatpush1.msra.mxu0 0.0
        %3838 = vmatprep.subr.mxu0 0.0
        %3839 = vmatpush1.msra.mxu0 0.0
        %3840 = vmatprep.subr.mxu0 0.0
        %3841 = vmatpush1.msra.mxu0 0.0
        %3842 = vmatprep.subr.mxu0 0.0
        %3843 = vmatpush1.msra.mxu0 0.0
        %3844 = vmatprep.subr.mxu0 0.0
        %3845 = vmatpush1.msra.mxu0 0.0
        %3846 = vmatprep.subr.mxu0 0.0
        %3847 = vmatpush1.msra.mxu0 0.0
        %3848 = vmatprep.subr.mxu0 0.0
        %3849 = vmatpush1.msra.mxu0 0.0
        %3850 = vmatprep.subr.mxu0 0.0
        %3851 = vmatpush1.msra.mxu0 0.0
        %3852 = vmatprep.subr.mxu0 0.0
        %3853 = vmatpush1.msra.mxu0 0.0
        %3854 = vmatprep.subr.mxu0 0.0
        %3855 = vmatpush1.msra.mxu0 0.0
        %3856 = vmatprep.subr.mxu0 0.0
        %3857 = vmatpush1.msra.mxu0 0.0
        %3858 = vmatprep.subr.mxu0 0.0
        %3859 = vmatpush1.msra.mxu0 0.0
        %3860 = vmatprep.subr.mxu0 0.0
        %3861 = vmatpush1.msra.mxu0 0.0
        %3862 = vmatprep.subr.mxu0 0.0
        %3863 = vmatpush1.msra.mxu0 0.0
        %3864 = vmatprep.subr.mxu0 0.0
        %3865 = vmatpush1.msra.mxu0 0.0
        %3866 = vmatprep.subr.mxu0 0.0
        %3867 = vmatpush1.msra.mxu0 0.0
        %3868 = vmatprep.subr.mxu0 0.0
        %3869 = vmatpush1.msra.mxu0 0.0
        %3870 = vmatprep.subr.mxu0 0.0
        %3871 = vmatpush1.msra.mxu0 0.0
        %3872 = vmatprep.mubr.f32.mxu0 0.0
        %3873 = vmatmul.mubr.f32.gmra.mrb[0].mxu0 %v3399
        %v3874 = vpop.f32.mrb[0].mxu0
        %v3875 = vadd.f32 0.0, %v3874
        %v3876 = vpop.f32.mrb[0].mxu0
        %3877 = vdwg.mxu0
        %3878 = vmatprep.subr.mxu0 0.0
        %3879 = vmatpush1.msra.mxu0 %v3476
        %3880 = vmatprep.subr.mxu0 0.0
        %3881 = vmatpush1.msra.mxu0 0.0
        %3882 = vmatprep.subr.mxu0 0.0
        %3883 = vmatpush1.msra.mxu0 0.0
        %3884 = vmatprep.subr.mxu0 0.0
        %3885 = vmatpush1.msra.mxu0 0.0
        %3886 = vmatprep.subr.mxu0 0.0
        %3887 = vmatpush1.msra.mxu0 0.0
        %3888 = vmatprep.subr.mxu0 0.0
        %3889 = vmatpush1.msra.mxu0 0.0
        %3890 = vmatprep.subr.mxu0 0.0
        %3891 = vmatpush1.msra.mxu0 0.0
        %3892 = vmatprep.subr.mxu0 0.0
        %3893 = vmatpush1.msra.mxu0 0.0
        %3894 = vmatprep.subr.mxu0 0.0
        %3895 = vmatpush1.msra.mxu0 0.0
        %3896 = vmatprep.subr.mxu0 0.0
        %3897 = vmatpush1.msra.mxu0 0.0
        %3898 = vmatprep.subr.mxu0 0.0
        %3899 = vmatpush1.msra.mxu0 0.0
        %3900 = vmatprep.subr.mxu0 0.0
        %3901 = vmatpush1.msra.mxu0 0.0
        %3902 = vmatprep.subr.mxu0 0.0
        %3903 = vmatpush1.msra.mxu0 0.0
        %3904 = vmatprep.subr.mxu0 0.0
        %3905 = vmatpush1.msra.mxu0 0.0
        %3906 = vmatprep.subr.mxu0 0.0
        %3907 = vmatpush1.msra.mxu0 0.0
        %3908 = vmatprep.subr.mxu0 0.0
        %3909 = vmatpush1.msra.mxu0 0.0
        %3910 = vmatprep.subr.mxu0 0.0
        %3911 = vmatpush1.msra.mxu0 0.0
        %3912 = vmatprep.subr.mxu0 0.0
        %3913 = vmatpush1.msra.mxu0 0.0
        %3914 = vmatprep.subr.mxu0 0.0
        %3915 = vmatpush1.msra.mxu0 0.0
        %3916 = vmatprep.subr.mxu0 0.0
        %3917 = vmatpush1.msra.mxu0 0.0
        %3918 = vmatprep.subr.mxu0 0.0
        %3919 = vmatpush1.msra.mxu0 0.0
        %3920 = vmatprep.subr.mxu0 0.0
        %3921 = vmatpush1.msra.mxu0 0.0
        %3922 = vmatprep.subr.mxu0 0.0
        %3923 = vmatpush1.msra.mxu0 0.0
        %3924 = vmatprep.subr.mxu0 0.0
        %3925 = vmatpush1.msra.mxu0 0.0
        %3926 = vmatprep.subr.mxu0 0.0
        %3927 = vmatpush1.msra.mxu0 0.0
        %3928 = vmatprep.subr.mxu0 0.0
        %3929 = vmatpush1.msra.mxu0 0.0
        %3930 = vmatprep.subr.mxu0 0.0
        %3931 = vmatpush1.msra.mxu0 0.0
        %3932 = vmatprep.subr.mxu0 0.0
        %3933 = vmatpush1.msra.mxu0 0.0
        %3934 = vmatprep.subr.mxu0 0.0
        %3935 = vmatpush1.msra.mxu0 0.0
        %3936 = vmatprep.subr.mxu0 0.0
        %3937 = vmatpush1.msra.mxu0 0.0
        %3938 = vmatprep.subr.mxu0 0.0
        %3939 = vmatpush1.msra.mxu0 0.0
        %3940 = vmatprep.subr.mxu0 0.0
        %3941 = vmatpush1.msra.mxu0 0.0
        %3942 = vmatprep.mubr.f32.mxu0 0.0
        %3943 = vmatmul.mubr.f32.gmra.mrb[0].mxu0 %v3733
        %v3944 = vpop.f32.mrb[0].mxu0
        %v3945 = vadd.f32 0.0, %v3944
        %v3946 = vpop.f32.mrb[0].mxu0
        %3947 = vdwg.mxu0
        %v3949 = vsel %vm3401, %v3945, 0
        %3951 = vmatprep.subr.mxu0 0.0
        %3952 = vmatpush1.msra.mxu0 %v3949
        %3953 = vmatprep.subr.mxu0 0.0
        %3954 = vmatpush1.msra.mxu0 0.0
        %3955 = vmatprep.subr.mxu0 0.0
        %3956 = vmatpush1.msra.mxu0 0.0
        %3957 = vmatprep.subr.mxu0 0.0
        %3958 = vmatpush1.msra.mxu0 0.0
        %3959 = vmatprep.subr.mxu0 0.0
        %3960 = vmatpush1.msra.mxu0 0.0
        %3961 = vmatprep.subr.mxu0 0.0
        %3962 = vmatpush1.msra.mxu0 0.0
        %3963 = vmatprep.subr.mxu0 0.0
        %3964 = vmatpush1.msra.mxu0 0.0
        %3965 = vmatprep.subr.mxu0 0.0
        %3966 = vmatpush1.msra.mxu0 0.0
        %3967 = vmatprep.subr.mxu0 0.0
        %3968 = vmatpush1.msra.mxu0 0.0
        %3969 = vmatprep.subr.mxu0 0.0
        %3970 = vmatpush1.msra.mxu0 0.0
        %3971 = vmatprep.subr.mxu0 0.0
        %3972 = vmatpush1.msra.mxu0 0.0
        %3973 = vmatprep.subr.mxu0 0.0
        %3974 = vmatpush1.msra.mxu0 0.0
        %3975 = vmatprep.subr.mxu0 0.0
        %3976 = vmatpush1.msra.mxu0 0.0
        %3977 = vmatprep.subr.mxu0 0.0
        %3978 = vmatpush1.msra.mxu0 0.0
        %3979 = vmatprep.subr.mxu0 0.0
        %3980 = vmatpush1.msra.mxu0 0.0
        %3981 = vmatprep.subr.mxu0 0.0
        %3982 = vmatpush1.msra.mxu0 0.0
        %3983 = vmatprep.subr.mxu0 0.0
        %3984 = vmatpush1.msra.mxu0 0.0
        %3985 = vmatprep.subr.mxu0 0.0
        %3986 = vmatpush1.msra.mxu0 0.0
        %3987 = vmatprep.subr.mxu0 0.0
        %3988 = vmatpush1.msra.mxu0 0.0
        %3989 = vmatprep.subr.mxu0 0.0
        %3990 = vmatpush1.msra.mxu0 0.0
        %3991 = vmatprep.subr.mxu0 0.0
        %3992 = vmatpush1.msra.mxu0 0.0
        %3993 = vmatprep.subr.mxu0 0.0
        %3994 = vmatpush1.msra.mxu0 0.0
        %3995 = vmatprep.subr.mxu0 0.0
        %3996 = vmatpush1.msra.mxu0 0.0
        %3997 = vmatprep.subr.mxu0 0.0
        %3998 = vmatpush1.msra.mxu0 0.0
        %3999 = vmatprep.subr.mxu0 0.0
        %4000 = vmatpush1.msra.mxu0 0.0
        %4001 = vmatprep.subr.mxu0 0.0
        %4002 = vmatpush1.msra.mxu0 0.0
        %4003 = vmatprep.subr.mxu0 0.0
        %4004 = vmatpush1.msra.mxu0 0.0
        %4005 = vmatprep.subr.mxu0 0.0
        %4006 = vmatpush1.msra.mxu0 0.0
        %4007 = vmatprep.subr.mxu0 0.0
        %4008 = vmatpush1.msra.mxu0 0.0
        %4009 = vmatprep.subr.mxu0 0.0
        %4010 = vmatpush1.msra.mxu0 0.0
        %4011 = vmatprep.subr.mxu0 0.0
        %4012 = vmatpush1.msra.mxu0 0.0
        %4013 = vmatprep.subr.mxu0 0.0
        %4014 = vmatpush1.msra.mxu0 0.0
        %4015 = vmatprep.mubr.f32.mxu0 0.0
        %4016 = vmatmul.mubr.f32.gmra.mrb[0].mxu0 %v3399
        %v4017 = vpop.f32.mrb[0].mxu0
        %v4018 = vadd.f32 0.0, %v4017
        %v4019 = vpop.f32.mrb[0].mxu0
        %4020 = vdwg.mxu0
        %v4021 = vadd.f32 %v3727, %v218
        %v4022 = vmul.f32 %v3875, %v4021
        %v4023 = vsel %vm3155, %v4022, 0.0
        %4024 = vadd.xlane.f32.xlu0 %v4023
        %v4025 = vpop.xlane.xlu0 %4024
        %v4026 = vxor.u32 %v4025, 2147483648
        %v4027 = vmul.f32 %v4026, 1.442695
        %v4028 = vpow.pop %v4027
        %v4029 = vadd.f32 %v4028, 1.0
        %v4030 = vrcp.pop %v4029
        %v4031 = vmul.f32 1.0, %v4030
        %v4033 = vsel %vm3155, %v3727, 0
        %4035 = vmatprep.subr.mxu0 0.0
        %4036 = vmatpush1.msra.mxu0 %v221
        %4037 = vmatprep.subr.mxu0 0.0
        %4038 = vmatpush1.msra.mxu0 %v222
        %4039 = vmatprep.subr.mxu0 0.0
        %4040 = vmatpush1.msra.mxu0 %v223
        %4041 = vmatprep.subr.mxu0 0.0
        %4042 = vmatpush1.msra.mxu0 %v224
        %4043 = vmatprep.subr.mxu0 0.0
        %4044 = vmatpush1.msra.mxu0 0.0
        %4045 = vmatprep.subr.mxu0 0.0
        %4046 = vmatpush1.msra.mxu0 0.0
        %4047 = vmatprep.subr.mxu0 0.0
        %4048 = vmatpush1.msra.mxu0 0.0
        %4049 = vmatprep.subr.mxu0 0.0
        %4050 = vmatpush1.msra.mxu0 0.0
        %4051 = vmatprep.subr.mxu0 0.0
        %4052 = vmatpush1.msra.mxu0 0.0
        %4053 = vmatprep.subr.mxu0 0.0
        %4054 = vmatpush1.msra.mxu0 0.0
        %4055 = vmatprep.subr.mxu0 0.0
        %4056 = vmatpush1.msra.mxu0 0.0
        %4057 = vmatprep.subr.mxu0 0.0
        %4058 = vmatpush1.msra.mxu0 0.0
        %4059 = vmatprep.subr.mxu0 0.0
        %4060 = vmatpush1.msra.mxu0 0.0
        %4061 = vmatprep.subr.mxu0 0.0
        %4062 = vmatpush1.msra.mxu0 0.0
        %4063 = vmatprep.subr.mxu0 0.0
        %4064 = vmatpush1.msra.mxu0 0.0
        %4065 = vmatprep.subr.mxu0 0.0
        %4066 = vmatpush1.msra.mxu0 0.0
        %4067 = vmatprep.subr.mxu0 0.0
        %4068 = vmatpush1.msra.mxu0 0.0
        %4069 = vmatprep.subr.mxu0 0.0
        %4070 = vmatpush1.msra.mxu0 0.0
        %4071 = vmatprep.subr.mxu0 0.0
        %4072 = vmatpush1.msra.mxu0 0.0
        %4073 = vmatprep.subr.mxu0 0.0
        %4074 = vmatpush1.msra.mxu0 0.0
        %4075 = vmatprep.subr.mxu0 0.0
        %4076 = vmatpush1.msra.mxu0 0.0
        %4077 = vmatprep.subr.mxu0 0.0
        %4078 = vmatpush1.msra.mxu0 0.0
        %4079 = vmatprep.subr.mxu0 0.0
        %4080 = vmatpush1.msra.mxu0 0.0
        %4081 = vmatprep.subr.mxu0 0.0
        %4082 = vmatpush1.msra.mxu0 0.0
        %4083 = vmatprep.subr.mxu0 0.0
        %4084 = vmatpush1.msra.mxu0 0.0
        %4085 = vmatprep.subr.mxu0 0.0
        %4086 = vmatpush1.msra.mxu0 0.0
        %4087 = vmatprep.subr.mxu0 0.0
        %4088 = vmatpush1.msra.mxu0 0.0
        %4089 = vmatprep.subr.mxu0 0.0
        %4090 = vmatpush1.msra.mxu0 0.0
        %4091 = vmatprep.subr.mxu0 0.0
        %4092 = vmatpush1.msra.mxu0 0.0
        %4093 = vmatprep.subr.mxu0 0.0
        %4094 = vmatpush1.msra.mxu0 0.0
        %4095 = vmatprep.subr.mxu0 0.0
        %4096 = vmatpush1.msra.mxu0 0.0
        %4097 = vmatprep.subr.mxu0 0.0
        %4098 = vmatpush1.msra.mxu0 0.0
        %4099 = vmatprep.mubr.f32.mxu0 0.0
        %4100 = vmatmul.mubr.f32.gmra.mrb[0].mxu0 %v4033
        %v4101 = vpop.f32.mrb[0].mxu0
        %v4102 = vadd.f32 %v3306, %v4101
        %v4103 = vpop.f32.mrb[0].mxu0
        %4104 = vdwg.mxu0
        %v4105 = vadd.f32 %v4102, %v4018
        %vm4106 = vcmp.gt.f32.partialorder %v4105, 0.0
        %v4107 = vmul.f32 %v3707, %v4105
        %v4108 = vsel %vm4106, %v4105, %v4107
        %v4109 = vmul.f32 %v4031, %v4108
        %v4110 = vadd.f32 %v3727, %v4109
        %v4111 = vmul.f32 %v4110, %v4110
        %v4112 = vsel %vm3155, %v4111, 0.0
        %4113 = vadd.xlane.f32.xlu0 %v4112
        %v4114 = vpop.xlane.xlu0 %4113
        %v4115 = vrsqrt.pop %v4114
        %v4116 = vmul.f32 %v4114, %v4115
        %vm4117 = vcmp.eq.f32.partialorder %v4114, inf
        %v4118 = vsel %vm4117, %v4114, %v4116
        %vm4119 = vcmp.eq.f32.partialorder %v4114, 0.0
        %v4120 = vand.u32 %v4114, 2147483648
        %v4121 = vsel %vm4119, %v4120, %v4118
        %v4122 = vadd.f32 %v4121, 1e-08
        %vm4123 = vcmp.gt.f32.partialorder %v4110, 0.0
        %v4124 = vsel %vm4123, %v4110, 1.0
        %v4125 = vrcp.pop %v4122
        %v4126 = vmul.f32 %v4124, %v4125
        %v4127 = vadd.s32 %v3316, 2
        %vm4128 = vcmp.eq.s32.totalorder %v244, %v4127
        %v4129 = vsel %vm4128, 1, 0
        %v4130 = vcvt.s32.f32 %v4129
        %v4132 = vsel %vm3320, %v4130, 0
        %4134 = vmatprep.subr.mxu0 0.0
        %4135 = vmatpush1.msra.mxu0 %v3325
        %4136 = vmatprep.subr.mxu0 0.0
        %4137 = vmatpush1.msra.mxu0 0.0
        %4138 = vmatprep.subr.mxu0 0.0
        %4139 = vmatpush1.msra.mxu0 0.0
        %4140 = vmatprep.subr.mxu0 0.0
        %4141 = vmatpush1.msra.mxu0 0.0
        %4142 = vmatprep.subr.mxu0 0.0
        %4143 = vmatpush1.msra.mxu0 0.0
        %4144 = vmatprep.subr.mxu0 0.0
        %4145 = vmatpush1.msra.mxu0 0.0
        %4146 = vmatprep.subr.mxu0 0.0
        %4147 = vmatpush1.msra.mxu0 0.0
        %4148 = vmatprep.subr.mxu0 0.0
        %4149 = vmatpush1.msra.mxu0 0.0
        %4150 = vmatprep.subr.mxu0 0.0
        %4151 = vmatpush1.msra.mxu0 0.0
        %4152 = vmatprep.subr.mxu0 0.0
        %4153 = vmatpush1.msra.mxu0 0.0
        %4154 = vmatprep.subr.mxu0 0.0
        %4155 = vmatpush1.msra.mxu0 0.0
        %4156 = vmatprep.subr.mxu0 0.0
        %4157 = vmatpush1.msra.mxu0 0.0
        %4158 = vmatprep.subr.mxu0 0.0
        %4159 = vmatpush1.msra.mxu0 0.0
        %4160 = vmatprep.subr.mxu0 0.0
        %4161 = vmatpush1.msra.mxu0 0.0
        %4162 = vmatprep.subr.mxu0 0.0
        %4163 = vmatpush1.msra.mxu0 0.0
        %4164 = vmatprep.subr.mxu0 0.0
        %4165 = vmatpush1.msra.mxu0 0.0
        %4166 = vmatprep.subr.mxu0 0.0
        %4167 = vmatpush1.msra.mxu0 0.0
        %4168 = vmatprep.subr.mxu0 0.0
        %4169 = vmatpush1.msra.mxu0 0.0
        %4170 = vmatprep.subr.mxu0 0.0
        %4171 = vmatpush1.msra.mxu0 0.0
        %4172 = vmatprep.subr.mxu0 0.0
        %4173 = vmatpush1.msra.mxu0 0.0
        %4174 = vmatprep.subr.mxu0 0.0
        %4175 = vmatpush1.msra.mxu0 0.0
        %4176 = vmatprep.subr.mxu0 0.0
        %4177 = vmatpush1.msra.mxu0 0.0
        %4178 = vmatprep.subr.mxu0 0.0
        %4179 = vmatpush1.msra.mxu0 0.0
        %4180 = vmatprep.subr.mxu0 0.0
        %4181 = vmatpush1.msra.mxu0 0.0
        %4182 = vmatprep.subr.mxu0 0.0
        %4183 = vmatpush1.msra.mxu0 0.0
        %4184 = vmatprep.subr.mxu0 0.0
        %4185 = vmatpush1.msra.mxu0 0.0
        %4186 = vmatprep.subr.mxu0 0.0
        %4187 = vmatpush1.msra.mxu0 0.0
        %4188 = vmatprep.subr.mxu0 0.0
        %4189 = vmatpush1.msra.mxu0 0.0
        %4190 = vmatprep.subr.mxu0 0.0
        %4191 = vmatpush1.msra.mxu0 0.0
        %4192 = vmatprep.subr.mxu0 0.0
        %4193 = vmatpush1.msra.mxu0 0.0
        %4194 = vmatprep.subr.mxu0 0.0
        %4195 = vmatpush1.msra.mxu0 0.0
        %4196 = vmatprep.subr.mxu0 0.0
        %4197 = vmatpush1.msra.mxu0 0.0
        %4198 = vmatprep.mubr.f32.mxu0 0.0
        %4199 = vmatmul.mubr.f32.gmra.mrb[0].mxu0 %v4132
        %v4200 = vpop.f32.mrb[0].mxu0
        %v4201 = vadd.f32 0.0, %v4200
        %v4202 = vpop.f32.mrb[0].mxu0
        %4203 = vdwg.mxu0
        %v4205 = vsel %vm3401, %v4201, 0
        %4207 = vmatprep.subr.mxu0 0.0
        %4208 = vmatpush1.msra.mxu0 %v4205
        %4209 = vmatprep.subr.mxu0 0.0
        %4210 = vmatpush1.msra.mxu0 0.0
        %4211 = vmatprep.subr.mxu0 0.0
        %4212 = vmatpush1.msra.mxu0 0.0
        %4213 = vmatprep.subr.mxu0 0.0
        %4214 = vmatpush1.msra.mxu0 0.0
        %4215 = vmatprep.subr.mxu0 0.0
        %4216 = vmatpush1.msra.mxu0 0.0
        %4217 = vmatprep.subr.mxu0 0.0
        %4218 = vmatpush1.msra.mxu0 0.0
        %4219 = vmatprep.subr.mxu0 0.0
        %4220 = vmatpush1.msra.mxu0 0.0
        %4221 = vmatprep.subr.mxu0 0.0
        %4222 = vmatpush1.msra.mxu0 0.0
        %4223 = vmatprep.subr.mxu0 0.0
        %4224 = vmatpush1.msra.mxu0 0.0
        %4225 = vmatprep.subr.mxu0 0.0
        %4226 = vmatpush1.msra.mxu0 0.0
        %4227 = vmatprep.subr.mxu0 0.0
        %4228 = vmatpush1.msra.mxu0 0.0
        %4229 = vmatprep.subr.mxu0 0.0
        %4230 = vmatpush1.msra.mxu0 0.0
        %4231 = vmatprep.subr.mxu0 0.0
        %4232 = vmatpush1.msra.mxu0 0.0
        %4233 = vmatprep.subr.mxu0 0.0
        %4234 = vmatpush1.msra.mxu0 0.0
        %4235 = vmatprep.subr.mxu0 0.0
        %4236 = vmatpush1.msra.mxu0 0.0
        %4237 = vmatprep.subr.mxu0 0.0
        %4238 = vmatpush1.msra.mxu0 0.0
        %4239 = vmatprep.subr.mxu0 0.0
        %4240 = vmatpush1.msra.mxu0 0.0
        %4241 = vmatprep.subr.mxu0 0.0
        %4242 = vmatpush1.msra.mxu0 0.0
        %4243 = vmatprep.subr.mxu0 0.0
        %4244 = vmatpush1.msra.mxu0 0.0
        %4245 = vmatprep.subr.mxu0 0.0
        %4246 = vmatpush1.msra.mxu0 0.0
        %4247 = vmatprep.subr.mxu0 0.0
        %4248 = vmatpush1.msra.mxu0 0.0
        %4249 = vmatprep.subr.mxu0 0.0
        %4250 = vmatpush1.msra.mxu0 0.0
        %4251 = vmatprep.subr.mxu0 0.0
        %4252 = vmatpush1.msra.mxu0 0.0
        %4253 = vmatprep.subr.mxu0 0.0
        %4254 = vmatpush1.msra.mxu0 0.0
        %4255 = vmatprep.subr.mxu0 0.0
        %4256 = vmatpush1.msra.mxu0 0.0
        %4257 = vmatprep.subr.mxu0 0.0
        %4258 = vmatpush1.msra.mxu0 0.0
        %4259 = vmatprep.subr.mxu0 0.0
        %4260 = vmatpush1.msra.mxu0 0.0
        %4261 = vmatprep.subr.mxu0 0.0
        %4262 = vmatpush1.msra.mxu0 0.0
        %4263 = vmatprep.subr.mxu0 0.0
        %4264 = vmatpush1.msra.mxu0 0.0
        %4265 = vmatprep.subr.mxu0 0.0
        %4266 = vmatpush1.msra.mxu0 0.0
        %4267 = vmatprep.subr.mxu0 0.0
        %4268 = vmatpush1.msra.mxu0 0.0
        %4269 = vmatprep.subr.mxu0 0.0
        %4270 = vmatpush1.msra.mxu0 0.0
        %4271 = vmatprep.mubr.f32.mxu0 0.0
        %4272 = vmatmul.mubr.f32.gmra.mrb[0].mxu0 %v3399
        %v4273 = vpop.f32.mrb[0].mxu0
        %v4274 = vadd.f32 0.0, %v4273
        %v4275 = vpop.f32.mrb[0].mxu0
        %4276 = vdwg.mxu0
        %4277 = vmatprep.subr.mxu0 0.0
        %4278 = vmatpush1.msra.mxu0 %v3476
        %4279 = vmatprep.subr.mxu0 0.0
        %4280 = vmatpush1.msra.mxu0 0.0
        %4281 = vmatprep.subr.mxu0 0.0
        %4282 = vmatpush1.msra.mxu0 0.0
        %4283 = vmatprep.subr.mxu0 0.0
        %4284 = vmatpush1.msra.mxu0 0.0
        %4285 = vmatprep.subr.mxu0 0.0
        %4286 = vmatpush1.msra.mxu0 0.0
        %4287 = vmatprep.subr.mxu0 0.0
        %4288 = vmatpush1.msra.mxu0 0.0
        %4289 = vmatprep.subr.mxu0 0.0
        %4290 = vmatpush1.msra.mxu0 0.0
        %4291 = vmatprep.subr.mxu0 0.0
        %4292 = vmatpush1.msra.mxu0 0.0
        %4293 = vmatprep.subr.mxu0 0.0
        %4294 = vmatpush1.msra.mxu0 0.0
        %4295 = vmatprep.subr.mxu0 0.0
        %4296 = vmatpush1.msra.mxu0 0.0
        %4297 = vmatprep.subr.mxu0 0.0
        %4298 = vmatpush1.msra.mxu0 0.0
        %4299 = vmatprep.subr.mxu0 0.0
        %4300 = vmatpush1.msra.mxu0 0.0
        %4301 = vmatprep.subr.mxu0 0.0
        %4302 = vmatpush1.msra.mxu0 0.0
        %4303 = vmatprep.subr.mxu0 0.0
        %4304 = vmatpush1.msra.mxu0 0.0
        %4305 = vmatprep.subr.mxu0 0.0
        %4306 = vmatpush1.msra.mxu0 0.0
        %4307 = vmatprep.subr.mxu0 0.0
        %4308 = vmatpush1.msra.mxu0 0.0
        %4309 = vmatprep.subr.mxu0 0.0
        %4310 = vmatpush1.msra.mxu0 0.0
        %4311 = vmatprep.subr.mxu0 0.0
        %4312 = vmatpush1.msra.mxu0 0.0
        %4313 = vmatprep.subr.mxu0 0.0
        %4314 = vmatpush1.msra.mxu0 0.0
        %4315 = vmatprep.subr.mxu0 0.0
        %4316 = vmatpush1.msra.mxu0 0.0
        %4317 = vmatprep.subr.mxu0 0.0
        %4318 = vmatpush1.msra.mxu0 0.0
        %4319 = vmatprep.subr.mxu0 0.0
        %4320 = vmatpush1.msra.mxu0 0.0
        %4321 = vmatprep.subr.mxu0 0.0
        %4322 = vmatpush1.msra.mxu0 0.0
        %4323 = vmatprep.subr.mxu0 0.0
        %4324 = vmatpush1.msra.mxu0 0.0
        %4325 = vmatprep.subr.mxu0 0.0
        %4326 = vmatpush1.msra.mxu0 0.0
        %4327 = vmatprep.subr.mxu0 0.0
        %4328 = vmatpush1.msra.mxu0 0.0
        %4329 = vmatprep.subr.mxu0 0.0
        %4330 = vmatpush1.msra.mxu0 0.0
        %4331 = vmatprep.subr.mxu0 0.0
        %4332 = vmatpush1.msra.mxu0 0.0
        %4333 = vmatprep.subr.mxu0 0.0
        %4334 = vmatpush1.msra.mxu0 0.0
        %4335 = vmatprep.subr.mxu0 0.0
        %4336 = vmatpush1.msra.mxu0 0.0
        %4337 = vmatprep.subr.mxu0 0.0
        %4338 = vmatpush1.msra.mxu0 0.0
        %4339 = vmatprep.subr.mxu0 0.0
        %4340 = vmatpush1.msra.mxu0 0.0
        %4341 = vmatprep.mubr.f32.mxu0 0.0
        %4342 = vmatmul.mubr.f32.gmra.mrb[0].mxu0 %v4132
        %v4343 = vpop.f32.mrb[0].mxu0
        %v4344 = vadd.f32 0.0, %v4343
        %v4345 = vpop.f32.mrb[0].mxu0
        %4346 = vdwg.mxu0
        %v4348 = vsel %vm3401, %v4344, 0
        %4350 = vmatprep.subr.mxu0 0.0
        %4351 = vmatpush1.msra.mxu0 %v4348
        %4352 = vmatprep.subr.mxu0 0.0
        %4353 = vmatpush1.msra.mxu0 0.0
        %4354 = vmatprep.subr.mxu0 0.0
        %4355 = vmatpush1.msra.mxu0 0.0
        %4356 = vmatprep.subr.mxu0 0.0
        %4357 = vmatpush1.msra.mxu0 0.0
        %4358 = vmatprep.subr.mxu0 0.0
        %4359 = vmatpush1.msra.mxu0 0.0
        %4360 = vmatprep.subr.mxu0 0.0
        %4361 = vmatpush1.msra.mxu0 0.0
        %4362 = vmatprep.subr.mxu0 0.0
        %4363 = vmatpush1.msra.mxu0 0.0
        %4364 = vmatprep.subr.mxu0 0.0
        %4365 = vmatpush1.msra.mxu0 0.0
        %4366 = vmatprep.subr.mxu0 0.0
        %4367 = vmatpush1.msra.mxu0 0.0
        %4368 = vmatprep.subr.mxu0 0.0
        %4369 = vmatpush1.msra.mxu0 0.0
        %4370 = vmatprep.subr.mxu0 0.0
        %4371 = vmatpush1.msra.mxu0 0.0
        %4372 = vmatprep.subr.mxu0 0.0
        %4373 = vmatpush1.msra.mxu0 0.0
        %4374 = vmatprep.subr.mxu0 0.0
        %4375 = vmatpush1.msra.mxu0 0.0
        %4376 = vmatprep.subr.mxu0 0.0
        %4377 = vmatpush1.msra.mxu0 0.0
        %4378 = vmatprep.subr.mxu0 0.0
        %4379 = vmatpush1.msra.mxu0 0.0
        %4380 = vmatprep.subr.mxu0 0.0
        %4381 = vmatpush1.msra.mxu0 0.0
        %4382 = vmatprep.subr.mxu0 0.0
        %4383 = vmatpush1.msra.mxu0 0.0
        %4384 = vmatprep.subr.mxu0 0.0
        %4385 = vmatpush1.msra.mxu0 0.0
        %4386 = vmatprep.subr.mxu0 0.0
        %4387 = vmatpush1.msra.mxu0 0.0
        %4388 = vmatprep.subr.mxu0 0.0
        %4389 = vmatpush1.msra.mxu0 0.0
        %4390 = vmatprep.subr.mxu0 0.0
        %4391 = vmatpush1.msra.mxu0 0.0
        %4392 = vmatprep.subr.mxu0 0.0
        %4393 = vmatpush1.msra.mxu0 0.0
        %4394 = vmatprep.subr.mxu0 0.0
        %4395 = vmatpush1.msra.mxu0 0.0
        %4396 = vmatprep.subr.mxu0 0.0
        %4397 = vmatpush1.msra.mxu0 0.0
        %4398 = vmatprep.subr.mxu0 0.0
        %4399 = vmatpush1.msra.mxu0 0.0
        %4400 = vmatprep.subr.mxu0 0.0
        %4401 = vmatpush1.msra.mxu0 0.0
        %4402 = vmatprep.subr.mxu0 0.0
        %4403 = vmatpush1.msra.mxu0 0.0
        %4404 = vmatprep.subr.mxu0 0.0
        %4405 = vmatpush1.msra.mxu0 0.0
        %4406 = vmatprep.subr.mxu0 0.0
        %4407 = vmatpush1.msra.mxu0 0.0
        %4408 = vmatprep.subr.mxu0 0.0
        %4409 = vmatpush1.msra.mxu0 0.0
        %4410 = vmatprep.subr.mxu0 0.0
        %4411 = vmatpush1.msra.mxu0 0.0
        %4412 = vmatprep.subr.mxu0 0.0
        %4413 = vmatpush1.msra.mxu0 0.0
        %4414 = vmatprep.mubr.f32.mxu0 0.0
        %4415 = vmatmul.mubr.f32.gmra.mrb[0].mxu0 %v3399
        %v4416 = vpop.f32.mrb[0].mxu0
        %v4417 = vadd.f32 0.0, %v4416
        %v4418 = vpop.f32.mrb[0].mxu0
        %4419 = vdwg.mxu0
        %v4420 = vadd.f32 %v4126, %v218
        %v4421 = vmul.f32 %v4274, %v4420
        %v4422 = vsel %vm3155, %v4421, 0.0
        %4423 = vadd.xlane.f32.xlu0 %v4422
        %v4424 = vpop.xlane.xlu0 %4423
        %v4425 = vxor.u32 %v4424, 2147483648
        %v4426 = vmul.f32 %v4425, 1.442695
        %v4427 = vpow.pop %v4426
        %v4428 = vadd.f32 %v4427, 1.0
        %v4429 = vrcp.pop %v4428
        %v4430 = vmul.f32 1.0, %v4429
        %v4432 = vsel %vm3155, %v4126, 0
        %4434 = vmatprep.subr.mxu0 0.0
        %4435 = vmatpush1.msra.mxu0 %v221
        %4436 = vmatprep.subr.mxu0 0.0
        %4437 = vmatpush1.msra.mxu0 %v222
        %4438 = vmatprep.subr.mxu0 0.0
        %4439 = vmatpush1.msra.mxu0 %v223
        %4440 = vmatprep.subr.mxu0 0.0
        %4441 = vmatpush1.msra.mxu0 %v224
        %4442 = vmatprep.subr.mxu0 0.0
        %4443 = vmatpush1.msra.mxu0 0.0
        %4444 = vmatprep.subr.mxu0 0.0
        %4445 = vmatpush1.msra.mxu0 0.0
        %4446 = vmatprep.subr.mxu0 0.0
        %4447 = vmatpush1.msra.mxu0 0.0
        %4448 = vmatprep.subr.mxu0 0.0
        %4449 = vmatpush1.msra.mxu0 0.0
        %4450 = vmatprep.subr.mxu0 0.0
        %4451 = vmatpush1.msra.mxu0 0.0
        %4452 = vmatprep.subr.mxu0 0.0
        %4453 = vmatpush1.msra.mxu0 0.0
        %4454 = vmatprep.subr.mxu0 0.0
        %4455 = vmatpush1.msra.mxu0 0.0
        %4456 = vmatprep.subr.mxu0 0.0
        %4457 = vmatpush1.msra.mxu0 0.0
        %4458 = vmatprep.subr.mxu0 0.0
        %4459 = vmatpush1.msra.mxu0 0.0
        %4460 = vmatprep.subr.mxu0 0.0
        %4461 = vmatpush1.msra.mxu0 0.0
        %4462 = vmatprep.subr.mxu0 0.0
        %4463 = vmatpush1.msra.mxu0 0.0
        %4464 = vmatprep.subr.mxu0 0.0
        %4465 = vmatpush1.msra.mxu0 0.0
        %4466 = vmatprep.subr.mxu0 0.0
        %4467 = vmatpush1.msra.mxu0 0.0
        %4468 = vmatprep.subr.mxu0 0.0
        %4469 = vmatpush1.msra.mxu0 0.0
        %4470 = vmatprep.subr.mxu0 0.0
        %4471 = vmatpush1.msra.mxu0 0.0
        %4472 = vmatprep.subr.mxu0 0.0
        %4473 = vmatpush1.msra.mxu0 0.0
        %4474 = vmatprep.subr.mxu0 0.0
        %4475 = vmatpush1.msra.mxu0 0.0
        %4476 = vmatprep.subr.mxu0 0.0
        %4477 = vmatpush1.msra.mxu0 0.0
        %4478 = vmatprep.subr.mxu0 0.0
        %4479 = vmatpush1.msra.mxu0 0.0
        %4480 = vmatprep.subr.mxu0 0.0
        %4481 = vmatpush1.msra.mxu0 0.0
        %4482 = vmatprep.subr.mxu0 0.0
        %4483 = vmatpush1.msra.mxu0 0.0
        %4484 = vmatprep.subr.mxu0 0.0
        %4485 = vmatpush1.msra.mxu0 0.0
        %4486 = vmatprep.subr.mxu0 0.0
        %4487 = vmatpush1.msra.mxu0 0.0
        %4488 = vmatprep.subr.mxu0 0.0
        %4489 = vmatpush1.msra.mxu0 0.0
        %4490 = vmatprep.subr.mxu0 0.0
        %4491 = vmatpush1.msra.mxu0 0.0
        %4492 = vmatprep.subr.mxu0 0.0
        %4493 = vmatpush1.msra.mxu0 0.0
        %4494 = vmatprep.subr.mxu0 0.0
        %4495 = vmatpush1.msra.mxu0 0.0
        %4496 = vmatprep.subr.mxu0 0.0
        %4497 = vmatpush1.msra.mxu0 0.0
        %4498 = vmatprep.mubr.f32.mxu0 0.0
        %4499 = vmatmul.mubr.f32.gmra.mrb[0].mxu0 %v4432
        %v4500 = vpop.f32.mrb[0].mxu0
        %v4501 = vadd.f32 %v3306, %v4500
        %v4502 = vpop.f32.mrb[0].mxu0
        %4503 = vdwg.mxu0
        %v4504 = vadd.f32 %v4501, %v4417
        %vm4505 = vcmp.gt.f32.partialorder %v4504, 0.0
        %v4506 = vmul.f32 %v3707, %v4504
        %v4507 = vsel %vm4505, %v4504, %v4506
        %v4508 = vmul.f32 %v4430, %v4507
        %v4509 = vadd.f32 %v4126, %v4508
        %v4510 = vmul.f32 %v4509, %v4509
        %v4511 = vsel %vm3155, %v4510, 0.0
        %4512 = vadd.xlane.f32.xlu0 %v4511
        %v4513 = vpop.xlane.xlu0 %4512
        %v4514 = vrsqrt.pop %v4513
        %v4515 = vmul.f32 %v4513, %v4514
        %vm4516 = vcmp.eq.f32.partialorder %v4513, inf
        %v4517 = vsel %vm4516, %v4513, %v4515
        %vm4518 = vcmp.eq.f32.partialorder %v4513, 0.0
        %v4519 = vand.u32 %v4513, 2147483648
        %v4520 = vsel %vm4518, %v4519, %v4517
        %v4521 = vadd.f32 %v4520, 1e-08
        %vm4522 = vcmp.gt.f32.partialorder %v4509, 0.0
        %v4523 = vsel %vm4522, %v4509, 1.0
        %v4524 = vrcp.pop %v4521
        %v4525 = vmul.f32 %v4523, %v4524
        %v4526 = vmul.u32 %v244, 2
        %vm4527 = vcmp.ge.s32.totalorder %v3308, %v4526
        %v4528 = vadd.s32 %v4526, 2
        %vm4529 = vcmp.lt.s32.totalorder %v3308, %v4528
        %vm4530 = vmand %vm4527, %vm4529
        %v4531 = vsel %vm4530, 1, 0
        %v4532 = vcvt.s32.f32 %v4531
        %v4533 = vmul.u32 %v3308, 4
        %vm4534 = vcmp.ge.s32.totalorder %v244, %v4533
        %v4535 = vadd.s32 %v4533, 4
        %vm4536 = vcmp.lt.s32.totalorder %v244, %v4535
        %vm4537 = vmand %vm4534, %vm4536
        %v4538 = vsel %vm4537, 1, 0
        %v4539 = vcvt.s32.f32 %v4538
        %v4541 = vsel %vm3397, %v4532, 0
        %v4544 = vsel %vm3401, %v4539, 0
        %4546 = vmatprep.subr.mxu0 0.0
        %4547 = vmatpush1.msra.mxu0 %v4544
        %4548 = vmatprep.subr.mxu0 0.0
        %4549 = vmatpush1.msra.mxu0 0.0
        %4550 = vmatprep.subr.mxu0 0.0
        %4551 = vmatpush1.msra.mxu0 0.0
        %4552 = vmatprep.subr.mxu0 0.0
        %4553 = vmatpush1.msra.mxu0 0.0
        %4554 = vmatprep.subr.mxu0 0.0
        %4555 = vmatpush1.msra.mxu0 0.0
        %4556 = vmatprep.subr.mxu0 0.0
        %4557 = vmatpush1.msra.mxu0 0.0
        %4558 = vmatprep.subr.mxu0 0.0
        %4559 = vmatpush1.msra.mxu0 0.0
        %4560 = vmatprep.subr.mxu0 0.0
        %4561 = vmatpush1.msra.mxu0 0.0
        %4562 = vmatprep.subr.mxu0 0.0
        %4563 = vmatpush1.msra.mxu0 0.0
        %4564 = vmatprep.subr.mxu0 0.0
        %4565 = vmatpush1.msra.mxu0 0.0
        %4566 = vmatprep.subr.mxu0 0.0
        %4567 = vmatpush1.msra.mxu0 0.0
        %4568 = vmatprep.subr.mxu0 0.0
        %4569 = vmatpush1.msra.mxu0 0.0
        %4570 = vmatprep.subr.mxu0 0.0
        %4571 = vmatpush1.msra.mxu0 0.0
        %4572 = vmatprep.subr.mxu0 0.0
        %4573 = vmatpush1.msra.mxu0 0.0
        %4574 = vmatprep.subr.mxu0 0.0
        %4575 = vmatpush1.msra.mxu0 0.0
        %4576 = vmatprep.subr.mxu0 0.0
        %4577 = vmatpush1.msra.mxu0 0.0
        %4578 = vmatprep.subr.mxu0 0.0
        %4579 = vmatpush1.msra.mxu0 0.0
        %4580 = vmatprep.subr.mxu0 0.0
        %4581 = vmatpush1.msra.mxu0 0.0
        %4582 = vmatprep.subr.mxu0 0.0
        %4583 = vmatpush1.msra.mxu0 0.0
        %4584 = vmatprep.subr.mxu0 0.0
        %4585 = vmatpush1.msra.mxu0 0.0
        %4586 = vmatprep.subr.mxu0 0.0
        %4587 = vmatpush1.msra.mxu0 0.0
        %4588 = vmatprep.subr.mxu0 0.0
        %4589 = vmatpush1.msra.mxu0 0.0
        %4590 = vmatprep.subr.mxu0 0.0
        %4591 = vmatpush1.msra.mxu0 0.0
        %4592 = vmatprep.subr.mxu0 0.0
        %4593 = vmatpush1.msra.mxu0 0.0
        %4594 = vmatprep.subr.mxu0 0.0
        %4595 = vmatpush1.msra.mxu0 0.0
        %4596 = vmatprep.subr.mxu0 0.0
        %4597 = vmatpush1.msra.mxu0 0.0
        %4598 = vmatprep.subr.mxu0 0.0
        %4599 = vmatpush1.msra.mxu0 0.0
        %4600 = vmatprep.subr.mxu0 0.0
        %4601 = vmatpush1.msra.mxu0 0.0
        %4602 = vmatprep.subr.mxu0 0.0
        %4603 = vmatpush1.msra.mxu0 0.0
        %4604 = vmatprep.subr.mxu0 0.0
        %4605 = vmatpush1.msra.mxu0 0.0
        %4606 = vmatprep.subr.mxu0 0.0
        %4607 = vmatpush1.msra.mxu0 0.0
        %4608 = vmatprep.subr.mxu0 0.0
        %4609 = vmatpush1.msra.mxu0 0.0
        %4610 = vmatprep.mubr.f32.mxu0 0.0
        %4611 = vmatmul.mubr.f32.gmra.mrb[0].mxu0 %v4541
        %v4612 = vpop.f32.mrb[0].mxu0
        %v4613 = vadd.f32 0.0, %v4612
        %v4614 = vpop.f32.mrb[0].mxu0
        %4615 = vdwg.mxu0
        %v4617 = vsel %vm3155, %v3154, 0
        %v4620 = vsel %vm3155, %v4525, 0
        %4622 = vmatprep.subr.mxu0 0.0
        %4623 = vmatpush1.xpose.msra.mxu0 %v4620
        %4624 = vmatprep.subr.mxu0 0.0
        %4625 = vmatpush1.xpose.msra.mxu0 0.0
        %4626 = vmatprep.subr.mxu0 0.0
        %4627 = vmatpush1.xpose.msra.mxu0 0.0
        %4628 = vmatprep.subr.mxu0 0.0
        %4629 = vmatpush1.xpose.msra.mxu0 0.0
        %4630 = vmatprep.subr.mxu0 0.0
        %4631 = vmatpush1.xpose.msra.mxu0 0.0
        %4632 = vmatprep.subr.mxu0 0.0
        %4633 = vmatpush1.xpose.msra.mxu0 0.0
        %4634 = vmatprep.subr.mxu0 0.0
        %4635 = vmatpush1.xpose.msra.mxu0 0.0
        %4636 = vmatprep.subr.mxu0 0.0
        %4637 = vmatpush1.xpose.msra.mxu0 0.0
        %4638 = vmatprep.subr.mxu0 0.0
        %4639 = vmatpush1.xpose.msra.mxu0 0.0
        %4640 = vmatprep.subr.mxu0 0.0
        %4641 = vmatpush1.xpose.msra.mxu0 0.0
        %4642 = vmatprep.subr.mxu0 0.0
        %4643 = vmatpush1.xpose.msra.mxu0 0.0
        %4644 = vmatprep.subr.mxu0 0.0
        %4645 = vmatpush1.xpose.msra.mxu0 0.0
        %4646 = vmatprep.subr.mxu0 0.0
        %4647 = vmatpush1.xpose.msra.mxu0 0.0
        %4648 = vmatprep.subr.mxu0 0.0
        %4649 = vmatpush1.xpose.msra.mxu0 0.0
        %4650 = vmatprep.subr.mxu0 0.0
        %4651 = vmatpush1.xpose.msra.mxu0 0.0
        %4652 = vmatprep.subr.mxu0 0.0
        %4653 = vmatpush1.xpose.msra.mxu0 0.0
        %4654 = vmatprep.subr.mxu0 0.0
        %4655 = vmatpush1.xpose.msra.mxu0 0.0
        %4656 = vmatprep.subr.mxu0 0.0
        %4657 = vmatpush1.xpose.msra.mxu0 0.0
        %4658 = vmatprep.subr.mxu0 0.0
        %4659 = vmatpush1.xpose.msra.mxu0 0.0
        %4660 = vmatprep.subr.mxu0 0.0
        %4661 = vmatpush1.xpose.msra.mxu0 0.0
        %4662 = vmatprep.subr.mxu0 0.0
        %4663 = vmatpush1.xpose.msra.mxu0 0.0
        %4664 = vmatprep.subr.mxu0 0.0
        %4665 = vmatpush1.xpose.msra.mxu0 0.0
        %4666 = vmatprep.subr.mxu0 0.0
        %4667 = vmatpush1.xpose.msra.mxu0 0.0
        %4668 = vmatprep.subr.mxu0 0.0
        %4669 = vmatpush1.xpose.msra.mxu0 0.0
        %4670 = vmatprep.subr.mxu0 0.0
        %4671 = vmatpush1.xpose.msra.mxu0 0.0
        %4672 = vmatprep.subr.mxu0 0.0
        %4673 = vmatpush1.xpose.msra.mxu0 0.0
        %4674 = vmatprep.subr.mxu0 0.0
        %4675 = vmatpush1.xpose.msra.mxu0 0.0
        %4676 = vmatprep.subr.mxu0 0.0
        %4677 = vmatpush1.xpose.msra.mxu0 0.0
        %4678 = vmatprep.subr.mxu0 0.0
        %4679 = vmatpush1.xpose.msra.mxu0 0.0
        %4680 = vmatprep.subr.mxu0 0.0
        %4681 = vmatpush1.xpose.msra.mxu0 0.0
        %4682 = vmatprep.subr.mxu0 0.0
        %4683 = vmatpush1.xpose.msra.mxu0 0.0
        %4684 = vmatprep.subr.mxu0 0.0
        %4685 = vmatpush1.xpose.msra.mxu0 0.0
        %4686 = vmatprep.mubr.f32.mxu0 0.0
        %4687 = vmatmul.mubr.f32.gmra.mrb[0].mxu0 %v4617
        %v4688 = vpop.f32.mrb[0].mxu0
        %v4689 = vadd.f32 0.0, %v4688
        %v4690 = vpop.f32.mrb[0].mxu0
        %4691 = vdwg.mxu0
        %vm4692 = vcmp.gt.f32.partialorder %v4613, 0.5
        %v4693 = vsel %vm4692, %v4689, -1e+30
        %vm4694 = vcmask 60416
        %v4695 = vsel %vm4694, %v4693, -inf
        %4696 = vmax.xlane.f32.xlu0 %v4695
        %v4697 = vpop.xlane.xlu0 %4696
        %v4698 = vsub.f32 %v4693, %v4697
        %v4699 = vmul.f32 %v4698, 1.442695
        %v4700 = vpow.pop %v4699
        %v4701 = vsel %vm4694, %v4700, 0.0
        %4702 = vadd.xlane.f32.xlu0 %v4701
        %v4703 = vpop.xlane.xlu0 %4702
        %v4704 = vrcp.pop %v4703
        %v4705 = vmul.f32 %v4700, %v4704
        %vm4706 = vcmask 64512
        %v4708 = vsel %vm4706, %v4705, 0
        %4710 = vmatprep.subr.mxu0 0.0
        %4711 = vmatpush1.msra.mxu0 %v4525
        %4712 = vmatprep.subr.mxu0 0.0
        %4713 = vmatpush1.msra.mxu0 0.0
        %4714 = vmatprep.subr.mxu0 0.0
        %4715 = vmatpush1.msra.mxu0 0.0
        %4716 = vmatprep.subr.mxu0 0.0
        %4717 = vmatpush1.msra.mxu0 0.0
        %4718 = vmatprep.subr.mxu0 0.0
        %4719 = vmatpush1.msra.mxu0 0.0
        %4720 = vmatprep.subr.mxu0 0.0
        %4721 = vmatpush1.msra.mxu0 0.0
        %4722 = vmatprep.subr.mxu0 0.0
        %4723 = vmatpush1.msra.mxu0 0.0
        %4724 = vmatprep.subr.mxu0 0.0
        %4725 = vmatpush1.msra.mxu0 0.0
        %4726 = vmatprep.subr.mxu0 0.0
        %4727 = vmatpush1.msra.mxu0 0.0
        %4728 = vmatprep.subr.mxu0 0.0
        %4729 = vmatpush1.msra.mxu0 0.0
        %4730 = vmatprep.subr.mxu0 0.0
        %4731 = vmatpush1.msra.mxu0 0.0
        %4732 = vmatprep.subr.mxu0 0.0
        %4733 = vmatpush1.msra.mxu0 0.0
        %4734 = vmatprep.subr.mxu0 0.0
        %4735 = vmatpush1.msra.mxu0 0.0
        %4736 = vmatprep.subr.mxu0 0.0
        %4737 = vmatpush1.msra.mxu0 0.0
        %4738 = vmatprep.subr.mxu0 0.0
        %4739 = vmatpush1.msra.mxu0 0.0
        %4740 = vmatprep.subr.mxu0 0.0
        %4741 = vmatpush1.msra.mxu0 0.0
        %4742 = vmatprep.subr.mxu0 0.0
        %4743 = vmatpush1.msra.mxu0 0.0
        %4744 = vmatprep.subr.mxu0 0.0
        %4745 = vmatpush1.msra.mxu0 0.0
        %4746 = vmatprep.subr.mxu0 0.0
        %4747 = vmatpush1.msra.mxu0 0.0
        %4748 = vmatprep.subr.mxu0 0.0
        %4749 = vmatpush1.msra.mxu0 0.0
        %4750 = vmatprep.subr.mxu0 0.0
        %4751 = vmatpush1.msra.mxu0 0.0
        %4752 = vmatprep.subr.mxu0 0.0
        %4753 = vmatpush1.msra.mxu0 0.0
        %4754 = vmatprep.subr.mxu0 0.0
        %4755 = vmatpush1.msra.mxu0 0.0
        %4756 = vmatprep.subr.mxu0 0.0
        %4757 = vmatpush1.msra.mxu0 0.0
        %4758 = vmatprep.subr.mxu0 0.0
        %4759 = vmatpush1.msra.mxu0 0.0
        %4760 = vmatprep.subr.mxu0 0.0
        %4761 = vmatpush1.msra.mxu0 0.0
        %4762 = vmatprep.subr.mxu0 0.0
        %4763 = vmatpush1.msra.mxu0 0.0
        %4764 = vmatprep.subr.mxu0 0.0
        %4765 = vmatpush1.msra.mxu0 0.0
        %4766 = vmatprep.subr.mxu0 0.0
        %4767 = vmatpush1.msra.mxu0 0.0
        %4768 = vmatprep.subr.mxu0 0.0
        %4769 = vmatpush1.msra.mxu0 0.0
        %4770 = vmatprep.subr.mxu0 0.0
        %4771 = vmatpush1.msra.mxu0 0.0
        %4772 = vmatprep.subr.mxu0 0.0
        %4773 = vmatpush1.msra.mxu0 0.0
        %4774 = vmatprep.mubr.f32.mxu0 0.0
        %4775 = vmatmul.mubr.f32.gmra.mrb[0].mxu0 %v4708
        %v4776 = vpop.f32.mrb[0].mxu0
        %v4777 = vadd.f32 0.0, %v4776
        %v4778 = vpop.f32.mrb[0].mxu0
        %4779 = vdwg.mxu0
        %v4781 = vsel %vm3155, %v4777, 0
        %4783 = vmatprep.subr.mxu0 0.0
        %4784 = vmatpush1.msra.mxu0 %v233
        %4785 = vmatprep.subr.mxu0 0.0
        %4786 = vmatpush1.msra.mxu0 %v234
        %4787 = vmatprep.subr.mxu0 0.0
        %4788 = vmatpush1.msra.mxu0 %v235
        %4789 = vmatprep.subr.mxu0 0.0
        %4790 = vmatpush1.msra.mxu0 %v236
        %4791 = vmatprep.subr.mxu0 0.0
        %4792 = vmatpush1.msra.mxu0 0.0
        %4793 = vmatprep.subr.mxu0 0.0
        %4794 = vmatpush1.msra.mxu0 0.0
        %4795 = vmatprep.subr.mxu0 0.0
        %4796 = vmatpush1.msra.mxu0 0.0
        %4797 = vmatprep.subr.mxu0 0.0
        %4798 = vmatpush1.msra.mxu0 0.0
        %4799 = vmatprep.subr.mxu0 0.0
        %4800 = vmatpush1.msra.mxu0 0.0
        %4801 = vmatprep.subr.mxu0 0.0
        %4802 = vmatpush1.msra.mxu0 0.0
        %4803 = vmatprep.subr.mxu0 0.0
        %4804 = vmatpush1.msra.mxu0 0.0
        %4805 = vmatprep.subr.mxu0 0.0
        %4806 = vmatpush1.msra.mxu0 0.0
        %4807 = vmatprep.subr.mxu0 0.0
        %4808 = vmatpush1.msra.mxu0 0.0
        %4809 = vmatprep.subr.mxu0 0.0
        %4810 = vmatpush1.msra.mxu0 0.0
        %4811 = vmatprep.subr.mxu0 0.0
        %4812 = vmatpush1.msra.mxu0 0.0
        %4813 = vmatprep.subr.mxu0 0.0
        %4814 = vmatpush1.msra.mxu0 0.0
        %4815 = vmatprep.subr.mxu0 0.0
        %4816 = vmatpush1.msra.mxu0 0.0
        %4817 = vmatprep.subr.mxu0 0.0
        %4818 = vmatpush1.msra.mxu0 0.0
        %4819 = vmatprep.subr.mxu0 0.0
        %4820 = vmatpush1.msra.mxu0 0.0
        %4821 = vmatprep.subr.mxu0 0.0
        %4822 = vmatpush1.msra.mxu0 0.0
        %4823 = vmatprep.subr.mxu0 0.0
        %4824 = vmatpush1.msra.mxu0 0.0
        %4825 = vmatprep.subr.mxu0 0.0
        %4826 = vmatpush1.msra.mxu0 0.0
        %4827 = vmatprep.subr.mxu0 0.0
        %4828 = vmatpush1.msra.mxu0 0.0
        %4829 = vmatprep.subr.mxu0 0.0
        %4830 = vmatpush1.msra.mxu0 0.0
        %4831 = vmatprep.subr.mxu0 0.0
        %4832 = vmatpush1.msra.mxu0 0.0
        %4833 = vmatprep.subr.mxu0 0.0
        %4834 = vmatpush1.msra.mxu0 0.0
        %4835 = vmatprep.subr.mxu0 0.0
        %4836 = vmatpush1.msra.mxu0 0.0
        %4837 = vmatprep.subr.mxu0 0.0
        %4838 = vmatpush1.msra.mxu0 0.0
        %4839 = vmatprep.subr.mxu0 0.0
        %4840 = vmatpush1.msra.mxu0 0.0
        %4841 = vmatprep.subr.mxu0 0.0
        %4842 = vmatpush1.msra.mxu0 0.0
        %4843 = vmatprep.subr.mxu0 0.0
        %4844 = vmatpush1.msra.mxu0 0.0
        %4845 = vmatprep.subr.mxu0 0.0
        %4846 = vmatpush1.msra.mxu0 0.0
        %4847 = vmatprep.mubr.f32.mxu0 0.0
        %4848 = vmatmul.mubr.f32.gmra.mrb[0].mxu0 %v4781
        %v4849 = vpop.f32.mrb[0].mxu0
        %v4850 = vadd.f32 0.0, %v4849
        %v4851 = vpop.f32.mrb[0].mxu0
        %4852 = vdwg.mxu0
        %v4853 = vadd.f32 %v3154, %v4850
        %vm4854 = vcmp.gt.f32.partialorder %v4853, 0.0
        %v4855 = vmul.f32 %v3707, %v4853
        %v4856 = vsel %vm4854, %v4853, %v4855
        %v4858 = vsel %vm3155, %v4856, 0
        %4860 = vmatprep.subr.mxu0 0.0
        %4861 = vmatpush1.msra.mxu0 %v237
        %4862 = vmatprep.subr.mxu0 0.0
        %4863 = vmatpush1.msra.mxu0 %v238
        %4864 = vmatprep.subr.mxu0 0.0
        %4865 = vmatpush1.msra.mxu0 %v239
        %4866 = vmatprep.subr.mxu0 0.0
        %4867 = vmatpush1.msra.mxu0 %v240
        %4868 = vmatprep.subr.mxu0 0.0
        %4869 = vmatpush1.msra.mxu0 0.0
        %4870 = vmatprep.subr.mxu0 0.0
        %4871 = vmatpush1.msra.mxu0 0.0
        %4872 = vmatprep.subr.mxu0 0.0
        %4873 = vmatpush1.msra.mxu0 0.0
        %4874 = vmatprep.subr.mxu0 0.0
        %4875 = vmatpush1.msra.mxu0 0.0
        %4876 = vmatprep.subr.mxu0 0.0
        %4877 = vmatpush1.msra.mxu0 0.0
        %4878 = vmatprep.subr.mxu0 0.0
        %4879 = vmatpush1.msra.mxu0 0.0
        %4880 = vmatprep.subr.mxu0 0.0
        %4881 = vmatpush1.msra.mxu0 0.0
        %4882 = vmatprep.subr.mxu0 0.0
        %4883 = vmatpush1.msra.mxu0 0.0
        %4884 = vmatprep.subr.mxu0 0.0
        %4885 = vmatpush1.msra.mxu0 0.0
        %4886 = vmatprep.subr.mxu0 0.0
        %4887 = vmatpush1.msra.mxu0 0.0
        %4888 = vmatprep.subr.mxu0 0.0
        %4889 = vmatpush1.msra.mxu0 0.0
        %4890 = vmatprep.subr.mxu0 0.0
        %4891 = vmatpush1.msra.mxu0 0.0
        %4892 = vmatprep.subr.mxu0 0.0
        %4893 = vmatpush1.msra.mxu0 0.0
        %4894 = vmatprep.subr.mxu0 0.0
        %4895 = vmatpush1.msra.mxu0 0.0
        %4896 = vmatprep.subr.mxu0 0.0
        %4897 = vmatpush1.msra.mxu0 0.0
        %4898 = vmatprep.subr.mxu0 0.0
        %4899 = vmatpush1.msra.mxu0 0.0
        %4900 = vmatprep.subr.mxu0 0.0
        %4901 = vmatpush1.msra.mxu0 0.0
        %4902 = vmatprep.subr.mxu0 0.0
        %4903 = vmatpush1.msra.mxu0 0.0
        %4904 = vmatprep.subr.mxu0 0.0
        %4905 = vmatpush1.msra.mxu0 0.0
        %4906 = vmatprep.subr.mxu0 0.0
        %4907 = vmatpush1.msra.mxu0 0.0
        %4908 = vmatprep.subr.mxu0 0.0
        %4909 = vmatpush1.msra.mxu0 0.0
        %4910 = vmatprep.subr.mxu0 0.0
        %4911 = vmatpush1.msra.mxu0 0.0
        %4912 = vmatprep.subr.mxu0 0.0
        %4913 = vmatpush1.msra.mxu0 0.0
        %4914 = vmatprep.subr.mxu0 0.0
        %4915 = vmatpush1.msra.mxu0 0.0
        %4916 = vmatprep.subr.mxu0 0.0
        %4917 = vmatpush1.msra.mxu0 0.0
        %4918 = vmatprep.subr.mxu0 0.0
        %4919 = vmatpush1.msra.mxu0 0.0
        %4920 = vmatprep.subr.mxu0 0.0
        %4921 = vmatpush1.msra.mxu0 0.0
        %4922 = vmatprep.subr.mxu0 0.0
        %4923 = vmatpush1.msra.mxu0 0.0
        %4924 = vmatprep.mubr.f32.mxu0 0.0
        %4925 = vmatmul.mubr.f32.gmra.mrb[0].mxu0 %v4858
        %v4926 = vpop.f32.mrb[0].mxu0
        %v4927 = vadd.f32 0.0, %v4926
        %v4928 = vpop.f32.mrb[0].mxu0
        %4929 = vdwg.mxu0
        %4930 = vst [vmem:[%s201] sm:$0xf] %v4927
        %s4931 = sand.u32 %s120, 1
        %s4932 = scalar_lea.sflag [#allocation3], %s4931
        %s4933 = sand.u32 %s120, 1
        %s4934 = smul.addr %s4933, 4
        %s4935 = scalar_lea.vmem [#allocation2], %s4934
        // Predicated region
        $region37: #{tpu_custom_call.1} parent=35 // pred_check
          %p4936 = pneg %p130
        $region38: #{tpu_custom_call.1} parent=35 // pred_check_branch
          %4938 = sbr.rel (%p4936) target = $region40
        $region39: #{tpu_custom_call.1} parent=35 // pred_region
          %s4940 = ssub.s32 64, 64
          %4941 = vsyncadd %s4932, %s4940
          %s4942 = smul.addr %s18, 64
          %s4943 = scalar_lea.hbm %s4, %s4942
          %s4945 = sshll.u32 %s4935, 4
          %s4946 = int_to_ptr.vmem [resolvable:$true] %s4945
          %4948 = dma.vmem_to_hbm [thread:$0]  %s4946, 64, %s4943, %s4932
        $region40: #{tpu_custom_call.1} parent=35 // pred_fallthru
          _
      $region36: #{tpu_custom_call.1} parent=5 // pred_fallthru
        _
      %p4949 = scmp.le.s32.totalorder 2, %s13
      // Predicated region
      $region41: #{tpu_custom_call.1} parent=5 // pred_check
        %p4950 = pneg %p4949
      $region42: #{tpu_custom_call.1} parent=5 // pred_check_branch
        %4952 = sbr.rel (%p4950) target = $region44
      $region43: #{tpu_custom_call.1} parent=5 // pred_region
        %s4953 = ssub.s32 %s13, 2
        // Predicated region
        $region45: #{tpu_custom_call.1} parent=43 // pred_check
          %p4954 = pneg %p136
        $region46: #{tpu_custom_call.1} parent=43 // pred_check_branch
          %4956 = sbr.rel (%p4954) target = $region48
        $region47: #{tpu_custom_call.1} parent=43 // pred_region
          %s4957 = sand.u32 %s121, 1
          %s4958 = scalar_lea.sflag [#allocation3], %s4957
          %s4959 = sand.u32 %s121, 1
          %s4960 = smul.addr %s4959, 4
          %s4961 = scalar_lea.vmem [#allocation2], %s4960
          %4962 = dma.done %s4958, 64
        $region48: #{tpu_custom_call.1} parent=43 // pred_fallthru
          _
      $region44: #{tpu_custom_call.1} parent=5 // pred_fallthru
        _
    $region6: #{tpu_custom_call.1} parent=1 // loop_footer
      %s17 = sadd.s32 1, %s13
    $region7: #{tpu_custom_call.1} parent=1 // loop_footer_branch
      %12 = sbr.rel target = $region3
    $region8: #{tpu_custom_call.1} parent=1 // loop_exit
      _
    %4963 = vsyncpa [#allocation3], 1
    %s4964 = scalar_lea.sflag [#allocation3], 1
    %4965 = vsyncpa %s4964, 1

</llo_original>
